<compile_context>
chip_gen: v7x
topology: tpu7x:2x2x1
jax: 0.10.0
libtpu: 0.0.40
codegen_flags: <defaults>
</compile_context>

<pallas_src>
import numpy as np
import jax
import jax.numpy as jnp
from jax.experimental import pallas as pl
from jax.experimental.pallas import tpu as pltpu

LEAKY_SLOPE = 0.2   # LRelu_v in the config

# conv geometry of the chosen config
_IMG = 16           # input spatial size
_K, _S, _P = 4, 2, 1
_OH1 = 8            # conv1 output spatial
_OH2 = 4            # conv2 output spatial
_KK = _K * _K


def _conv_selection(hw_in, ksize, stride, pad, hw_out):
    """Constant 0/1 gather matrix turning im2col into a matmul.

    Returns [hw_in*hw_in, ksize*ksize*hw_out*hw_out]; column (kk, p_out) with
    kk = kh*ksize+kw, p_out = oh*hw_out+ow selects input pixel
    (stride*oh+kh-pad, stride*ow+kw-pad); out-of-range (padding) columns are 0.
    """
    S = np.zeros((ksize * ksize, hw_in * hw_in, hw_out * hw_out), dtype=np.float32)
    for kh in range(ksize):
        for kw in range(ksize):
            kk = kh * ksize + kw
            for oh in range(hw_out):
                for ow in range(hw_out):
                    h = stride * oh + kh - pad
                    w = stride * ow + kw - pad
                    if 0 <= h < hw_in and 0 <= w < hw_in:
                        S[kk, h * hw_in + w, oh * hw_out + ow] = 1.0
    return S.transpose(1, 0, 2).reshape(hw_in * hw_in,
                                        ksize * ksize * hw_out * hw_out)


# gather matrices are 0/1 -> bf16 is exact and halves their DMA bytes
_S1W = jnp.asarray(_conv_selection(_IMG, _K, _S, _P, _OH1), dtype=jnp.bfloat16)  # [256,1024]
_S2W = jnp.asarray(_conv_selection(_OH1, _K, _S, _P, _OH2), dtype=jnp.bfloat16)  # [ 64, 256]


# ------------------------------ fused kernel --------------------------------

def fused_gan_disc_kernel(x_ref, s1w_ref, s2w_ref, w1c_ref, w2c_ref,
                          wm1_ref, b1_ref, w2t_ref, b2_ref, o_ref):
    B, C0, _ = x_ref.shape
    OC1 = w1c_ref.shape[0]
    OC2 = w2c_ref.shape[0]
    KK = w1c_ref.shape[1] // C0
    P1 = s1w_ref.shape[1] // KK
    P2 = s2w_ref.shape[1] // KK
    NH = wm1_ref.shape[1] // OC2          # MLP hidden width (32)

    # hoisted loads: weights / gather matrices shared by all batch elements
    s1w = s1w_ref[...]                    # [HW,  KK*P1]  bf16
    s2w = s2w_ref[...]                    # [P1,  KK*P2]  bf16
    w1c = w1c_ref[...]                    # [OC1, KK*C0]  bf16
    w2c = w2c_ref[...]                    # [OC2, KK*OC1] bf16
    wm1 = wm1_ref[...]                    # [P2,  OC2*NH] f32  (permuted Linear1 weight)
    b1 = b1_ref[...]                      # [1, NH] f32
    w2t = w2t_ref[...]                    # [1, NH] f32
    b2 = b2_ref[0, 0]                     # scalar bias from SMEM

    for b in range(B):                    # B is tiny & static -> fully unrolled
        # ---- Conv2d(C0->OC1, k4 s2 p1, no bias) + LeakyReLU(0.2) -----------
        xb = x_ref[b].astype(jnp.bfloat16)                           # [C0, H*W]
        g1 = jnp.dot(xb, s1w, preferred_element_type=jnp.float32)    # [C0, KK*P1]
        g1 = g1.astype(jnp.bfloat16)      # exact: gather only re-selects bf16 values
        y1 = jnp.zeros((OC1, P1), jnp.float32)
        for kk in range(KK):
            y1 = y1 + jnp.dot(w1c[:, kk * C0:(kk + 1) * C0],
                              g1[:, kk * P1:(kk + 1) * P1],
                              preferred_element_type=jnp.float32)    # [OC1, P1]
        h1 = jnp.where(y1 > 0, y1, LEAKY_SLOPE * y1).astype(jnp.bfloat16)

        # ---- Conv2d(OC1->OC2, k4 s2 p1, no bias) + LeakyReLU(0.2) ----------
        g2 = jnp.dot(h1, s2w, preferred_element_type=jnp.float32)    # [OC1, KK*P2]
        g2 = g2.astype(jnp.bfloat16)
        y2 = jnp.zeros((OC2, P2), jnp.float32)
        for kk in range(KK):
            y2 = y2 + jnp.dot(w2c[:, kk * OC1:(kk + 1) * OC1],
                              g2[:, kk * P2:(kk + 1) * P2],
                              preferred_element_type=jnp.float32)    # [OC2, P2]
        h2 = jnp.where(y2 > 0, y2, LEAKY_SLOPE * y2)                 # f32, NCHW-major

        # ---- flatten (.view(-1, 256) in NCHW order) fused with Linear(256->32)
        # u[c2, c2'*NH+j] = sum_p2 h2[c2,p2] * W1[c2'*P2+p2, j]; the diagonal
        # blocks summed over c2 give exactly flatten(h2) @ W1.
        u = jnp.dot(h2, wm1, preferred_element_type=jnp.float32)     # [OC2, OC2*NH]
        z1 = jnp.zeros((1, NH), jnp.float32)
        for c in range(OC2):
            z1 = z1 + u[c:c + 1, c * NH:(c + 1) * NH]
        z1 = z1 + b1
        a1 = jnp.where(z1 > 0, z1, LEAKY_SLOPE * z1)                 # [1, NH]

        # ---- Linear(32->1) as VPU reduction + Sigmoid (EUP reciprocal) -----
        z2 = jnp.sum(a1 * w2t, axis=-1, keepdims=True) + b2          # [1, 1]
        o_ref[pl.ds(b, 1), :] = pl.reciprocal(1.0 + jnp.exp(-z2), approx=True)


# ------------------------------ JAX wrapper ----------------------------------

def _vmem():
    return pl.BlockSpec(memory_space=pltpu.MemorySpace.VMEM)


@jax.jit
def net_forward(x_nchw, params):
    B, C, H, W = x_nchw.shape
    x2 = x_nchw.reshape(B, C, H * W)                       # trivial host reshape only

    w1 = params['conv1_w']                                 # [OC1, C0, 4, 4]
    w2 = params['conv2_w']                                 # [OC2, OC1, 4, 4]
    oc1, oc2 = w1.shape[0], w2.shape[0]
    # conv weights packed as [OC, (kh,kw,c)] to match gather column order
    w1c = w1.transpose(0, 2, 3, 1).reshape(oc1, -1).astype(jnp.bfloat16)
    w2c = w2.transpose(0, 2, 3, 1).reshape(oc2, -1).astype(jnp.bfloat16)
    # Linear(256->32) weight permuted to [p2, (c2, j)] so the flatten fuses into one dot
    nh = params['w1'].shape[1]
    p2 = _OH2 * _OH2
    wm1 = params['w1'].reshape(oc2, p2, nh).transpose(1, 0, 2).reshape(p2, oc2 * nh)
    w2t = params['w2'].T                                   # [1, 32]

    return pl.pallas_call(
        fused_gan_disc_kernel,
        out_shape=jax.ShapeDtypeStruct((B, 1), jnp.float32),
        in_specs=[_vmem()] * 8 + [pl.BlockSpec(memory_space=pltpu.MemorySpace.SMEM)],
        out_specs=_vmem(),
    )(x2, _S1W, _S2W, w1c, w2c, wm1, params['b1'], w2t, params['b2'])


# ------------------------ pure-JAX reference (check) -------------------------

def ref_forward(x, params):
    def conv_lrelu(x, w, s, p):
        y = jax.lax.conv_general_dilated(
            x, w, (s, s), [(p, p), (p, p)],
            dimension_numbers=('NCHW', 'OIHW', 'NCHW'))
        return jnp.where(y > 0, y, LEAKY_SLOPE * y)

    h = conv_lrelu(x, params['conv1_w'], 2, 1)
    h = conv_lrelu(h, params['conv2_w'], 2, 1)
    h = h.reshape(h.shape[0], -1)
    h = h @ params['w1'] + params['b1']
    h = jnp.where(h > 0, h, LEAKY_SLOPE * h)
    z = h @ params['w2'] + params['b2']
    return jax.nn.sigmoid(z)


# ---------------------------------- main --------------------------------------

if __name__ == "__main__":
    key = jax.random.PRNGKey(0)
    k1, k2, k3, k4, k5, k6, kx = jax.random.split(key, 7)

    # INIT_NET_WEIGHTS 'default': Conv weights ~ N(0, 0.02) (OIHW, bias absent)
    conv1_w = 0.02 * jax.random.normal(k1, (8, 4, 4, 4), jnp.float32)
    conv2_w = 0.02 * jax.random.normal(k2, (16, 8, 4, 4), jnp.float32)
    # Linear layers: PyTorch default U(-1/sqrt(fan_in), 1/sqrt(fan_in)); stored [in, out]
    lim1 = 1.0 / jnp.sqrt(256.0)
    w1 = jax.random.uniform(k3, (256, 32), jnp.float32, -lim1, lim1)
    b1 = jax.random.uniform(k4, (1, 32), jnp.float32, -lim1, lim1)
    lim2 = 1.0 / jnp.sqrt(32.0)
    w2 = jax.random.uniform(k5, (32, 1), jnp.float32, -lim2, lim2)
    b2 = jax.random.uniform(k6, (1, 1), jnp.float32, -lim2, lim2)
    params = dict(conv1_w=conv1_w, conv2_w=conv2_w, w1=w1, b1=b1, w2=w2, b2=b2)

    # input: batch=2, channels=4, spatial=16x16 (NCHW, matching config['n_in'])
    x = jax.random.normal(kx, (2, 4, 16, 16), jnp.float32)

    out = jax.block_until_ready(net_forward(x, params))
    ref = jax.block_until_ready(ref_forward(x, params))

    assert out.shape == (2, 1), out.shape
    # bf16 conv path + approx reciprocal -> compare with a small tolerance
    assert jnp.allclose(out, ref, atol=5e-3, rtol=5e-3), (out, ref)

    print("KERNEL_OK")
</pallas_src>

<mosaic_0001>
module attributes {stable_mosaic.version = 11 : i64} {
  func.func @fused_gan_disc_kernel(%arg0: memref<2x4x256xf32, #tpu.memory_space<vmem>>, %arg1: memref<256x1024xbf16, #tpu.memory_space<vmem>>, %arg2: memref<64x256xbf16, #tpu.memory_space<vmem>>, %arg3: memref<8x64xbf16, #tpu.memory_space<vmem>>, %arg4: memref<16x128xbf16, #tpu.memory_space<vmem>>, %arg5: memref<16x512xf32, #tpu.memory_space<vmem>>, %arg6: memref<1x32xf32, #tpu.memory_space<vmem>>, %arg7: memref<1x32xf32, #tpu.memory_space<vmem>>, %arg8: memref<1x1xf32, #tpu.memory_space<smem>>, %arg9: memref<2x1xf32, #tpu.memory_space<vmem>>) attributes {dimension_semantics = [], scalar_prefetch = 0 : i64, scratch_operands = 0 : i64, tpu.core_type = #tpu.core_type<tc>} {
    %c0 = arith.constant 0 : index
    %c0_0 = arith.constant 0 : index
    %0 = vector.load %arg1[%c0, %c0_0] : memref<256x1024xbf16, #tpu.memory_space<vmem>>, vector<256x1024xbf16>
    %c0_1 = arith.constant 0 : index
    %c0_2 = arith.constant 0 : index
    %1 = vector.load %arg2[%c0_1, %c0_2] : memref<64x256xbf16, #tpu.memory_space<vmem>>, vector<64x256xbf16>
    %c0_3 = arith.constant 0 : index
    %c0_4 = arith.constant 0 : index
    %2 = vector.load %arg3[%c0_3, %c0_4] : memref<8x64xbf16, #tpu.memory_space<vmem>>, vector<8x64xbf16>
    %c0_5 = arith.constant 0 : index
    %c0_6 = arith.constant 0 : index
    %3 = vector.load %arg4[%c0_5, %c0_6] : memref<16x128xbf16, #tpu.memory_space<vmem>>, vector<16x128xbf16>
    %c0_7 = arith.constant 0 : index
    %c0_8 = arith.constant 0 : index
    %4 = vector.load %arg5[%c0_7, %c0_8] : memref<16x512xf32, #tpu.memory_space<vmem>>, vector<16x512xf32>
    %c0_9 = arith.constant 0 : index
    %c0_10 = arith.constant 0 : index
    %5 = vector.load %arg6[%c0_9, %c0_10] : memref<1x32xf32, #tpu.memory_space<vmem>>, vector<1x32xf32>
    %c0_11 = arith.constant 0 : index
    %c0_12 = arith.constant 0 : index
    %6 = vector.load %arg7[%c0_11, %c0_12] : memref<1x32xf32, #tpu.memory_space<vmem>>, vector<1x32xf32>
    %c0_13 = arith.constant 0 : index
    %c0_14 = arith.constant 0 : index
    %7 = memref.load %arg8[%c0_13, %c0_14] : memref<1x1xf32, #tpu.memory_space<smem>>
    %c0_15 = arith.constant 0 : index
    %c0_16 = arith.constant 0 : index
    %c0_17 = arith.constant 0 : index
    %8 = vector.load %arg0[%c0_15, %c0_16, %c0_17] : memref<2x4x256xf32, #tpu.memory_space<vmem>>, vector<1x4x256xf32>
    %9 = vector.shape_cast %8 : vector<1x4x256xf32> to vector<4x256xf32>
    %10 = arith.truncf %9 : vector<4x256xf32> to vector<4x256xbf16>
    %cst = arith.constant dense<0.000000e+00> : vector<4x1024xf32>
    %11 = tpu.matmul %10, %0, %cst {dimension_numbers = #tpu.dot_dimension_numbers<[1], [0], [0], [1], [0, 0, 1, 1], [], []>} : vector<4x256xbf16>, vector<256x1024xbf16>, vector<4x1024xf32> -> vector<4x1024xf32>
    %12 = arith.truncf %11 : vector<4x1024xf32> to vector<4x1024xbf16>
    %cst_18 = arith.constant 0.000000e+00 : f32
    %13 = vector.broadcast %cst_18 : f32 to vector<8x64xf32>
    %14 = vector.extract_strided_slice %2 {offsets = [0, 0], sizes = [8, 4], strides = [1, 1]} : vector<8x64xbf16> to vector<8x4xbf16>
    %15 = vector.extract_strided_slice %12 {offsets = [0, 0], sizes = [4, 64], strides = [1, 1]} : vector<4x1024xbf16> to vector<4x64xbf16>
    %cst_19 = arith.constant dense<0.000000e+00> : vector<8x64xf32>
    %16 = tpu.matmul %14, %15, %cst_19 {dimension_numbers = #tpu.dot_dimension_numbers<[1], [0], [0], [1], [0, 0, 1, 1], [], []>} : vector<8x4xbf16>, vector<4x64xbf16>, vector<8x64xf32> -> vector<8x64xf32>
    %17 = arith.addf %13, %16 : vector<8x64xf32>
    %18 = vector.extract_strided_slice %2 {offsets = [0, 4], sizes = [8, 4], strides = [1, 1]} : vector<8x64xbf16> to vector<8x4xbf16>
    %19 = vector.extract_strided_slice %12 {offsets = [0, 64], sizes = [4, 64], strides = [1, 1]} : vector<4x1024xbf16> to vector<4x64xbf16>
    %cst_20 = arith.constant dense<0.000000e+00> : vector<8x64xf32>
    %20 = tpu.matmul %18, %19, %cst_20 {dimension_numbers = #tpu.dot_dimension_numbers<[1], [0], [0], [1], [0, 0, 1, 1], [], []>} : vector<8x4xbf16>, vector<4x64xbf16>, vector<8x64xf32> -> vector<8x64xf32>
    %21 = arith.addf %17, %20 : vector<8x64xf32>
    %22 = vector.extract_strided_slice %2 {offsets = [0, 8], sizes = [8, 4], strides = [1, 1]} : vector<8x64xbf16> to vector<8x4xbf16>
    %23 = vector.extract_strided_slice %12 {offsets = [0, 128], sizes = [4, 64], strides = [1, 1]} : vector<4x1024xbf16> to vector<4x64xbf16>
    %cst_21 = arith.constant dense<0.000000e+00> : vector<8x64xf32>
    %24 = tpu.matmul %22, %23, %cst_21 {dimension_numbers = #tpu.dot_dimension_numbers<[1], [0], [0], [1], [0, 0, 1, 1], [], []>} : vector<8x4xbf16>, vector<4x64xbf16>, vector<8x64xf32> -> vector<8x64xf32>
    %25 = arith.addf %21, %24 : vector<8x64xf32>
    %26 = vector.extract_strided_slice %2 {offsets = [0, 12], sizes = [8, 4], strides = [1, 1]} : vector<8x64xbf16> to vector<8x4xbf16>
    %27 = vector.extract_strided_slice %12 {offsets = [0, 192], sizes = [4, 64], strides = [1, 1]} : vector<4x1024xbf16> to vector<4x64xbf16>
    %cst_22 = arith.constant dense<0.000000e+00> : vector<8x64xf32>
    %28 = tpu.matmul %26, %27, %cst_22 {dimension_numbers = #tpu.dot_dimension_numbers<[1], [0], [0], [1], [0, 0, 1, 1], [], []>} : vector<8x4xbf16>, vector<4x64xbf16>, vector<8x64xf32> -> vector<8x64xf32>
    %29 = arith.addf %25, %28 : vector<8x64xf32>
    %30 = vector.extract_strided_slice %2 {offsets = [0, 16], sizes = [8, 4], strides = [1, 1]} : vector<8x64xbf16> to vector<8x4xbf16>
    %31 = vector.extract_strided_slice %12 {offsets = [0, 256], sizes = [4, 64], strides = [1, 1]} : vector<4x1024xbf16> to vector<4x64xbf16>
    %cst_23 = arith.constant dense<0.000000e+00> : vector<8x64xf32>
    %32 = tpu.matmul %30, %31, %cst_23 {dimension_numbers = #tpu.dot_dimension_numbers<[1], [0], [0], [1], [0, 0, 1, 1], [], []>} : vector<8x4xbf16>, vector<4x64xbf16>, vector<8x64xf32> -> vector<8x64xf32>
    %33 = arith.addf %29, %32 : vector<8x64xf32>
    %34 = vector.extract_strided_slice %2 {offsets = [0, 20], sizes = [8, 4], strides = [1, 1]} : vector<8x64xbf16> to vector<8x4xbf16>
    %35 = vector.extract_strided_slice %12 {offsets = [0, 320], sizes = [4, 64], strides = [1, 1]} : vector<4x1024xbf16> to vector<4x64xbf16>
    %cst_24 = arith.constant dense<0.000000e+00> : vector<8x64xf32>
    %36 = tpu.matmul %34, %35, %cst_24 {dimension_numbers = #tpu.dot_dimension_numbers<[1], [0], [0], [1], [0, 0, 1, 1], [], []>} : vector<8x4xbf16>, vector<4x64xbf16>, vector<8x64xf32> -> vector<8x64xf32>
    %37 = arith.addf %33, %36 : vector<8x64xf32>
    %38 = vector.extract_strided_slice %2 {offsets = [0, 24], sizes = [8, 4], strides = [1, 1]} : vector<8x64xbf16> to vector<8x4xbf16>
    %39 = vector.extract_strided_slice %12 {offsets = [0, 384], sizes = [4, 64], strides = [1, 1]} : vector<4x1024xbf16> to vector<4x64xbf16>
    %cst_25 = arith.constant dense<0.000000e+00> : vector<8x64xf32>
    %40 = tpu.matmul %38, %39, %cst_25 {dimension_numbers = #tpu.dot_dimension_numbers<[1], [0], [0], [1], [0, 0, 1, 1], [], []>} : vector<8x4xbf16>, vector<4x64xbf16>, vector<8x64xf32> -> vector<8x64xf32>
    %41 = arith.addf %37, %40 : vector<8x64xf32>
    %42 = vector.extract_strided_slice %2 {offsets = [0, 28], sizes = [8, 4], strides = [1, 1]} : vector<8x64xbf16> to vector<8x4xbf16>
    %43 = vector.extract_strided_slice %12 {offsets = [0, 448], sizes = [4, 64], strides = [1, 1]} : vector<4x1024xbf16> to vector<4x64xbf16>
    %cst_26 = arith.constant dense<0.000000e+00> : vector<8x64xf32>
    %44 = tpu.matmul %42, %43, %cst_26 {dimension_numbers = #tpu.dot_dimension_numbers<[1], [0], [0], [1], [0, 0, 1, 1], [], []>} : vector<8x4xbf16>, vector<4x64xbf16>, vector<8x64xf32> -> vector<8x64xf32>
    %45 = arith.addf %41, %44 : vector<8x64xf32>
    %46 = vector.extract_strided_slice %2 {offsets = [0, 32], sizes = [8, 4], strides = [1, 1]} : vector<8x64xbf16> to vector<8x4xbf16>
    %47 = vector.extract_strided_slice %12 {offsets = [0, 512], sizes = [4, 64], strides = [1, 1]} : vector<4x1024xbf16> to vector<4x64xbf16>
    %cst_27 = arith.constant dense<0.000000e+00> : vector<8x64xf32>
    %48 = tpu.matmul %46, %47, %cst_27 {dimension_numbers = #tpu.dot_dimension_numbers<[1], [0], [0], [1], [0, 0, 1, 1], [], []>} : vector<8x4xbf16>, vector<4x64xbf16>, vector<8x64xf32> -> vector<8x64xf32>
    %49 = arith.addf %45, %48 : vector<8x64xf32>
    %50 = vector.extract_strided_slice %2 {offsets = [0, 36], sizes = [8, 4], strides = [1, 1]} : vector<8x64xbf16> to vector<8x4xbf16>
    %51 = vector.extract_strided_slice %12 {offsets = [0, 576], sizes = [4, 64], strides = [1, 1]} : vector<4x1024xbf16> to vector<4x64xbf16>
    %cst_28 = arith.constant dense<0.000000e+00> : vector<8x64xf32>
    %52 = tpu.matmul %50, %51, %cst_28 {dimension_numbers = #tpu.dot_dimension_numbers<[1], [0], [0], [1], [0, 0, 1, 1], [], []>} : vector<8x4xbf16>, vector<4x64xbf16>, vector<8x64xf32> -> vector<8x64xf32>
    %53 = arith.addf %49, %52 : vector<8x64xf32>
    %54 = vector.extract_strided_slice %2 {offsets = [0, 40], sizes = [8, 4], strides = [1, 1]} : vector<8x64xbf16> to vector<8x4xbf16>
    %55 = vector.extract_strided_slice %12 {offsets = [0, 640], sizes = [4, 64], strides = [1, 1]} : vector<4x1024xbf16> to vector<4x64xbf16>
    %cst_29 = arith.constant dense<0.000000e+00> : vector<8x64xf32>
    %56 = tpu.matmul %54, %55, %cst_29 {dimension_numbers = #tpu.dot_dimension_numbers<[1], [0], [0], [1], [0, 0, 1, 1], [], []>} : vector<8x4xbf16>, vector<4x64xbf16>, vector<8x64xf32> -> vector<8x64xf32>
    %57 = arith.addf %53, %56 : vector<8x64xf32>
    %58 = vector.extract_strided_slice %2 {offsets = [0, 44], sizes = [8, 4], strides = [1, 1]} : vector<8x64xbf16> to vector<8x4xbf16>
    %59 = vector.extract_strided_slice %12 {offsets = [0, 704], sizes = [4, 64], strides = [1, 1]} : vector<4x1024xbf16> to vector<4x64xbf16>
    %cst_30 = arith.constant dense<0.000000e+00> : vector<8x64xf32>
    %60 = tpu.matmul %58, %59, %cst_30 {dimension_numbers = #tpu.dot_dimension_numbers<[1], [0], [0], [1], [0, 0, 1, 1], [], []>} : vector<8x4xbf16>, vector<4x64xbf16>, vector<8x64xf32> -> vector<8x64xf32>
    %61 = arith.addf %57, %60 : vector<8x64xf32>
    %62 = vector.extract_strided_slice %2 {offsets = [0, 48], sizes = [8, 4], strides = [1, 1]} : vector<8x64xbf16> to vector<8x4xbf16>
    %63 = vector.extract_strided_slice %12 {offsets = [0, 768], sizes = [4, 64], strides = [1, 1]} : vector<4x1024xbf16> to vector<4x64xbf16>
    %cst_31 = arith.constant dense<0.000000e+00> : vector<8x64xf32>
    %64 = tpu.matmul %62, %63, %cst_31 {dimension_numbers = #tpu.dot_dimension_numbers<[1], [0], [0], [1], [0, 0, 1, 1], [], []>} : vector<8x4xbf16>, vector<4x64xbf16>, vector<8x64xf32> -> vector<8x64xf32>
    %65 = arith.addf %61, %64 : vector<8x64xf32>
    %66 = vector.extract_strided_slice %2 {offsets = [0, 52], sizes = [8, 4], strides = [1, 1]} : vector<8x64xbf16> to vector<8x4xbf16>
    %67 = vector.extract_strided_slice %12 {offsets = [0, 832], sizes = [4, 64], strides = [1, 1]} : vector<4x1024xbf16> to vector<4x64xbf16>
    %cst_32 = arith.constant dense<0.000000e+00> : vector<8x64xf32>
    %68 = tpu.matmul %66, %67, %cst_32 {dimension_numbers = #tpu.dot_dimension_numbers<[1], [0], [0], [1], [0, 0, 1, 1], [], []>} : vector<8x4xbf16>, vector<4x64xbf16>, vector<8x64xf32> -> vector<8x64xf32>
    %69 = arith.addf %65, %68 : vector<8x64xf32>
    %70 = vector.extract_strided_slice %2 {offsets = [0, 56], sizes = [8, 4], strides = [1, 1]} : vector<8x64xbf16> to vector<8x4xbf16>
    %71 = vector.extract_strided_slice %12 {offsets = [0, 896], sizes = [4, 64], strides = [1, 1]} : vector<4x1024xbf16> to vector<4x64xbf16>
    %cst_33 = arith.constant dense<0.000000e+00> : vector<8x64xf32>
    %72 = tpu.matmul %70, %71, %cst_33 {dimension_numbers = #tpu.dot_dimension_numbers<[1], [0], [0], [1], [0, 0, 1, 1], [], []>} : vector<8x4xbf16>, vector<4x64xbf16>, vector<8x64xf32> -> vector<8x64xf32>
    %73 = arith.addf %69, %72 : vector<8x64xf32>
    %74 = vector.extract_strided_slice %2 {offsets = [0, 60], sizes = [8, 4], strides = [1, 1]} : vector<8x64xbf16> to vector<8x4xbf16>
    %75 = vector.extract_strided_slice %12 {offsets = [0, 960], sizes = [4, 64], strides = [1, 1]} : vector<4x1024xbf16> to vector<4x64xbf16>
    %cst_34 = arith.constant dense<0.000000e+00> : vector<8x64xf32>
    %76 = tpu.matmul %74, %75, %cst_34 {dimension_numbers = #tpu.dot_dimension_numbers<[1], [0], [0], [1], [0, 0, 1, 1], [], []>} : vector<8x4xbf16>, vector<4x64xbf16>, vector<8x64xf32> -> vector<8x64xf32>
    %77 = arith.addf %73, %76 : vector<8x64xf32>
    %cst_35 = arith.constant 0.000000e+00 : f32
    %78 = vector.broadcast %cst_35 : f32 to vector<8x64xf32>
    %79 = arith.cmpf ogt, %77, %78 : vector<8x64xf32>
    %cst_36 = arith.constant 2.000000e-01 : f32
    %80 = vector.broadcast %cst_36 : f32 to vector<8x64xf32>
    %81 = arith.mulf %80, %77 : vector<8x64xf32>
    %82 = arith.select %79, %77, %81 : vector<8x64xi1>, vector<8x64xf32>
    %83 = arith.truncf %82 : vector<8x64xf32> to vector<8x64xbf16>
    %cst_37 = arith.constant dense<0.000000e+00> : vector<8x256xf32>
    %84 = tpu.matmul %83, %1, %cst_37 {dimension_numbers = #tpu.dot_dimension_numbers<[1], [0], [0], [1], [0, 0, 1, 1], [], []>} : vector<8x64xbf16>, vector<64x256xbf16>, vector<8x256xf32> -> vector<8x256xf32>
    %85 = arith.truncf %84 : vector<8x256xf32> to vector<8x256xbf16>
    %cst_38 = arith.constant 0.000000e+00 : f32
    %86 = vector.broadcast %cst_38 : f32 to vector<16x16xf32>
    %87 = vector.extract_strided_slice %3 {offsets = [0, 0], sizes = [16, 8], strides = [1, 1]} : vector<16x128xbf16> to vector<16x8xbf16>
    %88 = vector.extract_strided_slice %85 {offsets = [0, 0], sizes = [8, 16], strides = [1, 1]} : vector<8x256xbf16> to vector<8x16xbf16>
    %cst_39 = arith.constant dense<0.000000e+00> : vector<16x16xf32>
    %89 = tpu.matmul %87, %88, %cst_39 {dimension_numbers = #tpu.dot_dimension_numbers<[1], [0], [0], [1], [0, 0, 1, 1], [], []>} : vector<16x8xbf16>, vector<8x16xbf16>, vector<16x16xf32> -> vector<16x16xf32>
    %90 = arith.addf %86, %89 : vector<16x16xf32>
    %91 = vector.extract_strided_slice %3 {offsets = [0, 8], sizes = [16, 8], strides = [1, 1]} : vector<16x128xbf16> to vector<16x8xbf16>
    %92 = vector.extract_strided_slice %85 {offsets = [0, 16], sizes = [8, 16], strides = [1, 1]} : vector<8x256xbf16> to vector<8x16xbf16>
    %cst_40 = arith.constant dense<0.000000e+00> : vector<16x16xf32>
    %93 = tpu.matmul %91, %92, %cst_40 {dimension_numbers = #tpu.dot_dimension_numbers<[1], [0], [0], [1], [0, 0, 1, 1], [], []>} : vector<16x8xbf16>, vector<8x16xbf16>, vector<16x16xf32> -> vector<16x16xf32>
    %94 = arith.addf %90, %93 : vector<16x16xf32>
    %95 = vector.extract_strided_slice %3 {offsets = [0, 16], sizes = [16, 8], strides = [1, 1]} : vector<16x128xbf16> to vector<16x8xbf16>
    %96 = vector.extract_strided_slice %85 {offsets = [0, 32], sizes = [8, 16], strides = [1, 1]} : vector<8x256xbf16> to vector<8x16xbf16>
    %cst_41 = arith.constant dense<0.000000e+00> : vector<16x16xf32>
    %97 = tpu.matmul %95, %96, %cst_41 {dimension_numbers = #tpu.dot_dimension_numbers<[1], [0], [0], [1], [0, 0, 1, 1], [], []>} : vector<16x8xbf16>, vector<8x16xbf16>, vector<16x16xf32> -> vector<16x16xf32>
    %98 = arith.addf %94, %97 : vector<16x16xf32>
    %99 = vector.extract_strided_slice %3 {offsets = [0, 24], sizes = [16, 8], strides = [1, 1]} : vector<16x128xbf16> to vector<16x8xbf16>
    %100 = vector.extract_strided_slice %85 {offsets = [0, 48], sizes = [8, 16], strides = [1, 1]} : vector<8x256xbf16> to vector<8x16xbf16>
    %cst_42 = arith.constant dense<0.000000e+00> : vector<16x16xf32>
    %101 = tpu.matmul %99, %100, %cst_42 {dimension_numbers = #tpu.dot_dimension_numbers<[1], [0], [0], [1], [0, 0, 1, 1], [], []>} : vector<16x8xbf16>, vector<8x16xbf16>, vector<16x16xf32> -> vector<16x16xf32>
    %102 = arith.addf %98, %101 : vector<16x16xf32>
    %103 = vector.extract_strided_slice %3 {offsets = [0, 32], sizes = [16, 8], strides = [1, 1]} : vector<16x128xbf16> to vector<16x8xbf16>
    %104 = vector.extract_strided_slice %85 {offsets = [0, 64], sizes = [8, 16], strides = [1, 1]} : vector<8x256xbf16> to vector<8x16xbf16>
    %cst_43 = arith.constant dense<0.000000e+00> : vector<16x16xf32>
    %105 = tpu.matmul %103, %104, %cst_43 {dimension_numbers = #tpu.dot_dimension_numbers<[1], [0], [0], [1], [0, 0, 1, 1], [], []>} : vector<16x8xbf16>, vector<8x16xbf16>, vector<16x16xf32> -> vector<16x16xf32>
    %106 = arith.addf %102, %105 : vector<16x16xf32>
    %107 = vector.extract_strided_slice %3 {offsets = [0, 40], sizes = [16, 8], strides = [1, 1]} : vector<16x128xbf16> to vector<16x8xbf16>
    %108 = vector.extract_strided_slice %85 {offsets = [0, 80], sizes = [8, 16], strides = [1, 1]} : vector<8x256xbf16> to vector<8x16xbf16>
    %cst_44 = arith.constant dense<0.000000e+00> : vector<16x16xf32>
    %109 = tpu.matmul %107, %108, %cst_44 {dimension_numbers = #tpu.dot_dimension_numbers<[1], [0], [0], [1], [0, 0, 1, 1], [], []>} : vector<16x8xbf16>, vector<8x16xbf16>, vector<16x16xf32> -> vector<16x16xf32>
    %110 = arith.addf %106, %109 : vector<16x16xf32>
    %111 = vector.extract_strided_slice %3 {offsets = [0, 48], sizes = [16, 8], strides = [1, 1]} : vector<16x128xbf16> to vector<16x8xbf16>
    %112 = vector.extract_strided_slice %85 {offsets = [0, 96], sizes = [8, 16], strides = [1, 1]} : vector<8x256xbf16> to vector<8x16xbf16>
    %cst_45 = arith.constant dense<0.000000e+00> : vector<16x16xf32>
    %113 = tpu.matmul %111, %112, %cst_45 {dimension_numbers = #tpu.dot_dimension_numbers<[1], [0], [0], [1], [0, 0, 1, 1], [], []>} : vector<16x8xbf16>, vector<8x16xbf16>, vector<16x16xf32> -> vector<16x16xf32>
    %114 = arith.addf %110, %113 : vector<16x16xf32>
    %115 = vector.extract_strided_slice %3 {offsets = [0, 56], sizes = [16, 8], strides = [1, 1]} : vector<16x128xbf16> to vector<16x8xbf16>
    %116 = vector.extract_strided_slice %85 {offsets = [0, 112], sizes = [8, 16], strides = [1, 1]} : vector<8x256xbf16> to vector<8x16xbf16>
    %cst_46 = arith.constant dense<0.000000e+00> : vector<16x16xf32>
    %117 = tpu.matmul %115, %116, %cst_46 {dimension_numbers = #tpu.dot_dimension_numbers<[1], [0], [0], [1], [0, 0, 1, 1], [], []>} : vector<16x8xbf16>, vector<8x16xbf16>, vector<16x16xf32> -> vector<16x16xf32>
    %118 = arith.addf %114, %117 : vector<16x16xf32>
    %119 = vector.extract_strided_slice %3 {offsets = [0, 64], sizes = [16, 8], strides = [1, 1]} : vector<16x128xbf16> to vector<16x8xbf16>
    %120 = vector.extract_strided_slice %85 {offsets = [0, 128], sizes = [8, 16], strides = [1, 1]} : vector<8x256xbf16> to vector<8x16xbf16>
    %cst_47 = arith.constant dense<0.000000e+00> : vector<16x16xf32>
    %121 = tpu.matmul %119, %120, %cst_47 {dimension_numbers = #tpu.dot_dimension_numbers<[1], [0], [0], [1], [0, 0, 1, 1], [], []>} : vector<16x8xbf16>, vector<8x16xbf16>, vector<16x16xf32> -> vector<16x16xf32>
    %122 = arith.addf %118, %121 : vector<16x16xf32>
    %123 = vector.extract_strided_slice %3 {offsets = [0, 72], sizes = [16, 8], strides = [1, 1]} : vector<16x128xbf16> to vector<16x8xbf16>
    %124 = vector.extract_strided_slice %85 {offsets = [0, 144], sizes = [8, 16], strides = [1, 1]} : vector<8x256xbf16> to vector<8x16xbf16>
    %cst_48 = arith.constant dense<0.000000e+00> : vector<16x16xf32>
    %125 = tpu.matmul %123, %124, %cst_48 {dimension_numbers = #tpu.dot_dimension_numbers<[1], [0], [0], [1], [0, 0, 1, 1], [], []>} : vector<16x8xbf16>, vector<8x16xbf16>, vector<16x16xf32> -> vector<16x16xf32>
    %126 = arith.addf %122, %125 : vector<16x16xf32>
    %127 = vector.extract_strided_slice %3 {offsets = [0, 80], sizes = [16, 8], strides = [1, 1]} : vector<16x128xbf16> to vector<16x8xbf16>
    %128 = vector.extract_strided_slice %85 {offsets = [0, 160], sizes = [8, 16], strides = [1, 1]} : vector<8x256xbf16> to vector<8x16xbf16>
    %cst_49 = arith.constant dense<0.000000e+00> : vector<16x16xf32>
    %129 = tpu.matmul %127, %128, %cst_49 {dimension_numbers = #tpu.dot_dimension_numbers<[1], [0], [0], [1], [0, 0, 1, 1], [], []>} : vector<16x8xbf16>, vector<8x16xbf16>, vector<16x16xf32> -> vector<16x16xf32>
    %130 = arith.addf %126, %129 : vector<16x16xf32>
    %131 = vector.extract_strided_slice %3 {offsets = [0, 88], sizes = [16, 8], strides = [1, 1]} : vector<16x128xbf16> to vector<16x8xbf16>
    %132 = vector.extract_strided_slice %85 {offsets = [0, 176], sizes = [8, 16], strides = [1, 1]} : vector<8x256xbf16> to vector<8x16xbf16>
    %cst_50 = arith.constant dense<0.000000e+00> : vector<16x16xf32>
    %133 = tpu.matmul %131, %132, %cst_50 {dimension_numbers = #tpu.dot_dimension_numbers<[1], [0], [0], [1], [0, 0, 1, 1], [], []>} : vector<16x8xbf16>, vector<8x16xbf16>, vector<16x16xf32> -> vector<16x16xf32>
    %134 = arith.addf %130, %133 : vector<16x16xf32>
    %135 = vector.extract_strided_slice %3 {offsets = [0, 96], sizes = [16, 8], strides = [1, 1]} : vector<16x128xbf16> to vector<16x8xbf16>
    %136 = vector.extract_strided_slice %85 {offsets = [0, 192], sizes = [8, 16], strides = [1, 1]} : vector<8x256xbf16> to vector<8x16xbf16>
    %cst_51 = arith.constant dense<0.000000e+00> : vector<16x16xf32>
    %137 = tpu.matmul %135, %136, %cst_51 {dimension_numbers = #tpu.dot_dimension_numbers<[1], [0], [0], [1], [0, 0, 1, 1], [], []>} : vector<16x8xbf16>, vector<8x16xbf16>, vector<16x16xf32> -> vector<16x16xf32>
    %138 = arith.addf %134, %137 : vector<16x16xf32>
    %139 = vector.extract_strided_slice %3 {offsets = [0, 104], sizes = [16, 8], strides = [1, 1]} : vector<16x128xbf16> to vector<16x8xbf16>
    %140 = vector.extract_strided_slice %85 {offsets = [0, 208], sizes = [8, 16], strides = [1, 1]} : vector<8x256xbf16> to vector<8x16xbf16>
    %cst_52 = arith.constant dense<0.000000e+00> : vector<16x16xf32>
    %141 = tpu.matmul %139, %140, %cst_52 {dimension_numbers = #tpu.dot_dimension_numbers<[1], [0], [0], [1], [0, 0, 1, 1], [], []>} : vector<16x8xbf16>, vector<8x16xbf16>, vector<16x16xf32> -> vector<16x16xf32>
    %142 = arith.addf %138, %141 : vector<16x16xf32>
    %143 = vector.extract_strided_slice %3 {offsets = [0, 112], sizes = [16, 8], strides = [1, 1]} : vector<16x128xbf16> to vector<16x8xbf16>
    %144 = vector.extract_strided_slice %85 {offsets = [0, 224], sizes = [8, 16], strides = [1, 1]} : vector<8x256xbf16> to vector<8x16xbf16>
    %cst_53 = arith.constant dense<0.000000e+00> : vector<16x16xf32>
    %145 = tpu.matmul %143, %144, %cst_53 {dimension_numbers = #tpu.dot_dimension_numbers<[1], [0], [0], [1], [0, 0, 1, 1], [], []>} : vector<16x8xbf16>, vector<8x16xbf16>, vector<16x16xf32> -> vector<16x16xf32>
    %146 = arith.addf %142, %145 : vector<16x16xf32>
    %147 = vector.extract_strided_slice %3 {offsets = [0, 120], sizes = [16, 8], strides = [1, 1]} : vector<16x128xbf16> to vector<16x8xbf16>
    %148 = vector.extract_strided_slice %85 {offsets = [0, 240], sizes = [8, 16], strides = [1, 1]} : vector<8x256xbf16> to vector<8x16xbf16>
    %cst_54 = arith.constant dense<0.000000e+00> : vector<16x16xf32>
    %149 = tpu.matmul %147, %148, %cst_54 {dimension_numbers = #tpu.dot_dimension_numbers<[1], [0], [0], [1], [0, 0, 1, 1], [], []>} : vector<16x8xbf16>, vector<8x16xbf16>, vector<16x16xf32> -> vector<16x16xf32>
    %150 = arith.addf %146, %149 : vector<16x16xf32>
    %cst_55 = arith.constant 0.000000e+00 : f32
    %151 = vector.broadcast %cst_55 : f32 to vector<16x16xf32>
    %152 = arith.cmpf ogt, %150, %151 : vector<16x16xf32>
    %cst_56 = arith.constant 2.000000e-01 : f32
    %153 = vector.broadcast %cst_56 : f32 to vector<16x16xf32>
    %154 = arith.mulf %153, %150 : vector<16x16xf32>
    %155 = arith.select %152, %150, %154 : vector<16x16xi1>, vector<16x16xf32>
    %cst_57 = arith.constant dense<0.000000e+00> : vector<16x512xf32>
    %156 = tpu.matmul %155, %4, %cst_57 {dimension_numbers = #tpu.dot_dimension_numbers<[1], [0], [0], [1], [0, 0, 1, 1], [], []>} : vector<16x16xf32>, vector<16x512xf32>, vector<16x512xf32> -> vector<16x512xf32>
    %cst_58 = arith.constant 0.000000e+00 : f32
    %157 = vector.broadcast %cst_58 : f32 to vector<1x32xf32>
    %158 = vector.extract_strided_slice %156 {offsets = [0, 0], sizes = [1, 32], strides = [1, 1]} : vector<16x512xf32> to vector<1x32xf32>
    %159 = arith.addf %157, %158 : vector<1x32xf32>
    %160 = vector.extract_strided_slice %156 {offsets = [1, 32], sizes = [1, 32], strides = [1, 1]} : vector<16x512xf32> to vector<1x32xf32>
    %161 = arith.addf %159, %160 : vector<1x32xf32>
    %162 = vector.extract_strided_slice %156 {offsets = [2, 64], sizes = [1, 32], strides = [1, 1]} : vector<16x512xf32> to vector<1x32xf32>
    %163 = arith.addf %161, %162 : vector<1x32xf32>
    %164 = vector.extract_strided_slice %156 {offsets = [3, 96], sizes = [1, 32], strides = [1, 1]} : vector<16x512xf32> to vector<1x32xf32>
    %165 = arith.addf %163, %164 : vector<1x32xf32>
    %166 = vector.extract_strided_slice %156 {offsets = [4, 128], sizes = [1, 32], strides = [1, 1]} : vector<16x512xf32> to vector<1x32xf32>
    %167 = arith.addf %165, %166 : vector<1x32xf32>
    %168 = vector.extract_strided_slice %156 {offsets = [5, 160], sizes = [1, 32], strides = [1, 1]} : vector<16x512xf32> to vector<1x32xf32>
    %169 = arith.addf %167, %168 : vector<1x32xf32>
    %170 = vector.extract_strided_slice %156 {offsets = [6, 192], sizes = [1, 32], strides = [1, 1]} : vector<16x512xf32> to vector<1x32xf32>
    %171 = arith.addf %169, %170 : vector<1x32xf32>
    %172 = vector.extract_strided_slice %156 {offsets = [7, 224], sizes = [1, 32], strides = [1, 1]} : vector<16x512xf32> to vector<1x32xf32>
    %173 = arith.addf %171, %172 : vector<1x32xf32>
    %174 = vector.extract_strided_slice %156 {offsets = [8, 256], sizes = [1, 32], strides = [1, 1]} : vector<16x512xf32> to vector<1x32xf32>
    %175 = arith.addf %173, %174 : vector<1x32xf32>
    %176 = vector.extract_strided_slice %156 {offsets = [9, 288], sizes = [1, 32], strides = [1, 1]} : vector<16x512xf32> to vector<1x32xf32>
    %177 = arith.addf %175, %176 : vector<1x32xf32>
    %178 = vector.extract_strided_slice %156 {offsets = [10, 320], sizes = [1, 32], strides = [1, 1]} : vector<16x512xf32> to vector<1x32xf32>
    %179 = arith.addf %177, %178 : vector<1x32xf32>
    %180 = vector.extract_strided_slice %156 {offsets = [11, 352], sizes = [1, 32], strides = [1, 1]} : vector<16x512xf32> to vector<1x32xf32>
    %181 = arith.addf %179, %180 : vector<1x32xf32>
    %182 = vector.extract_strided_slice %156 {offsets = [12, 384], sizes = [1, 32], strides = [1, 1]} : vector<16x512xf32> to vector<1x32xf32>
    %183 = arith.addf %181, %182 : vector<1x32xf32>
    %184 = vector.extract_strided_slice %156 {offsets = [13, 416], sizes = [1, 32], strides = [1, 1]} : vector<16x512xf32> to vector<1x32xf32>
    %185 = arith.addf %183, %184 : vector<1x32xf32>
    %186 = vector.extract_strided_slice %156 {offsets = [14, 448], sizes = [1, 32], strides = [1, 1]} : vector<16x512xf32> to vector<1x32xf32>
    %187 = arith.addf %185, %186 : vector<1x32xf32>
    %188 = vector.extract_strided_slice %156 {offsets = [15, 480], sizes = [1, 32], strides = [1, 1]} : vector<16x512xf32> to vector<1x32xf32>
    %189 = arith.addf %187, %188 : vector<1x32xf32>
    %190 = arith.addf %189, %5 : vector<1x32xf32>
    %cst_59 = arith.constant 0.000000e+00 : f32
    %191 = vector.broadcast %cst_59 : f32 to vector<1x32xf32>
    %192 = arith.cmpf ogt, %190, %191 : vector<1x32xf32>
    %cst_60 = arith.constant 2.000000e-01 : f32
    %193 = vector.broadcast %cst_60 : f32 to vector<1x32xf32>
    %194 = arith.mulf %193, %190 : vector<1x32xf32>
    %195 = arith.select %192, %190, %194 : vector<1x32xi1>, vector<1x32xf32>
    %196 = arith.mulf %195, %6 : vector<1x32xf32>
    %cst_61 = arith.constant dense<0.000000e+00> : vector<1xf32>
    %197 = vector.multi_reduction <add>, %196, %cst_61 [1] : vector<1x32xf32> to vector<1xf32>
    %198 = vector.shape_cast %197 : vector<1xf32> to vector<1x1xf32>
    %199 = vector.broadcast %7 : f32 to vector<1x1xf32>
    %200 = arith.addf %198, %199 : vector<1x1xf32>
    %cst_62 = arith.constant 0.000000e+00 : f32
    %201 = vector.broadcast %cst_62 : f32 to vector<1x1xf32>
    %202 = arith.subf %201, %200 : vector<1x1xf32>
    %203 = math.exp %202 : vector<1x1xf32>
    %cst_63 = arith.constant 1.000000e+00 : f32
    %204 = vector.broadcast %cst_63 : f32 to vector<1x1xf32>
    %205 = arith.addf %204, %203 : vector<1x1xf32>
    %206 = tpu.reciprocal %205 {approx = true} : vector<1x1xf32> -> vector<1x1xf32>
    %c0_64 = arith.constant 0 : index
    %c0_65 = arith.constant 0 : index
    %207 = vector.load %arg9[%c0_64, %c0_65] : memref<2x1xf32, #tpu.memory_space<vmem>>, vector<1x1xf32>
    tpu.vector_store %arg9[%c0_64, %c0_65], %206 {strides = array<i32>} : memref<2x1xf32, #tpu.memory_space<vmem>>, vector<1x1xf32>,
    %c1 = arith.constant 1 : index
    %c0_66 = arith.constant 0 : index
    %c0_67 = arith.constant 0 : index
    %208 = vector.load %arg0[%c1, %c0_66, %c0_67] : memref<2x4x256xf32, #tpu.memory_space<vmem>>, vector<1x4x256xf32>
    %209 = vector.shape_cast %208 : vector<1x4x256xf32> to vector<4x256xf32>
    %210 = arith.truncf %209 : vector<4x256xf32> to vector<4x256xbf16>
    %cst_68 = arith.constant dense<0.000000e+00> : vector<4x1024xf32>
    %211 = tpu.matmul %210, %0, %cst_68 {dimension_numbers = #tpu.dot_dimension_numbers<[1], [0], [0], [1], [0, 0, 1, 1], [], []>} : vector<4x256xbf16>, vector<256x1024xbf16>, vector<4x1024xf32> -> vector<4x1024xf32>
    %212 = arith.truncf %211 : vector<4x1024xf32> to vector<4x1024xbf16>
    %cst_69 = arith.constant 0.000000e+00 : f32
    %213 = vector.broadcast %cst_69 : f32 to vector<8x64xf32>
    %214 = vector.extract_strided_slice %2 {offsets = [0, 0], sizes = [8, 4], strides = [1, 1]} : vector<8x64xbf16> to vector<8x4xbf16>
    %215 = vector.extract_strided_slice %212 {offsets = [0, 0], sizes = [4, 64], strides = [1, 1]} : vector<4x1024xbf16> to vector<4x64xbf16>
    %cst_70 = arith.constant dense<0.000000e+00> : vector<8x64xf32>
    %216 = tpu.matmul %214, %215, %cst_70 {dimension_numbers = #tpu.dot_dimension_numbers<[1], [0], [0], [1], [0, 0, 1, 1], [], []>} : vector<8x4xbf16>, vector<4x64xbf16>, vector<8x64xf32> -> vector<8x64xf32>
    %217 = arith.addf %213, %216 : vector<8x64xf32>
    %218 = vector.extract_strided_slice %2 {offsets = [0, 4], sizes = [8, 4], strides = [1, 1]} : vector<8x64xbf16> to vector<8x4xbf16>
    %219 = vector.extract_strided_slice %212 {offsets = [0, 64], sizes = [4, 64], strides = [1, 1]} : vector<4x1024xbf16> to vector<4x64xbf16>
    %cst_71 = arith.constant dense<0.000000e+00> : vector<8x64xf32>
    %220 = tpu.matmul %218, %219, %cst_71 {dimension_numbers = #tpu.dot_dimension_numbers<[1], [0], [0], [1], [0, 0, 1, 1], [], []>} : vector<8x4xbf16>, vector<4x64xbf16>, vector<8x64xf32> -> vector<8x64xf32>
    %221 = arith.addf %217, %220 : vector<8x64xf32>
    %222 = vector.extract_strided_slice %2 {offsets = [0, 8], sizes = [8, 4], strides = [1, 1]} : vector<8x64xbf16> to vector<8x4xbf16>
    %223 = vector.extract_strided_slice %212 {offsets = [0, 128], sizes = [4, 64], strides = [1, 1]} : vector<4x1024xbf16> to vector<4x64xbf16>
    %cst_72 = arith.constant dense<0.000000e+00> : vector<8x64xf32>
    %224 = tpu.matmul %222, %223, %cst_72 {dimension_numbers = #tpu.dot_dimension_numbers<[1], [0], [0], [1], [0, 0, 1, 1], [], []>} : vector<8x4xbf16>, vector<4x64xbf16>, vector<8x64xf32> -> vector<8x64xf32>
    %225 = arith.addf %221, %224 : vector<8x64xf32>
    %226 = vector.extract_strided_slice %2 {offsets = [0, 12], sizes = [8, 4], strides = [1, 1]} : vector<8x64xbf16> to vector<8x4xbf16>
    %227 = vector.extract_strided_slice %212 {offsets = [0, 192], sizes = [4, 64], strides = [1, 1]} : vector<4x1024xbf16> to vector<4x64xbf16>
    %cst_73 = arith.constant dense<0.000000e+00> : vector<8x64xf32>
    %228 = tpu.matmul %226, %227, %cst_73 {dimension_numbers = #tpu.dot_dimension_numbers<[1], [0], [0], [1], [0, 0, 1, 1], [], []>} : vector<8x4xbf16>, vector<4x64xbf16>, vector<8x64xf32> -> vector<8x64xf32>
    %229 = arith.addf %225, %228 : vector<8x64xf32>
    %230 = vector.extract_strided_slice %2 {offsets = [0, 16], sizes = [8, 4], strides = [1, 1]} : vector<8x64xbf16> to vector<8x4xbf16>
    %231 = vector.extract_strided_slice %212 {offsets = [0, 256], sizes = [4, 64], strides = [1, 1]} : vector<4x1024xbf16> to vector<4x64xbf16>
    %cst_74 = arith.constant dense<0.000000e+00> : vector<8x64xf32>
    %232 = tpu.matmul %230, %231, %cst_74 {dimension_numbers = #tpu.dot_dimension_numbers<[1], [0], [0], [1], [0, 0, 1, 1], [], []>} : vector<8x4xbf16>, vector<4x64xbf16>, vector<8x64xf32> -> vector<8x64xf32>
    %233 = arith.addf %229, %232 : vector<8x64xf32>
    %234 = vector.extract_strided_slice %2 {offsets = [0, 20], sizes = [8, 4], strides = [1, 1]} : vector<8x64xbf16> to vector<8x4xbf16>
    %235 = vector.extract_strided_slice %212 {offsets = [0, 320], sizes = [4, 64], strides = [1, 1]} : vector<4x1024xbf16> to vector<4x64xbf16>
    %cst_75 = arith.constant dense<0.000000e+00> : vector<8x64xf32>
    %236 = tpu.matmul %234, %235, %cst_75 {dimension_numbers = #tpu.dot_dimension_numbers<[1], [0], [0], [1], [0, 0, 1, 1], [], []>} : vector<8x4xbf16>, vector<4x64xbf16>, vector<8x64xf32> -> vector<8x64xf32>
    %237 = arith.addf %233, %236 : vector<8x64xf32>
    %238 = vector.extract_strided_slice %2 {offsets = [0, 24], sizes = [8, 4], strides = [1, 1]} : vector<8x64xbf16> to vector<8x4xbf16>
    %239 = vector.extract_strided_slice %212 {offsets = [0, 384], sizes = [4, 64], strides = [1, 1]} : vector<4x1024xbf16> to vector<4x64xbf16>
    %cst_76 = arith.constant dense<0.000000e+00> : vector<8x64xf32>
    %240 = tpu.matmul %238, %239, %cst_76 {dimension_numbers = #tpu.dot_dimension_numbers<[1], [0], [0], [1], [0, 0, 1, 1], [], []>} : vector<8x4xbf16>, vector<4x64xbf16>, vector<8x64xf32> -> vector<8x64xf32>
    %241 = arith.addf %237, %240 : vector<8x64xf32>
    %242 = vector.extract_strided_slice %2 {offsets = [0, 28], sizes = [8, 4], strides = [1, 1]} : vector<8x64xbf16> to vector<8x4xbf16>
    %243 = vector.extract_strided_slice %212 {offsets = [0, 448], sizes = [4, 64], strides = [1, 1]} : vector<4x1024xbf16> to vector<4x64xbf16>
    %cst_77 = arith.constant dense<0.000000e+00> : vector<8x64xf32>
    %244 = tpu.matmul %242, %243, %cst_77 {dimension_numbers = #tpu.dot_dimension_numbers<[1], [0], [0], [1], [0, 0, 1, 1], [], []>} : vector<8x4xbf16>, vector<4x64xbf16>, vector<8x64xf32> -> vector<8x64xf32>
    %245 = arith.addf %241, %244 : vector<8x64xf32>
    %246 = vector.extract_strided_slice %2 {offsets = [0, 32], sizes = [8, 4], strides = [1, 1]} : vector<8x64xbf16> to vector<8x4xbf16>
    %247 = vector.extract_strided_slice %212 {offsets = [0, 512], sizes = [4, 64], strides = [1, 1]} : vector<4x1024xbf16> to vector<4x64xbf16>
    %cst_78 = arith.constant dense<0.000000e+00> : vector<8x64xf32>
    %248 = tpu.matmul %246, %247, %cst_78 {dimension_numbers = #tpu.dot_dimension_numbers<[1], [0], [0], [1], [0, 0, 1, 1], [], []>} : vector<8x4xbf16>, vector<4x64xbf16>, vector<8x64xf32> -> vector<8x64xf32>
    %249 = arith.addf %245, %248 : vector<8x64xf32>
    %250 = vector.extract_strided_slice %2 {offsets = [0, 36], sizes = [8, 4], strides = [1, 1]} : vector<8x64xbf16> to vector<8x4xbf16>
    %251 = vector.extract_strided_slice %212 {offsets = [0, 576], sizes = [4, 64], strides = [1, 1]} : vector<4x1024xbf16> to vector<4x64xbf16>
    %cst_79 = arith.constant dense<0.000000e+00> : vector<8x64xf32>
    %252 = tpu.matmul %250, %251, %cst_79 {dimension_numbers = #tpu.dot_dimension_numbers<[1], [0], [0], [1], [0, 0, 1, 1], [], []>} : vector<8x4xbf16>, vector<4x64xbf16>, vector<8x64xf32> -> vector<8x64xf32>
    %253 = arith.addf %249, %252 : vector<8x64xf32>
    %254 = vector.extract_strided_slice %2 {offsets = [0, 40], sizes = [8, 4], strides = [1, 1]} : vector<8x64xbf16> to vector<8x4xbf16>
    %255 = vector.extract_strided_slice %212 {offsets = [0, 640], sizes = [4, 64], strides = [1, 1]} : vector<4x1024xbf16> to vector<4x64xbf16>
    %cst_80 = arith.constant dense<0.000000e+00> : vector<8x64xf32>
    %256 = tpu.matmul %254, %255, %cst_80 {dimension_numbers = #tpu.dot_dimension_numbers<[1], [0], [0], [1], [0, 0, 1, 1], [], []>} : vector<8x4xbf16>, vector<4x64xbf16>, vector<8x64xf32> -> vector<8x64xf32>
    %257 = arith.addf %253, %256 : vector<8x64xf32>
    %258 = vector.extract_strided_slice %2 {offsets = [0, 44], sizes = [8, 4], strides = [1, 1]} : vector<8x64xbf16> to vector<8x4xbf16>
    %259 = vector.extract_strided_slice %212 {offsets = [0, 704], sizes = [4, 64], strides = [1, 1]} : vector<4x1024xbf16> to vector<4x64xbf16>
    %cst_81 = arith.constant dense<0.000000e+00> : vector<8x64xf32>
    %260 = tpu.matmul %258, %259, %cst_81 {dimension_numbers = #tpu.dot_dimension_numbers<[1], [0], [0], [1], [0, 0, 1, 1], [], []>} : vector<8x4xbf16>, vector<4x64xbf16>, vector<8x64xf32> -> vector<8x64xf32>
    %261 = arith.addf %257, %260 : vector<8x64xf32>
    %262 = vector.extract_strided_slice %2 {offsets = [0, 48], sizes = [8, 4], strides = [1, 1]} : vector<8x64xbf16> to vector<8x4xbf16>
    %263 = vector.extract_strided_slice %212 {offsets = [0, 768], sizes = [4, 64], strides = [1, 1]} : vector<4x1024xbf16> to vector<4x64xbf16>
    %cst_82 = arith.constant dense<0.000000e+00> : vector<8x64xf32>
    %264 = tpu.matmul %262, %263, %cst_82 {dimension_numbers = #tpu.dot_dimension_numbers<[1], [0], [0], [1], [0, 0, 1, 1], [], []>} : vector<8x4xbf16>, vector<4x64xbf16>, vector<8x64xf32> -> vector<8x64xf32>
    %265 = arith.addf %261, %264 : vector<8x64xf32>
    %266 = vector.extract_strided_slice %2 {offsets = [0, 52], sizes = [8, 4], strides = [1, 1]} : vector<8x64xbf16> to vector<8x4xbf16>
    %267 = vector.extract_strided_slice %212 {offsets = [0, 832], sizes = [4, 64], strides = [1, 1]} : vector<4x1024xbf16> to vector<4x64xbf16>
    %cst_83 = arith.constant dense<0.000000e+00> : vector<8x64xf32>
    %268 = tpu.matmul %266, %267, %cst_83 {dimension_numbers = #tpu.dot_dimension_numbers<[1], [0], [0], [1], [0, 0, 1, 1], [], []>} : vector<8x4xbf16>, vector<4x64xbf16>, vector<8x64xf32> -> vector<8x64xf32>
    %269 = arith.addf %265, %268 : vector<8x64xf32>
    %270 = vector.extract_strided_slice %2 {offsets = [0, 56], sizes = [8, 4], strides = [1, 1]} : vector<8x64xbf16> to vector<8x4xbf16>
    %271 = vector.extract_strided_slice %212 {offsets = [0, 896], sizes = [4, 64], strides = [1, 1]} : vector<4x1024xbf16> to vector<4x64xbf16>
    %cst_84 = arith.constant dense<0.000000e+00> : vector<8x64xf32>
    %272 = tpu.matmul %270, %271, %cst_84 {dimension_numbers = #tpu.dot_dimension_numbers<[1], [0], [0], [1], [0, 0, 1, 1], [], []>} : vector<8x4xbf16>, vector<4x64xbf16>, vector<8x64xf32> -> vector<8x64xf32>
    %273 = arith.addf %269, %272 : vector<8x64xf32>
    %274 = vector.extract_strided_slice %2 {offsets = [0, 60], sizes = [8, 4], strides = [1, 1]} : vector<8x64xbf16> to vector<8x4xbf16>
    %275 = vector.extract_strided_slice %212 {offsets = [0, 960], sizes = [4, 64], strides = [1, 1]} : vector<4x1024xbf16> to vector<4x64xbf16>
    %cst_85 = arith.constant dense<0.000000e+00> : vector<8x64xf32>
    %276 = tpu.matmul %274, %275, %cst_85 {dimension_numbers = #tpu.dot_dimension_numbers<[1], [0], [0], [1], [0, 0, 1, 1], [], []>} : vector<8x4xbf16>, vector<4x64xbf16>, vector<8x64xf32> -> vector<8x64xf32>
    %277 = arith.addf %273, %276 : vector<8x64xf32>
    %cst_86 = arith.constant 0.000000e+00 : f32
    %278 = vector.broadcast %cst_86 : f32 to vector<8x64xf32>
    %279 = arith.cmpf ogt, %277, %278 : vector<8x64xf32>
    %cst_87 = arith.constant 2.000000e-01 : f32
    %280 = vector.broadcast %cst_87 : f32 to vector<8x64xf32>
    %281 = arith.mulf %280, %277 : vector<8x64xf32>
    %282 = arith.select %279, %277, %281 : vector<8x64xi1>, vector<8x64xf32>
    %283 = arith.truncf %282 : vector<8x64xf32> to vector<8x64xbf16>
    %cst_88 = arith.constant dense<0.000000e+00> : vector<8x256xf32>
    %284 = tpu.matmul %283, %1, %cst_88 {dimension_numbers = #tpu.dot_dimension_numbers<[1], [0], [0], [1], [0, 0, 1, 1], [], []>} : vector<8x64xbf16>, vector<64x256xbf16>, vector<8x256xf32> -> vector<8x256xf32>
    %285 = arith.truncf %284 : vector<8x256xf32> to vector<8x256xbf16>
    %cst_89 = arith.constant 0.000000e+00 : f32
    %286 = vector.broadcast %cst_89 : f32 to vector<16x16xf32>
    %287 = vector.extract_strided_slice %3 {offsets = [0, 0], sizes = [16, 8], strides = [1, 1]} : vector<16x128xbf16> to vector<16x8xbf16>
    %288 = vector.extract_strided_slice %285 {offsets = [0, 0], sizes = [8, 16], strides = [1, 1]} : vector<8x256xbf16> to vector<8x16xbf16>
    %cst_90 = arith.constant dense<0.000000e+00> : vector<16x16xf32>
    %289 = tpu.matmul %287, %288, %cst_90 {dimension_numbers = #tpu.dot_dimension_numbers<[1], [0], [0], [1], [0, 0, 1, 1], [], []>} : vector<16x8xbf16>, vector<8x16xbf16>, vector<16x16xf32> -> vector<16x16xf32>
    %290 = arith.addf %286, %289 : vector<16x16xf32>
    %291 = vector.extract_strided_slice %3 {offsets = [0, 8], sizes = [16, 8], strides = [1, 1]} : vector<16x128xbf16> to vector<16x8xbf16>
    %292 = vector.extract_strided_slice %285 {offsets = [0, 16], sizes = [8, 16], strides = [1, 1]} : vector<8x256xbf16> to vector<8x16xbf16>
    %cst_91 = arith.constant dense<0.000000e+00> : vector<16x16xf32>
    %293 = tpu.matmul %291, %292, %cst_91 {dimension_numbers = #tpu.dot_dimension_numbers<[1], [0], [0], [1], [0, 0, 1, 1], [], []>} : vector<16x8xbf16>, vector<8x16xbf16>, vector<16x16xf32> -> vector<16x16xf32>
    %294 = arith.addf %290, %293 : vector<16x16xf32>
    %295 = vector.extract_strided_slice %3 {offsets = [0, 16], sizes = [16, 8], strides = [1, 1]} : vector<16x128xbf16> to vector<16x8xbf16>
    %296 = vector.extract_strided_slice %285 {offsets = [0, 32], sizes = [8, 16], strides = [1, 1]} : vector<8x256xbf16> to vector<8x16xbf16>
    %cst_92 = arith.constant dense<0.000000e+00> : vector<16x16xf32>
    %297 = tpu.matmul %295, %296, %cst_92 {dimension_numbers = #tpu.dot_dimension_numbers<[1], [0], [0], [1], [0, 0, 1, 1], [], []>} : vector<16x8xbf16>, vector<8x16xbf16>, vector<16x16xf32> -> vector<16x16xf32>
    %298 = arith.addf %294, %297 : vector<16x16xf32>
    %299 = vector.extract_strided_slice %3 {offsets = [0, 24], sizes = [16, 8], strides = [1, 1]} : vector<16x128xbf16> to vector<16x8xbf16>
    %300 = vector.extract_strided_slice %285 {offsets = [0, 48], sizes = [8, 16], strides = [1, 1]} : vector<8x256xbf16> to vector<8x16xbf16>
    %cst_93 = arith.constant dense<0.000000e+00> : vector<16x16xf32>
    %301 = tpu.matmul %299, %300, %cst_93 {dimension_numbers = #tpu.dot_dimension_numbers<[1], [0], [0], [1], [0, 0, 1, 1], [], []>} : vector<16x8xbf16>, vector<8x16xbf16>, vector<16x16xf32> -> vector<16x16xf32>
    %302 = arith.addf %298, %301 : vector<16x16xf32>
    %303 = vector.extract_strided_slice %3 {offsets = [0, 32], sizes = [16, 8], strides = [1, 1]} : vector<16x128xbf16> to vector<16x8xbf16>
    %304 = vector.extract_strided_slice %285 {offsets = [0, 64], sizes = [8, 16], strides = [1, 1]} : vector<8x256xbf16> to vector<8x16xbf16>
    %cst_94 = arith.constant dense<0.000000e+00> : vector<16x16xf32>
    %305 = tpu.matmul %303, %304, %cst_94 {dimension_numbers = #tpu.dot_dimension_numbers<[1], [0], [0], [1], [0, 0, 1, 1], [], []>} : vector<16x8xbf16>, vector<8x16xbf16>, vector<16x16xf32> -> vector<16x16xf32>
    %306 = arith.addf %302, %305 : vector<16x16xf32>
    %307 = vector.extract_strided_slice %3 {offsets = [0, 40], sizes = [16, 8], strides = [1, 1]} : vector<16x128xbf16> to vector<16x8xbf16>
    %308 = vector.extract_strided_slice %285 {offsets = [0, 80], sizes = [8, 16], strides = [1, 1]} : vector<8x256xbf16> to vector<8x16xbf16>
    %cst_95 = arith.constant dense<0.000000e+00> : vector<16x16xf32>
    %309 = tpu.matmul %307, %308, %cst_95 {dimension_numbers = #tpu.dot_dimension_numbers<[1], [0], [0], [1], [0, 0, 1, 1], [], []>} : vector<16x8xbf16>, vector<8x16xbf16>, vector<16x16xf32> -> vector<16x16xf32>
    %310 = arith.addf %306, %309 : vector<16x16xf32>
    %311 = vector.extract_strided_slice %3 {offsets = [0, 48], sizes = [16, 8], strides = [1, 1]} : vector<16x128xbf16> to vector<16x8xbf16>
    %312 = vector.extract_strided_slice %285 {offsets = [0, 96], sizes = [8, 16], strides = [1, 1]} : vector<8x256xbf16> to vector<8x16xbf16>
    %cst_96 = arith.constant dense<0.000000e+00> : vector<16x16xf32>
    %313 = tpu.matmul %311, %312, %cst_96 {dimension_numbers = #tpu.dot_dimension_numbers<[1], [0], [0], [1], [0, 0, 1, 1], [], []>} : vector<16x8xbf16>, vector<8x16xbf16>, vector<16x16xf32> -> vector<16x16xf32>
    %314 = arith.addf %310, %313 : vector<16x16xf32>
    %315 = vector.extract_strided_slice %3 {offsets = [0, 56], sizes = [16, 8], strides = [1, 1]} : vector<16x128xbf16> to vector<16x8xbf16>
    %316 = vector.extract_strided_slice %285 {offsets = [0, 112], sizes = [8, 16], strides = [1, 1]} : vector<8x256xbf16> to vector<8x16xbf16>
    %cst_97 = arith.constant dense<0.000000e+00> : vector<16x16xf32>
    %317 = tpu.matmul %315, %316, %cst_97 {dimension_numbers = #tpu.dot_dimension_numbers<[1], [0], [0], [1], [0, 0, 1, 1], [], []>} : vector<16x8xbf16>, vector<8x16xbf16>, vector<16x16xf32> -> vector<16x16xf32>
    %318 = arith.addf %314, %317 : vector<16x16xf32>
    %319 = vector.extract_strided_slice %3 {offsets = [0, 64], sizes = [16, 8], strides = [1, 1]} : vector<16x128xbf16> to vector<16x8xbf16>
    %320 = vector.extract_strided_slice %285 {offsets = [0, 128], sizes = [8, 16], strides = [1, 1]} : vector<8x256xbf16> to vector<8x16xbf16>
    %cst_98 = arith.constant dense<0.000000e+00> : vector<16x16xf32>
    %321 = tpu.matmul %319, %320, %cst_98 {dimension_numbers = #tpu.dot_dimension_numbers<[1], [0], [0], [1], [0, 0, 1, 1], [], []>} : vector<16x8xbf16>, vector<8x16xbf16>, vector<16x16xf32> -> vector<16x16xf32>
    %322 = arith.addf %318, %321 : vector<16x16xf32>
    %323 = vector.extract_strided_slice %3 {offsets = [0, 72], sizes = [16, 8], strides = [1, 1]} : vector<16x128xbf16> to vector<16x8xbf16>
    %324 = vector.extract_strided_slice %285 {offsets = [0, 144], sizes = [8, 16], strides = [1, 1]} : vector<8x256xbf16> to vector<8x16xbf16>
    %cst_99 = arith.constant dense<0.000000e+00> : vector<16x16xf32>
    %325 = tpu.matmul %323, %324, %cst_99 {dimension_numbers = #tpu.dot_dimension_numbers<[1], [0], [0], [1], [0, 0, 1, 1], [], []>} : vector<16x8xbf16>, vector<8x16xbf16>, vector<16x16xf32> -> vector<16x16xf32>
    %326 = arith.addf %322, %325 : vector<16x16xf32>
    %327 = vector.extract_strided_slice %3 {offsets = [0, 80], sizes = [16, 8], strides = [1, 1]} : vector<16x128xbf16> to vector<16x8xbf16>
    %328 = vector.extract_strided_slice %285 {offsets = [0, 160], sizes = [8, 16], strides = [1, 1]} : vector<8x256xbf16> to vector<8x16xbf16>
    %cst_100 = arith.constant dense<0.000000e+00> : vector<16x16xf32>
    %329 = tpu.matmul %327, %328, %cst_100 {dimension_numbers = #tpu.dot_dimension_numbers<[1], [0], [0], [1], [0, 0, 1, 1], [], []>} : vector<16x8xbf16>, vector<8x16xbf16>, vector<16x16xf32> -> vector<16x16xf32>
    %330 = arith.addf %326, %329 : vector<16x16xf32>
    %331 = vector.extract_strided_slice %3 {offsets = [0, 88], sizes = [16, 8], strides = [1, 1]} : vector<16x128xbf16> to vector<16x8xbf16>
    %332 = vector.extract_strided_slice %285 {offsets = [0, 176], sizes = [8, 16], strides = [1, 1]} : vector<8x256xbf16> to vector<8x16xbf16>
    %cst_101 = arith.constant dense<0.000000e+00> : vector<16x16xf32>
    %333 = tpu.matmul %331, %332, %cst_101 {dimension_numbers = #tpu.dot_dimension_numbers<[1], [0], [0], [1], [0, 0, 1, 1], [], []>} : vector<16x8xbf16>, vector<8x16xbf16>, vector<16x16xf32> -> vector<16x16xf32>
    %334 = arith.addf %330, %333 : vector<16x16xf32>
    %335 = vector.extract_strided_slice %3 {offsets = [0, 96], sizes = [16, 8], strides = [1, 1]} : vector<16x128xbf16> to vector<16x8xbf16>
    %336 = vector.extract_strided_slice %285 {offsets = [0, 192], sizes = [8, 16], strides = [1, 1]} : vector<8x256xbf16> to vector<8x16xbf16>
    %cst_102 = arith.constant dense<0.000000e+00> : vector<16x16xf32>
    %337 = tpu.matmul %335, %336, %cst_102 {dimension_numbers = #tpu.dot_dimension_numbers<[1], [0], [0], [1], [0, 0, 1, 1], [], []>} : vector<16x8xbf16>, vector<8x16xbf16>, vector<16x16xf32> -> vector<16x16xf32>
    %338 = arith.addf %334, %337 : vector<16x16xf32>
    %339 = vector.extract_strided_slice %3 {offsets = [0, 104], sizes = [16, 8], strides = [1, 1]} : vector<16x128xbf16> to vector<16x8xbf16>
    %340 = vector.extract_strided_slice %285 {offsets = [0, 208], sizes = [8, 16], strides = [1, 1]} : vector<8x256xbf16> to vector<8x16xbf16>
    %cst_103 = arith.constant dense<0.000000e+00> : vector<16x16xf32>
    %341 = tpu.matmul %339, %340, %cst_103 {dimension_numbers = #tpu.dot_dimension_numbers<[1], [0], [0], [1], [0, 0, 1, 1], [], []>} : vector<16x8xbf16>, vector<8x16xbf16>, vector<16x16xf32> -> vector<16x16xf32>
    %342 = arith.addf %338, %341 : vector<16x16xf32>
    %343 = vector.extract_strided_slice %3 {offsets = [0, 112], sizes = [16, 8], strides = [1, 1]} : vector<16x128xbf16> to vector<16x8xbf16>
    %344 = vector.extract_strided_slice %285 {offsets = [0, 224], sizes = [8, 16], strides = [1, 1]} : vector<8x256xbf16> to vector<8x16xbf16>
    %cst_104 = arith.constant dense<0.000000e+00> : vector<16x16xf32>
    %345 = tpu.matmul %343, %344, %cst_104 {dimension_numbers = #tpu.dot_dimension_numbers<[1], [0], [0], [1], [0, 0, 1, 1], [], []>} : vector<16x8xbf16>, vector<8x16xbf16>, vector<16x16xf32> -> vector<16x16xf32>
    %346 = arith.addf %342, %345 : vector<16x16xf32>
    %347 = vector.extract_strided_slice %3 {offsets = [0, 120], sizes = [16, 8], strides = [1, 1]} : vector<16x128xbf16> to vector<16x8xbf16>
    %348 = vector.extract_strided_slice %285 {offsets = [0, 240], sizes = [8, 16], strides = [1, 1]} : vector<8x256xbf16> to vector<8x16xbf16>
    %cst_105 = arith.constant dense<0.000000e+00> : vector<16x16xf32>
    %349 = tpu.matmul %347, %348, %cst_105 {dimension_numbers = #tpu.dot_dimension_numbers<[1], [0], [0], [1], [0, 0, 1, 1], [], []>} : vector<16x8xbf16>, vector<8x16xbf16>, vector<16x16xf32> -> vector<16x16xf32>
    %350 = arith.addf %346, %349 : vector<16x16xf32>
    %cst_106 = arith.constant 0.000000e+00 : f32
    %351 = vector.broadcast %cst_106 : f32 to vector<16x16xf32>
    %352 = arith.cmpf ogt, %350, %351 : vector<16x16xf32>
    %cst_107 = arith.constant 2.000000e-01 : f32
    %353 = vector.broadcast %cst_107 : f32 to vector<16x16xf32>
    %354 = arith.mulf %353, %350 : vector<16x16xf32>
    %355 = arith.select %352, %350, %354 : vector<16x16xi1>, vector<16x16xf32>
    %cst_108 = arith.constant dense<0.000000e+00> : vector<16x512xf32>
    %356 = tpu.matmul %355, %4, %cst_108 {dimension_numbers = #tpu.dot_dimension_numbers<[1], [0], [0], [1], [0, 0, 1, 1], [], []>} : vector<16x16xf32>, vector<16x512xf32>, vector<16x512xf32> -> vector<16x512xf32>
    %cst_109 = arith.constant 0.000000e+00 : f32
    %357 = vector.broadcast %cst_109 : f32 to vector<1x32xf32>
    %358 = vector.extract_strided_slice %356 {offsets = [0, 0], sizes = [1, 32], strides = [1, 1]} : vector<16x512xf32> to vector<1x32xf32>
    %359 = arith.addf %357, %358 : vector<1x32xf32>
    %360 = vector.extract_strided_slice %356 {offsets = [1, 32], sizes = [1, 32], strides = [1, 1]} : vector<16x512xf32> to vector<1x32xf32>
    %361 = arith.addf %359, %360 : vector<1x32xf32>
    %362 = vector.extract_strided_slice %356 {offsets = [2, 64], sizes = [1, 32], strides = [1, 1]} : vector<16x512xf32> to vector<1x32xf32>
    %363 = arith.addf %361, %362 : vector<1x32xf32>
    %364 = vector.extract_strided_slice %356 {offsets = [3, 96], sizes = [1, 32], strides = [1, 1]} : vector<16x512xf32> to vector<1x32xf32>
    %365 = arith.addf %363, %364 : vector<1x32xf32>
    %366 = vector.extract_strided_slice %356 {offsets = [4, 128], sizes = [1, 32], strides = [1, 1]} : vector<16x512xf32> to vector<1x32xf32>
    %367 = arith.addf %365, %366 : vector<1x32xf32>
    %368 = vector.extract_strided_slice %356 {offsets = [5, 160], sizes = [1, 32], strides = [1, 1]} : vector<16x512xf32> to vector<1x32xf32>
    %369 = arith.addf %367, %368 : vector<1x32xf32>
    %370 = vector.extract_strided_slice %356 {offsets = [6, 192], sizes = [1, 32], strides = [1, 1]} : vector<16x512xf32> to vector<1x32xf32>
    %371 = arith.addf %369, %370 : vector<1x32xf32>
    %372 = vector.extract_strided_slice %356 {offsets = [7, 224], sizes = [1, 32], strides = [1, 1]} : vector<16x512xf32> to vector<1x32xf32>
    %373 = arith.addf %371, %372 : vector<1x32xf32>
    %374 = vector.extract_strided_slice %356 {offsets = [8, 256], sizes = [1, 32], strides = [1, 1]} : vector<16x512xf32> to vector<1x32xf32>
    %375 = arith.addf %373, %374 : vector<1x32xf32>
    %376 = vector.extract_strided_slice %356 {offsets = [9, 288], sizes = [1, 32], strides = [1, 1]} : vector<16x512xf32> to vector<1x32xf32>
    %377 = arith.addf %375, %376 : vector<1x32xf32>
    %378 = vector.extract_strided_slice %356 {offsets = [10, 320], sizes = [1, 32], strides = [1, 1]} : vector<16x512xf32> to vector<1x32xf32>
    %379 = arith.addf %377, %378 : vector<1x32xf32>
    %380 = vector.extract_strided_slice %356 {offsets = [11, 352], sizes = [1, 32], strides = [1, 1]} : vector<16x512xf32> to vector<1x32xf32>
    %381 = arith.addf %379, %380 : vector<1x32xf32>
    %382 = vector.extract_strided_slice %356 {offsets = [12, 384], sizes = [1, 32], strides = [1, 1]} : vector<16x512xf32> to vector<1x32xf32>
    %383 = arith.addf %381, %382 : vector<1x32xf32>
    %384 = vector.extract_strided_slice %356 {offsets = [13, 416], sizes = [1, 32], strides = [1, 1]} : vector<16x512xf32> to vector<1x32xf32>
    %385 = arith.addf %383, %384 : vector<1x32xf32>
    %386 = vector.extract_strided_slice %356 {offsets = [14, 448], sizes = [1, 32], strides = [1, 1]} : vector<16x512xf32> to vector<1x32xf32>
    %387 = arith.addf %385, %386 : vector<1x32xf32>
    %388 = vector.extract_strided_slice %356 {offsets = [15, 480], sizes = [1, 32], strides = [1, 1]} : vector<16x512xf32> to vector<1x32xf32>
    %389 = arith.addf %387, %388 : vector<1x32xf32>
    %390 = arith.addf %389, %5 : vector<1x32xf32>
    %cst_110 = arith.constant 0.000000e+00 : f32
    %391 = vector.broadcast %cst_110 : f32 to vector<1x32xf32>
    %392 = arith.cmpf ogt, %390, %391 : vector<1x32xf32>
    %cst_111 = arith.constant 2.000000e-01 : f32
    %393 = vector.broadcast %cst_111 : f32 to vector<1x32xf32>
    %394 = arith.mulf %393, %390 : vector<1x32xf32>
    %395 = arith.select %392, %390, %394 : vector<1x32xi1>, vector<1x32xf32>
    %396 = arith.mulf %395, %6 : vector<1x32xf32>
    %cst_112 = arith.constant dense<0.000000e+00> : vector<1xf32>
    %397 = vector.multi_reduction <add>, %396, %cst_112 [1] : vector<1x32xf32> to vector<1xf32>
    %398 = vector.shape_cast %397 : vector<1xf32> to vector<1x1xf32>
    %399 = vector.broadcast %7 : f32 to vector<1x1xf32>
    %400 = arith.addf %398, %399 : vector<1x1xf32>
    %cst_113 = arith.constant 0.000000e+00 : f32
    %401 = vector.broadcast %cst_113 : f32 to vector<1x1xf32>
    %402 = arith.subf %401, %400 : vector<1x1xf32>
    %403 = math.exp %402 : vector<1x1xf32>
    %cst_114 = arith.constant 1.000000e+00 : f32
    %404 = vector.broadcast %cst_114 : f32 to vector<1x1xf32>
    %405 = arith.addf %404, %403 : vector<1x1xf32>
    %406 = tpu.reciprocal %405 {approx = true} : vector<1x1xf32> -> vector<1x1xf32>
    %c1_115 = arith.constant 1 : index
    %c0_116 = arith.constant 0 : index
    %407 = vector.load %arg9[%c1_115, %c0_116] : memref<2x1xf32, #tpu.memory_space<vmem>>, vector<1x1xf32>
    tpu.vector_store %arg9[%c1_115, %c0_116], %406 {strides = array<i32>} : memref<2x1xf32, #tpu.memory_space<vmem>>, vector<1x1xf32>,
    return
  }
}

</mosaic_0001>

<llo_original>
// kernel: net_forward.1
$region0: #{net_forward.1}
  #allocation0 [shape = 'u32[]', space=smem, size = 0x4, offset = 0x4, fixed_abs, tag = 'smem constant byte address 0x4 - core index']
  #allocation1 [shape = 'u32[144,128]{1,0:T(1,128)}', space=vmem, size = 0x12000, scoped, tag = 'internal scratch']
  #allocation2 [shape = 'f32[1,1]{1,0:T(1,128)S(6)}', space=smem, size = 0x200, scoped, tag = 'scoped memory for net_forward.1']
  %s0 = inlined_call_operand.vmem [shape: f32[2,4,256], index: 0, kind: input, shape index: {}]
  %s1 = inlined_call_operand.vmem [shape: bf16[256,1024], index: 1, kind: input, shape index: {}]
  %s2 = inlined_call_operand.vmem [shape: bf16[64,256], index: 2, kind: input, shape index: {}]
  %s3 = inlined_call_operand.vmem [shape: bf16[8,64], index: 3, kind: input, shape index: {}]
  %s4 = inlined_call_operand.vmem [shape: bf16[16,128], index: 4, kind: input, shape index: {}]
  %s5 = inlined_call_operand.vmem [shape: f32[16,512], index: 5, kind: input, shape index: {}]
  %s6 = inlined_call_operand.vmem [shape: f32[1,32], index: 6, kind: input, shape index: {}]
  %s7 = inlined_call_operand.vmem [shape: f32[1,32], index: 7, kind: input, shape index: {}]
  %s8 = inlined_call_operand.<no memory space> [shape: f32[1,1], index: 8, kind: input, shape index: {}]
  %s9 = inlined_call_operand.vmem [shape: f32[2,1], index: 9, kind: output, shape index: {}]
  %s10 = sld [smem:[#allocation0]]
  $region46: #{net_forward.1} parent=0
    _
  %s12 = ssub.s32 1, %s10
  %s13 = scalar_select 0, %s12, %s10
  %14 = sst [smem:[#allocation2]] %s8
  // Predicated region
  $region2: #{net_forward.1} parent=0 // pred_check
    _
  $region3: #{net_forward.1} parent=0 // pred_check_branch
    %16 = sbr.rel (0) target = $region5
  $region4: #{net_forward.1} parent=0 // pred_region
    _
  $region5: #{net_forward.1} parent=0 // pred_fallthru
    _
  // Predicated region
  $region6: #{net_forward.1} parent=0 // pred_check
    _
  $region7: #{net_forward.1} parent=0 // pred_check_branch
    %18 = sbr.rel (0) target = $region9
  $region8: #{net_forward.1} parent=0 // pred_region
    _
  $region9: #{net_forward.1} parent=0 // pred_fallthru
    _
  // Predicated region
  $region10: #{net_forward.1} parent=0 // pred_check
    _
  $region11: #{net_forward.1} parent=0 // pred_check_branch
    %20 = sbr.rel (0) target = $region13
  $region12: #{net_forward.1} parent=0 // pred_region
    _
  $region13: #{net_forward.1} parent=0 // pred_fallthru
    _
  // Predicated region
  $region14: #{net_forward.1} parent=0 // pred_check
    _
  $region15: #{net_forward.1} parent=0 // pred_check_branch
    %22 = sbr.rel (0) target = $region17
  $region16: #{net_forward.1} parent=0 // pred_region
    _
  $region17: #{net_forward.1} parent=0 // pred_fallthru
    _
  // Predicated region
  $region18: #{net_forward.1} parent=0 // pred_check
    _
  $region19: #{net_forward.1} parent=0 // pred_check_branch
    %24 = sbr.rel (0) target = $region21
  $region20: #{net_forward.1} parent=0 // pred_region
    _
  $region21: #{net_forward.1} parent=0 // pred_fallthru
    _
  // Predicated region
  $region22: #{net_forward.1} parent=0 // pred_check
    _
  $region23: #{net_forward.1} parent=0 // pred_check_branch
    %26 = sbr.rel (0) target = $region25
  $region24: #{net_forward.1} parent=0 // pred_region
    _
  $region25: #{net_forward.1} parent=0 // pred_fallthru
    _
  // Predicated region
  $region26: #{net_forward.1} parent=0 // pred_check
    _
  $region27: #{net_forward.1} parent=0 // pred_check_branch
    %28 = sbr.rel (0) target = $region29
  $region28: #{net_forward.1} parent=0 // pred_region
    _
  $region29: #{net_forward.1} parent=0 // pred_fallthru
    _
  // Predicated region
  $region30: #{net_forward.1} parent=0 // pred_check
    _
  $region31: #{net_forward.1} parent=0 // pred_check_branch
    %30 = sbr.rel (0) target = $region33
  $region32: #{net_forward.1} parent=0 // pred_region
    _
  $region33: #{net_forward.1} parent=0 // pred_fallthru
    _
  // Predicated region
  $region34: #{net_forward.1} parent=0 // pred_check
    _
  $region35: #{net_forward.1} parent=0 // pred_check_branch
    %32 = sbr.rel (0) target = $region37
  $region36: #{net_forward.1} parent=0 // pred_region
    _
  $region37: #{net_forward.1} parent=0 // pred_fallthru
    _
  %v34 = vld [vmem:[%s1] sm:$0xff]
  %v35 = vld [vmem:[%s1 + $0x8] sm:$0xff]
  %v36 = vld [vmem:[%s1 + $0x10] sm:$0xff]
  %v37 = vld [vmem:[%s1 + $0x18] sm:$0xff]
  %v38 = vld [vmem:[%s1 + $0x20] sm:$0xff]
  %v39 = vld [vmem:[%s1 + $0x28] sm:$0xff]
  %v40 = vld [vmem:[%s1 + $0x30] sm:$0xff]
  %v41 = vld [vmem:[%s1 + $0x38] sm:$0xff]
  %v42 = vld [vmem:[%s1 + $0x40] sm:$0xff]
  %v43 = vld [vmem:[%s1 + $0x48] sm:$0xff]
  %v44 = vld [vmem:[%s1 + $0x50] sm:$0xff]
  %v45 = vld [vmem:[%s1 + $0x58] sm:$0xff]
  %v46 = vld [vmem:[%s1 + $0x60] sm:$0xff]
  %v47 = vld [vmem:[%s1 + $0x68] sm:$0xff]
  %v48 = vld [vmem:[%s1 + $0x70] sm:$0xff]
  %v49 = vld [vmem:[%s1 + $0x78] sm:$0xff]
  %v50 = vld [vmem:[%s1 + $0x80] sm:$0xff]
  %v51 = vld [vmem:[%s1 + $0x88] sm:$0xff]
  %v52 = vld [vmem:[%s1 + $0x90] sm:$0xff]
  %v53 = vld [vmem:[%s1 + $0x98] sm:$0xff]
  %v54 = vld [vmem:[%s1 + $0xa0] sm:$0xff]
  %v55 = vld [vmem:[%s1 + $0xa8] sm:$0xff]
  %v56 = vld [vmem:[%s1 + $0xb0] sm:$0xff]
  %v57 = vld [vmem:[%s1 + $0xb8] sm:$0xff]
  %v58 = vld [vmem:[%s1 + $0xc0] sm:$0xff]
  %v59 = vld [vmem:[%s1 + $0xc8] sm:$0xff]
  %v60 = vld [vmem:[%s1 + $0xd0] sm:$0xff]
  %v61 = vld [vmem:[%s1 + $0xd8] sm:$0xff]
  %v62 = vld [vmem:[%s1 + $0xe0] sm:$0xff]
  %v63 = vld [vmem:[%s1 + $0xe8] sm:$0xff]
  %v64 = vld [vmem:[%s1 + $0xf0] sm:$0xff]
  %v65 = vld [vmem:[%s1 + $0xf8] sm:$0xff]
  %v66 = vld [vmem:[%s1 + $0x100] sm:$0xff]
  %v67 = vld [vmem:[%s1 + $0x108] sm:$0xff]
  %v68 = vld [vmem:[%s1 + $0x110] sm:$0xff]
  %v69 = vld [vmem:[%s1 + $0x118] sm:$0xff]
  %v70 = vld [vmem:[%s1 + $0x120] sm:$0xff]
  %v71 = vld [vmem:[%s1 + $0x128] sm:$0xff]
  %v72 = vld [vmem:[%s1 + $0x130] sm:$0xff]
  %v73 = vld [vmem:[%s1 + $0x138] sm:$0xff]
  %v74 = vld [vmem:[%s1 + $0x140] sm:$0xff]
  %v75 = vld [vmem:[%s1 + $0x148] sm:$0xff]
  %v76 = vld [vmem:[%s1 + $0x150] sm:$0xff]
  %v77 = vld [vmem:[%s1 + $0x158] sm:$0xff]
  %v78 = vld [vmem:[%s1 + $0x160] sm:$0xff]
  %v79 = vld [vmem:[%s1 + $0x168] sm:$0xff]
  %v80 = vld [vmem:[%s1 + $0x170] sm:$0xff]
  %v81 = vld [vmem:[%s1 + $0x178] sm:$0xff]
  %v82 = vld [vmem:[%s1 + $0x180] sm:$0xff]
  %v83 = vld [vmem:[%s1 + $0x188] sm:$0xff]
  %v84 = vld [vmem:[%s1 + $0x190] sm:$0xff]
  %v85 = vld [vmem:[%s1 + $0x198] sm:$0xff]
  %v86 = vld [vmem:[%s1 + $0x1a0] sm:$0xff]
  %v87 = vld [vmem:[%s1 + $0x1a8] sm:$0xff]
  %v88 = vld [vmem:[%s1 + $0x1b0] sm:$0xff]
  %v89 = vld [vmem:[%s1 + $0x1b8] sm:$0xff]
  %v90 = vld [vmem:[%s1 + $0x1c0] sm:$0xff]
  %v91 = vld [vmem:[%s1 + $0x1c8] sm:$0xff]
  %v92 = vld [vmem:[%s1 + $0x1d0] sm:$0xff]
  %v93 = vld [vmem:[%s1 + $0x1d8] sm:$0xff]
  %v94 = vld [vmem:[%s1 + $0x1e0] sm:$0xff]
  %v95 = vld [vmem:[%s1 + $0x1e8] sm:$0xff]
  %v96 = vld [vmem:[%s1 + $0x1f0] sm:$0xff]
  %v97 = vld [vmem:[%s1 + $0x1f8] sm:$0xff]
  %v98 = vld [vmem:[%s1 + $0x200] sm:$0xff]
  %v99 = vld [vmem:[%s1 + $0x208] sm:$0xff]
  %v100 = vld [vmem:[%s1 + $0x210] sm:$0xff]
  %v101 = vld [vmem:[%s1 + $0x218] sm:$0xff]
  %v102 = vld [vmem:[%s1 + $0x220] sm:$0xff]
  %v103 = vld [vmem:[%s1 + $0x228] sm:$0xff]
  %v104 = vld [vmem:[%s1 + $0x230] sm:$0xff]
  %v105 = vld [vmem:[%s1 + $0x238] sm:$0xff]
  %v106 = vld [vmem:[%s1 + $0x240] sm:$0xff]
  %v107 = vld [vmem:[%s1 + $0x248] sm:$0xff]
  %v108 = vld [vmem:[%s1 + $0x250] sm:$0xff]
  %v109 = vld [vmem:[%s1 + $0x258] sm:$0xff]
  %v110 = vld [vmem:[%s1 + $0x260] sm:$0xff]
  %v111 = vld [vmem:[%s1 + $0x268] sm:$0xff]
  %v112 = vld [vmem:[%s1 + $0x270] sm:$0xff]
  %v113 = vld [vmem:[%s1 + $0x278] sm:$0xff]
  %v114 = vld [vmem:[%s1 + $0x280] sm:$0xff]
  %v115 = vld [vmem:[%s1 + $0x288] sm:$0xff]
  %v116 = vld [vmem:[%s1 + $0x290] sm:$0xff]
  %v117 = vld [vmem:[%s1 + $0x298] sm:$0xff]
  %v118 = vld [vmem:[%s1 + $0x2a0] sm:$0xff]
  %v119 = vld [vmem:[%s1 + $0x2a8] sm:$0xff]
  %v120 = vld [vmem:[%s1 + $0x2b0] sm:$0xff]
  %v121 = vld [vmem:[%s1 + $0x2b8] sm:$0xff]
  %v122 = vld [vmem:[%s1 + $0x2c0] sm:$0xff]
  %v123 = vld [vmem:[%s1 + $0x2c8] sm:$0xff]
  %v124 = vld [vmem:[%s1 + $0x2d0] sm:$0xff]
  %v125 = vld [vmem:[%s1 + $0x2d8] sm:$0xff]
  %v126 = vld [vmem:[%s1 + $0x2e0] sm:$0xff]
  %v127 = vld [vmem:[%s1 + $0x2e8] sm:$0xff]
  %v128 = vld [vmem:[%s1 + $0x2f0] sm:$0xff]
  %v129 = vld [vmem:[%s1 + $0x2f8] sm:$0xff]
  %v130 = vld [vmem:[%s1 + $0x300] sm:$0xff]
  %v131 = vld [vmem:[%s1 + $0x308] sm:$0xff]
  %v132 = vld [vmem:[%s1 + $0x310] sm:$0xff]
  %v133 = vld [vmem:[%s1 + $0x318] sm:$0xff]
  %v134 = vld [vmem:[%s1 + $0x320] sm:$0xff]
  %v135 = vld [vmem:[%s1 + $0x328] sm:$0xff]
  %v136 = vld [vmem:[%s1 + $0x330] sm:$0xff]
  %v137 = vld [vmem:[%s1 + $0x338] sm:$0xff]
  %v138 = vld [vmem:[%s1 + $0x340] sm:$0xff]
  %v139 = vld [vmem:[%s1 + $0x348] sm:$0xff]
  %v140 = vld [vmem:[%s1 + $0x350] sm:$0xff]
  %v141 = vld [vmem:[%s1 + $0x358] sm:$0xff]
  %v142 = vld [vmem:[%s1 + $0x360] sm:$0xff]
  %v143 = vld [vmem:[%s1 + $0x368] sm:$0xff]
  %v144 = vld [vmem:[%s1 + $0x370] sm:$0xff]
  %v145 = vld [vmem:[%s1 + $0x378] sm:$0xff]
  %v146 = vld [vmem:[%s1 + $0x380] sm:$0xff]
  %v147 = vld [vmem:[%s1 + $0x388] sm:$0xff]
  %v148 = vld [vmem:[%s1 + $0x390] sm:$0xff]
  %v149 = vld [vmem:[%s1 + $0x398] sm:$0xff]
  %v150 = vld [vmem:[%s1 + $0x3a0] sm:$0xff]
  %v151 = vld [vmem:[%s1 + $0x3a8] sm:$0xff]
  %v152 = vld [vmem:[%s1 + $0x3b0] sm:$0xff]
  %v153 = vld [vmem:[%s1 + $0x3b8] sm:$0xff]
  %v154 = vld [vmem:[%s1 + $0x3c0] sm:$0xff]
  %v155 = vld [vmem:[%s1 + $0x3c8] sm:$0xff]
  %v156 = vld [vmem:[%s1 + $0x3d0] sm:$0xff]
  %v157 = vld [vmem:[%s1 + $0x3d8] sm:$0xff]
  %v158 = vld [vmem:[%s1 + $0x3e0] sm:$0xff]
  %v159 = vld [vmem:[%s1 + $0x3e8] sm:$0xff]
  %v160 = vld [vmem:[%s1 + $0x3f0] sm:$0xff]
  %v161 = vld [vmem:[%s1 + $0x3f8] sm:$0xff]
  %v162 = vld [vmem:[%s2] sm:$0xff]
  %v163 = vld [vmem:[%s2 + $0x8] sm:$0xff]
  %v164 = vld [vmem:[%s2 + $0x10] sm:$0xff]
  %v165 = vld [vmem:[%s2 + $0x18] sm:$0xff]
  %v166 = vld [vmem:[%s2 + $0x20] sm:$0xff]
  %v167 = vld [vmem:[%s2 + $0x28] sm:$0xff]
  %v168 = vld [vmem:[%s2 + $0x30] sm:$0xff]
  %v169 = vld [vmem:[%s2 + $0x38] sm:$0xff]
  %v170 = vld [vmem:[%s3] sm:$0xf]
  %v171 = vld [vmem:[%s4] sm:$0xf]
  %v172 = vld [vmem:[%s4 + $0x4] sm:$0xf]
  %v173 = vld [vmem:[%s5] sm:$0xff]
  %v174 = vld [vmem:[%s5 + $0x8] sm:$0xff]
  %v175 = vld [vmem:[%s5 + $0x10] sm:$0xff]
  %v176 = vld [vmem:[%s5 + $0x18] sm:$0xff]
  %v177 = vld [vmem:[%s5 + $0x20] sm:$0xff]
  %v178 = vld [vmem:[%s5 + $0x28] sm:$0xff]
  %v179 = vld [vmem:[%s5 + $0x30] sm:$0xff]
  %v180 = vld [vmem:[%s5 + $0x38] sm:$0xff]
  %v181 = vld [vmem:[%s6] sm:$0x1]
  %v182 = vld [vmem:[%s7] sm:$0x1]
  %s183 = sld [smem:[#allocation2]]
  %v184 = vld [vmem:[%s0] sm:$0xff]
  %v186 = vcombine.high %v184, %v184
  %v188 = vpack.c.bf16 %v184, %v184
  %v189 = vpack.c.bf16 %v186, %v186
  %v318 = vunpack.c.l.b16 %v34
  %v319 = vunpack.c.h.b16 %v34
  %v320 = vunpack.c.l.b16 %v35
  %v321 = vunpack.c.h.b16 %v35
  %v322 = vunpack.c.l.b16 %v36
  %v323 = vunpack.c.h.b16 %v36
  %v324 = vunpack.c.l.b16 %v37
  %v325 = vunpack.c.h.b16 %v37
  %v326 = vunpack.c.l.b16 %v38
  %v327 = vunpack.c.h.b16 %v38
  %v328 = vunpack.c.l.b16 %v39
  %v329 = vunpack.c.h.b16 %v39
  %v330 = vunpack.c.l.b16 %v40
  %v331 = vunpack.c.h.b16 %v40
  %v332 = vunpack.c.l.b16 %v41
  %v333 = vunpack.c.h.b16 %v41
  %v334 = vunpack.c.l.b16 %v42
  %v335 = vunpack.c.h.b16 %v42
  %v336 = vunpack.c.l.b16 %v43
  %v337 = vunpack.c.h.b16 %v43
  %v338 = vunpack.c.l.b16 %v44
  %v339 = vunpack.c.h.b16 %v44
  %v340 = vunpack.c.l.b16 %v45
  %v341 = vunpack.c.h.b16 %v45
  %v342 = vunpack.c.l.b16 %v46
  %v343 = vunpack.c.h.b16 %v46
  %v344 = vunpack.c.l.b16 %v47
  %v345 = vunpack.c.h.b16 %v47
  %v346 = vunpack.c.l.b16 %v48
  %v347 = vunpack.c.h.b16 %v48
  %v348 = vunpack.c.l.b16 %v49
  %v349 = vunpack.c.h.b16 %v49
  %v350 = vunpack.c.l.b16 %v50
  %v351 = vunpack.c.h.b16 %v50
  %v352 = vunpack.c.l.b16 %v51
  %v353 = vunpack.c.h.b16 %v51
  %v354 = vunpack.c.l.b16 %v52
  %v355 = vunpack.c.h.b16 %v52
  %v356 = vunpack.c.l.b16 %v53
  %v357 = vunpack.c.h.b16 %v53
  %v358 = vunpack.c.l.b16 %v54
  %v359 = vunpack.c.h.b16 %v54
  %v360 = vunpack.c.l.b16 %v55
  %v361 = vunpack.c.h.b16 %v55
  %v362 = vunpack.c.l.b16 %v56
  %v363 = vunpack.c.h.b16 %v56
  %v364 = vunpack.c.l.b16 %v57
  %v365 = vunpack.c.h.b16 %v57
  %v366 = vunpack.c.l.b16 %v58
  %v367 = vunpack.c.h.b16 %v58
  %v368 = vunpack.c.l.b16 %v59
  %v369 = vunpack.c.h.b16 %v59
  %v370 = vunpack.c.l.b16 %v60
  %v371 = vunpack.c.h.b16 %v60
  %v372 = vunpack.c.l.b16 %v61
  %v373 = vunpack.c.h.b16 %v61
  %v374 = vunpack.c.l.b16 %v62
  %v375 = vunpack.c.h.b16 %v62
  %v376 = vunpack.c.l.b16 %v63
  %v377 = vunpack.c.h.b16 %v63
  %v378 = vunpack.c.l.b16 %v64
  %v379 = vunpack.c.h.b16 %v64
  %v380 = vunpack.c.l.b16 %v65
  %v381 = vunpack.c.h.b16 %v65
  %v382 = vunpack.c.l.b16 %v66
  %v383 = vunpack.c.h.b16 %v66
  %v384 = vunpack.c.l.b16 %v67
  %v385 = vunpack.c.h.b16 %v67
  %v386 = vunpack.c.l.b16 %v68
  %v387 = vunpack.c.h.b16 %v68
  %v388 = vunpack.c.l.b16 %v69
  %v389 = vunpack.c.h.b16 %v69
  %v390 = vunpack.c.l.b16 %v70
  %v391 = vunpack.c.h.b16 %v70
  %v392 = vunpack.c.l.b16 %v71
  %v393 = vunpack.c.h.b16 %v71
  %v394 = vunpack.c.l.b16 %v72
  %v395 = vunpack.c.h.b16 %v72
  %v396 = vunpack.c.l.b16 %v73
  %v397 = vunpack.c.h.b16 %v73
  %v398 = vunpack.c.l.b16 %v74
  %v399 = vunpack.c.h.b16 %v74
  %v400 = vunpack.c.l.b16 %v75
  %v401 = vunpack.c.h.b16 %v75
  %v402 = vunpack.c.l.b16 %v76
  %v403 = vunpack.c.h.b16 %v76
  %v404 = vunpack.c.l.b16 %v77
  %v405 = vunpack.c.h.b16 %v77
  %v406 = vunpack.c.l.b16 %v78
  %v407 = vunpack.c.h.b16 %v78
  %v408 = vunpack.c.l.b16 %v79
  %v409 = vunpack.c.h.b16 %v79
  %v410 = vunpack.c.l.b16 %v80
  %v411 = vunpack.c.h.b16 %v80
  %v412 = vunpack.c.l.b16 %v81
  %v413 = vunpack.c.h.b16 %v81
  %v414 = vunpack.c.l.b16 %v82
  %v415 = vunpack.c.h.b16 %v82
  %v416 = vunpack.c.l.b16 %v83
  %v417 = vunpack.c.h.b16 %v83
  %v418 = vunpack.c.l.b16 %v84
  %v419 = vunpack.c.h.b16 %v84
  %v420 = vunpack.c.l.b16 %v85
  %v421 = vunpack.c.h.b16 %v85
  %v422 = vunpack.c.l.b16 %v86
  %v423 = vunpack.c.h.b16 %v86
  %v424 = vunpack.c.l.b16 %v87
  %v425 = vunpack.c.h.b16 %v87
  %v426 = vunpack.c.l.b16 %v88
  %v427 = vunpack.c.h.b16 %v88
  %v428 = vunpack.c.l.b16 %v89
  %v429 = vunpack.c.h.b16 %v89
  %v430 = vunpack.c.l.b16 %v90
  %v431 = vunpack.c.h.b16 %v90
  %v432 = vunpack.c.l.b16 %v91
  %v433 = vunpack.c.h.b16 %v91
  %v434 = vunpack.c.l.b16 %v92
  %v435 = vunpack.c.h.b16 %v92
  %v436 = vunpack.c.l.b16 %v93
  %v437 = vunpack.c.h.b16 %v93
  %v438 = vunpack.c.l.b16 %v94
  %v439 = vunpack.c.h.b16 %v94
  %v440 = vunpack.c.l.b16 %v95
  %v441 = vunpack.c.h.b16 %v95
  %v442 = vunpack.c.l.b16 %v96
  %v443 = vunpack.c.h.b16 %v96
  %v444 = vunpack.c.l.b16 %v97
  %v445 = vunpack.c.h.b16 %v97
  %v446 = vunpack.c.l.b16 %v98
  %v447 = vunpack.c.h.b16 %v98
  %v448 = vunpack.c.l.b16 %v99
  %v449 = vunpack.c.h.b16 %v99
  %v450 = vunpack.c.l.b16 %v100
  %v451 = vunpack.c.h.b16 %v100
  %v452 = vunpack.c.l.b16 %v101
  %v453 = vunpack.c.h.b16 %v101
  %v454 = vunpack.c.l.b16 %v102
  %v455 = vunpack.c.h.b16 %v102
  %v456 = vunpack.c.l.b16 %v103
  %v457 = vunpack.c.h.b16 %v103
  %v458 = vunpack.c.l.b16 %v104
  %v459 = vunpack.c.h.b16 %v104
  %v460 = vunpack.c.l.b16 %v105
  %v461 = vunpack.c.h.b16 %v105
  %v462 = vunpack.c.l.b16 %v106
  %v463 = vunpack.c.h.b16 %v106
  %v464 = vunpack.c.l.b16 %v107
  %v465 = vunpack.c.h.b16 %v107
  %v466 = vunpack.c.l.b16 %v108
  %v467 = vunpack.c.h.b16 %v108
  %v468 = vunpack.c.l.b16 %v109
  %v469 = vunpack.c.h.b16 %v109
  %v470 = vunpack.c.l.b16 %v110
  %v471 = vunpack.c.h.b16 %v110
  %v472 = vunpack.c.l.b16 %v111
  %v473 = vunpack.c.h.b16 %v111
  %v474 = vunpack.c.l.b16 %v112
  %v475 = vunpack.c.h.b16 %v112
  %v476 = vunpack.c.l.b16 %v113
  %v477 = vunpack.c.h.b16 %v113
  %v478 = vunpack.c.l.b16 %v114
  %v479 = vunpack.c.h.b16 %v114
  %v480 = vunpack.c.l.b16 %v115
  %v481 = vunpack.c.h.b16 %v115
  %v482 = vunpack.c.l.b16 %v116
  %v483 = vunpack.c.h.b16 %v116
  %v484 = vunpack.c.l.b16 %v117
  %v485 = vunpack.c.h.b16 %v117
  %v486 = vunpack.c.l.b16 %v118
  %v487 = vunpack.c.h.b16 %v118
  %v488 = vunpack.c.l.b16 %v119
  %v489 = vunpack.c.h.b16 %v119
  %v490 = vunpack.c.l.b16 %v120
  %v491 = vunpack.c.h.b16 %v120
  %v492 = vunpack.c.l.b16 %v121
  %v493 = vunpack.c.h.b16 %v121
  %v494 = vunpack.c.l.b16 %v122
  %v495 = vunpack.c.h.b16 %v122
  %v496 = vunpack.c.l.b16 %v123
  %v497 = vunpack.c.h.b16 %v123
  %v498 = vunpack.c.l.b16 %v124
  %v499 = vunpack.c.h.b16 %v124
  %v500 = vunpack.c.l.b16 %v125
  %v501 = vunpack.c.h.b16 %v125
  %v502 = vunpack.c.l.b16 %v126
  %v503 = vunpack.c.h.b16 %v126
  %v504 = vunpack.c.l.b16 %v127
  %v505 = vunpack.c.h.b16 %v127
  %v506 = vunpack.c.l.b16 %v128
  %v507 = vunpack.c.h.b16 %v128
  %v508 = vunpack.c.l.b16 %v129
  %v509 = vunpack.c.h.b16 %v129
  %v510 = vunpack.c.l.b16 %v130
  %v511 = vunpack.c.h.b16 %v130
  %v512 = vunpack.c.l.b16 %v131
  %v513 = vunpack.c.h.b16 %v131
  %v514 = vunpack.c.l.b16 %v132
  %v515 = vunpack.c.h.b16 %v132
  %v516 = vunpack.c.l.b16 %v133
  %v517 = vunpack.c.h.b16 %v133
  %v518 = vunpack.c.l.b16 %v134
  %v519 = vunpack.c.h.b16 %v134
  %v520 = vunpack.c.l.b16 %v135
  %v521 = vunpack.c.h.b16 %v135
  %v522 = vunpack.c.l.b16 %v136
  %v523 = vunpack.c.h.b16 %v136
  %v524 = vunpack.c.l.b16 %v137
  %v525 = vunpack.c.h.b16 %v137
  %v526 = vunpack.c.l.b16 %v138
  %v527 = vunpack.c.h.b16 %v138
  %v528 = vunpack.c.l.b16 %v139
  %v529 = vunpack.c.h.b16 %v139
  %v530 = vunpack.c.l.b16 %v140
  %v531 = vunpack.c.h.b16 %v140
  %v532 = vunpack.c.l.b16 %v141
  %v533 = vunpack.c.h.b16 %v141
  %v534 = vunpack.c.l.b16 %v142
  %v535 = vunpack.c.h.b16 %v142
  %v536 = vunpack.c.l.b16 %v143
  %v537 = vunpack.c.h.b16 %v143
  %v538 = vunpack.c.l.b16 %v144
  %v539 = vunpack.c.h.b16 %v144
  %v540 = vunpack.c.l.b16 %v145
  %v541 = vunpack.c.h.b16 %v145
  %v542 = vunpack.c.l.b16 %v146
  %v543 = vunpack.c.h.b16 %v146
  %v544 = vunpack.c.l.b16 %v147
  %v545 = vunpack.c.h.b16 %v147
  %v546 = vunpack.c.l.b16 %v148
  %v547 = vunpack.c.h.b16 %v148
  %v548 = vunpack.c.l.b16 %v149
  %v549 = vunpack.c.h.b16 %v149
  %v550 = vunpack.c.l.b16 %v150
  %v551 = vunpack.c.h.b16 %v150
  %v552 = vunpack.c.l.b16 %v151
  %v553 = vunpack.c.h.b16 %v151
  %v554 = vunpack.c.l.b16 %v152
  %v555 = vunpack.c.h.b16 %v152
  %v556 = vunpack.c.l.b16 %v153
  %v557 = vunpack.c.h.b16 %v153
  %v558 = vunpack.c.l.b16 %v154
  %v559 = vunpack.c.h.b16 %v154
  %v560 = vunpack.c.l.b16 %v155
  %v561 = vunpack.c.h.b16 %v155
  %v562 = vunpack.c.l.b16 %v156
  %v563 = vunpack.c.h.b16 %v156
  %v564 = vunpack.c.l.b16 %v157
  %v565 = vunpack.c.h.b16 %v157
  %v566 = vunpack.c.l.b16 %v158
  %v567 = vunpack.c.h.b16 %v158
  %v568 = vunpack.c.l.b16 %v159
  %v569 = vunpack.c.h.b16 %v159
  %v570 = vunpack.c.l.b16 %v160
  %v571 = vunpack.c.h.b16 %v160
  %v572 = vunpack.c.l.b16 %v161
  %v573 = vunpack.c.h.b16 %v161
  %v574 = vpack.c.b16 %v326, %v318
  %v575 = vpack.c.b16 %v327, %v319
  %v576 = vpack.c.b16 %v328, %v320
  %v577 = vpack.c.b16 %v329, %v321
  %v578 = vpack.c.b16 %v330, %v322
  %v579 = vpack.c.b16 %v331, %v323
  %v580 = vpack.c.b16 %v332, %v324
  %v581 = vpack.c.b16 %v333, %v325
  %v582 = vpack.c.b16 %v342, %v334
  %v583 = vpack.c.b16 %v343, %v335
  %v584 = vpack.c.b16 %v344, %v336
  %v585 = vpack.c.b16 %v345, %v337
  %v586 = vpack.c.b16 %v346, %v338
  %v587 = vpack.c.b16 %v347, %v339
  %v588 = vpack.c.b16 %v348, %v340
  %v589 = vpack.c.b16 %v349, %v341
  %v590 = vpack.c.b16 %v358, %v350
  %v591 = vpack.c.b16 %v359, %v351
  %v592 = vpack.c.b16 %v360, %v352
  %v593 = vpack.c.b16 %v361, %v353
  %v594 = vpack.c.b16 %v362, %v354
  %v595 = vpack.c.b16 %v363, %v355
  %v596 = vpack.c.b16 %v364, %v356
  %v597 = vpack.c.b16 %v365, %v357
  %v598 = vpack.c.b16 %v374, %v366
  %v599 = vpack.c.b16 %v375, %v367
  %v600 = vpack.c.b16 %v376, %v368
  %v601 = vpack.c.b16 %v377, %v369
  %v602 = vpack.c.b16 %v378, %v370
  %v603 = vpack.c.b16 %v379, %v371
  %v604 = vpack.c.b16 %v380, %v372
  %v605 = vpack.c.b16 %v381, %v373
  %v606 = vpack.c.b16 %v390, %v382
  %v607 = vpack.c.b16 %v391, %v383
  %v608 = vpack.c.b16 %v392, %v384
  %v609 = vpack.c.b16 %v393, %v385
  %v610 = vpack.c.b16 %v394, %v386
  %v611 = vpack.c.b16 %v395, %v387
  %v612 = vpack.c.b16 %v396, %v388
  %v613 = vpack.c.b16 %v397, %v389
  %v614 = vpack.c.b16 %v406, %v398
  %v615 = vpack.c.b16 %v407, %v399
  %v616 = vpack.c.b16 %v408, %v400
  %v617 = vpack.c.b16 %v409, %v401
  %v618 = vpack.c.b16 %v410, %v402
  %v619 = vpack.c.b16 %v411, %v403
  %v620 = vpack.c.b16 %v412, %v404
  %v621 = vpack.c.b16 %v413, %v405
  %v622 = vpack.c.b16 %v422, %v414
  %v623 = vpack.c.b16 %v423, %v415
  %v624 = vpack.c.b16 %v424, %v416
  %v625 = vpack.c.b16 %v425, %v417
  %v626 = vpack.c.b16 %v426, %v418
  %v627 = vpack.c.b16 %v427, %v419
  %v628 = vpack.c.b16 %v428, %v420
  %v629 = vpack.c.b16 %v429, %v421
  %v630 = vpack.c.b16 %v438, %v430
  %v631 = vpack.c.b16 %v439, %v431
  %v632 = vpack.c.b16 %v440, %v432
  %v633 = vpack.c.b16 %v441, %v433
  %v634 = vpack.c.b16 %v442, %v434
  %v635 = vpack.c.b16 %v443, %v435
  %v636 = vpack.c.b16 %v444, %v436
  %v637 = vpack.c.b16 %v445, %v437
  %v638 = vpack.c.b16 %v454, %v446
  %v639 = vpack.c.b16 %v455, %v447
  %v640 = vpack.c.b16 %v456, %v448
  %v641 = vpack.c.b16 %v457, %v449
  %v642 = vpack.c.b16 %v458, %v450
  %v643 = vpack.c.b16 %v459, %v451
  %v644 = vpack.c.b16 %v460, %v452
  %v645 = vpack.c.b16 %v461, %v453
  %v646 = vpack.c.b16 %v470, %v462
  %v647 = vpack.c.b16 %v471, %v463
  %v648 = vpack.c.b16 %v472, %v464
  %v649 = vpack.c.b16 %v473, %v465
  %v650 = vpack.c.b16 %v474, %v466
  %v651 = vpack.c.b16 %v475, %v467
  %v652 = vpack.c.b16 %v476, %v468
  %v653 = vpack.c.b16 %v477, %v469
  %v654 = vpack.c.b16 %v486, %v478
  %v655 = vpack.c.b16 %v487, %v479
  %v656 = vpack.c.b16 %v488, %v480
  %v657 = vpack.c.b16 %v489, %v481
  %v658 = vpack.c.b16 %v490, %v482
  %v659 = vpack.c.b16 %v491, %v483
  %v660 = vpack.c.b16 %v492, %v484
  %v661 = vpack.c.b16 %v493, %v485
  %v662 = vpack.c.b16 %v502, %v494
  %v663 = vpack.c.b16 %v503, %v495
  %v664 = vpack.c.b16 %v504, %v496
  %v665 = vpack.c.b16 %v505, %v497
  %v666 = vpack.c.b16 %v506, %v498
  %v667 = vpack.c.b16 %v507, %v499
  %v668 = vpack.c.b16 %v508, %v500
  %v669 = vpack.c.b16 %v509, %v501
  %v670 = vpack.c.b16 %v518, %v510
  %v671 = vpack.c.b16 %v519, %v511
  %v672 = vpack.c.b16 %v520, %v512
  %v673 = vpack.c.b16 %v521, %v513
  %v674 = vpack.c.b16 %v522, %v514
  %v675 = vpack.c.b16 %v523, %v515
  %v676 = vpack.c.b16 %v524, %v516
  %v677 = vpack.c.b16 %v525, %v517
  %v678 = vpack.c.b16 %v534, %v526
  %v679 = vpack.c.b16 %v535, %v527
  %v680 = vpack.c.b16 %v536, %v528
  %v681 = vpack.c.b16 %v537, %v529
  %v682 = vpack.c.b16 %v538, %v530
  %v683 = vpack.c.b16 %v539, %v531
  %v684 = vpack.c.b16 %v540, %v532
  %v685 = vpack.c.b16 %v541, %v533
  %v686 = vpack.c.b16 %v550, %v542
  %v687 = vpack.c.b16 %v551, %v543
  %v688 = vpack.c.b16 %v552, %v544
  %v689 = vpack.c.b16 %v553, %v545
  %v690 = vpack.c.b16 %v554, %v546
  %v691 = vpack.c.b16 %v555, %v547
  %v692 = vpack.c.b16 %v556, %v548
  %v693 = vpack.c.b16 %v557, %v549
  %v694 = vpack.c.b16 %v566, %v558
  %v695 = vpack.c.b16 %v567, %v559
  %v696 = vpack.c.b16 %v568, %v560
  %v697 = vpack.c.b16 %v569, %v561
  %v698 = vpack.c.b16 %v570, %v562
  %v699 = vpack.c.b16 %v571, %v563
  %v700 = vpack.c.b16 %v572, %v564
  %v701 = vpack.c.b16 %v573, %v565
  %830 = vmatprep.subr.bf16.mxu0 %v575
  %831 = vmatpush1.bf16.msra.mxu0 %v574
  %832 = vmatprep.subr.bf16.mxu0 %v583
  %833 = vmatpush1.bf16.msra.mxu0 %v582
  %834 = vmatprep.subr.bf16.mxu0 %v591
  %835 = vmatpush1.bf16.msra.mxu0 %v590
  %836 = vmatprep.subr.bf16.mxu0 %v599
  %837 = vmatpush1.bf16.msra.mxu0 %v598
  %838 = vmatprep.subr.bf16.mxu0 %v607
  %839 = vmatpush1.bf16.msra.mxu0 %v606
  %840 = vmatprep.subr.bf16.mxu0 %v615
  %841 = vmatpush1.bf16.msra.mxu0 %v614
  %842 = vmatprep.subr.bf16.mxu0 %v623
  %843 = vmatpush1.bf16.msra.mxu0 %v622
  %844 = vmatprep.subr.bf16.mxu0 %v631
  %845 = vmatpush1.bf16.msra.mxu0 %v630
  %846 = vmatprep.subr.bf16.mxu0 %v639
  %847 = vmatpush1.bf16.msra.mxu0 %v638
  %848 = vmatprep.subr.bf16.mxu0 %v647
  %849 = vmatpush1.bf16.msra.mxu0 %v646
  %850 = vmatprep.subr.bf16.mxu0 %v655
  %851 = vmatpush1.bf16.msra.mxu0 %v654
  %852 = vmatprep.subr.bf16.mxu0 %v663
  %853 = vmatpush1.bf16.msra.mxu0 %v662
  %854 = vmatprep.subr.bf16.mxu0 %v671
  %855 = vmatpush1.bf16.msra.mxu0 %v670
  %856 = vmatprep.subr.bf16.mxu0 %v679
  %857 = vmatpush1.bf16.msra.mxu0 %v678
  %858 = vmatprep.subr.bf16.mxu0 %v687
  %859 = vmatpush1.bf16.msra.mxu0 %v686
  %860 = vmatprep.subr.bf16.mxu0 %v695
  %861 = vmatpush1.bf16.msra.mxu0 %v694
  %862 = vmatprep.mubr.bf16.mxu0 %v189
  %863 = vmatmul.mubr.bf16.gmra.mrb[0].mxu0 %v188
  %v864 = vpop.f32.mrb[0].mxu0
  %v865 = vadd.f32 0.0, %v864
  %v866 = vpop.f32.mrb[0].mxu0
  %v867 = vadd.f32 0.0, %v866
  %v868 = vpop.f32.mrb[0].mxu0
  %v869 = vpop.f32.mrb[0].mxu0
  %870 = vdwg.mxu0
  %871 = vmatprep.subr.bf16.mxu0 %v577
  %872 = vmatpush1.bf16.msra.mxu0 %v576
  %873 = vmatprep.subr.bf16.mxu0 %v585
  %874 = vmatpush1.bf16.msra.mxu0 %v584
  %875 = vmatprep.subr.bf16.mxu0 %v593
  %876 = vmatpush1.bf16.msra.mxu0 %v592
  %877 = vmatprep.subr.bf16.mxu0 %v601
  %878 = vmatpush1.bf16.msra.mxu0 %v600
  %879 = vmatprep.subr.bf16.mxu0 %v609
  %880 = vmatpush1.bf16.msra.mxu0 %v608
  %881 = vmatprep.subr.bf16.mxu0 %v617
  %882 = vmatpush1.bf16.msra.mxu0 %v616
  %883 = vmatprep.subr.bf16.mxu0 %v625
  %884 = vmatpush1.bf16.msra.mxu0 %v624
  %885 = vmatprep.subr.bf16.mxu0 %v633
  %886 = vmatpush1.bf16.msra.mxu0 %v632
  %887 = vmatprep.subr.bf16.mxu0 %v641
  %888 = vmatpush1.bf16.msra.mxu0 %v640
  %889 = vmatprep.subr.bf16.mxu0 %v649
  %890 = vmatpush1.bf16.msra.mxu0 %v648
  %891 = vmatprep.subr.bf16.mxu0 %v657
  %892 = vmatpush1.bf16.msra.mxu0 %v656
  %893 = vmatprep.subr.bf16.mxu0 %v665
  %894 = vmatpush1.bf16.msra.mxu0 %v664
  %895 = vmatprep.subr.bf16.mxu0 %v673
  %896 = vmatpush1.bf16.msra.mxu0 %v672
  %897 = vmatprep.subr.bf16.mxu0 %v681
  %898 = vmatpush1.bf16.msra.mxu0 %v680
  %899 = vmatprep.subr.bf16.mxu0 %v689
  %900 = vmatpush1.bf16.msra.mxu0 %v688
  %901 = vmatprep.subr.bf16.mxu0 %v697
  %902 = vmatpush1.bf16.msra.mxu0 %v696
  %903 = vmatprep.mubr.bf16.mxu0 %v189
  %904 = vmatmul.mubr.bf16.gmra.mrb[0].mxu0 %v188
  %v905 = vpop.f32.mrb[0].mxu0
  %v906 = vadd.f32 0.0, %v905
  %v907 = vpop.f32.mrb[0].mxu0
  %v908 = vadd.f32 0.0, %v907
  %v909 = vpop.f32.mrb[0].mxu0
  %v910 = vpop.f32.mrb[0].mxu0
  %911 = vdwg.mxu0
  %912 = vmatprep.subr.bf16.mxu0 %v579
  %913 = vmatpush1.bf16.msra.mxu0 %v578
  %914 = vmatprep.subr.bf16.mxu0 %v587
  %915 = vmatpush1.bf16.msra.mxu0 %v586
  %916 = vmatprep.subr.bf16.mxu0 %v595
  %917 = vmatpush1.bf16.msra.mxu0 %v594
  %918 = vmatprep.subr.bf16.mxu0 %v603
  %919 = vmatpush1.bf16.msra.mxu0 %v602
  %920 = vmatprep.subr.bf16.mxu0 %v611
  %921 = vmatpush1.bf16.msra.mxu0 %v610
  %922 = vmatprep.subr.bf16.mxu0 %v619
  %923 = vmatpush1.bf16.msra.mxu0 %v618
  %924 = vmatprep.subr.bf16.mxu0 %v627
  %925 = vmatpush1.bf16.msra.mxu0 %v626
  %926 = vmatprep.subr.bf16.mxu0 %v635
  %927 = vmatpush1.bf16.msra.mxu0 %v634
  %928 = vmatprep.subr.bf16.mxu0 %v643
  %929 = vmatpush1.bf16.msra.mxu0 %v642
  %930 = vmatprep.subr.bf16.mxu0 %v651
  %931 = vmatpush1.bf16.msra.mxu0 %v650
  %932 = vmatprep.subr.bf16.mxu0 %v659
  %933 = vmatpush1.bf16.msra.mxu0 %v658
  %934 = vmatprep.subr.bf16.mxu0 %v667
  %935 = vmatpush1.bf16.msra.mxu0 %v666
  %936 = vmatprep.subr.bf16.mxu0 %v675
  %937 = vmatpush1.bf16.msra.mxu0 %v674
  %938 = vmatprep.subr.bf16.mxu0 %v683
  %939 = vmatpush1.bf16.msra.mxu0 %v682
  %940 = vmatprep.subr.bf16.mxu0 %v691
  %941 = vmatpush1.bf16.msra.mxu0 %v690
  %942 = vmatprep.subr.bf16.mxu0 %v699
  %943 = vmatpush1.bf16.msra.mxu0 %v698
  %944 = vmatprep.mubr.bf16.mxu0 %v189
  %945 = vmatmul.mubr.bf16.gmra.mrb[0].mxu0 %v188
  %v946 = vpop.f32.mrb[0].mxu0
  %v947 = vadd.f32 0.0, %v946
  %v948 = vpop.f32.mrb[0].mxu0
  %v949 = vadd.f32 0.0, %v948
  %v950 = vpop.f32.mrb[0].mxu0
  %v951 = vpop.f32.mrb[0].mxu0
  %952 = vdwg.mxu0
  %953 = vmatprep.subr.bf16.mxu0 %v581
  %954 = vmatpush1.bf16.msra.mxu0 %v580
  %955 = vmatprep.subr.bf16.mxu0 %v589
  %956 = vmatpush1.bf16.msra.mxu0 %v588
  %957 = vmatprep.subr.bf16.mxu0 %v597
  %958 = vmatpush1.bf16.msra.mxu0 %v596
  %959 = vmatprep.subr.bf16.mxu0 %v605
  %960 = vmatpush1.bf16.msra.mxu0 %v604
  %961 = vmatprep.subr.bf16.mxu0 %v613
  %962 = vmatpush1.bf16.msra.mxu0 %v612
  %963 = vmatprep.subr.bf16.mxu0 %v621
  %964 = vmatpush1.bf16.msra.mxu0 %v620
  %965 = vmatprep.subr.bf16.mxu0 %v629
  %966 = vmatpush1.bf16.msra.mxu0 %v628
  %967 = vmatprep.subr.bf16.mxu0 %v637
  %968 = vmatpush1.bf16.msra.mxu0 %v636
  %969 = vmatprep.subr.bf16.mxu0 %v645
  %970 = vmatpush1.bf16.msra.mxu0 %v644
  %971 = vmatprep.subr.bf16.mxu0 %v653
  %972 = vmatpush1.bf16.msra.mxu0 %v652
  %973 = vmatprep.subr.bf16.mxu0 %v661
  %974 = vmatpush1.bf16.msra.mxu0 %v660
  %975 = vmatprep.subr.bf16.mxu0 %v669
  %976 = vmatpush1.bf16.msra.mxu0 %v668
  %977 = vmatprep.subr.bf16.mxu0 %v677
  %978 = vmatpush1.bf16.msra.mxu0 %v676
  %979 = vmatprep.subr.bf16.mxu0 %v685
  %980 = vmatpush1.bf16.msra.mxu0 %v684
  %981 = vmatprep.subr.bf16.mxu0 %v693
  %982 = vmatpush1.bf16.msra.mxu0 %v692
  %983 = vmatprep.subr.bf16.mxu0 %v701
  %984 = vmatpush1.bf16.msra.mxu0 %v700
  %985 = vmatprep.mubr.bf16.mxu0 %v189
  %986 = vmatmul.mubr.bf16.gmra.mrb[0].mxu0 %v188
  %v987 = vpop.f32.mrb[0].mxu0
  %v988 = vadd.f32 0.0, %v987
  %v989 = vpop.f32.mrb[0].mxu0
  %v990 = vadd.f32 0.0, %v989
  %v991 = vpop.f32.mrb[0].mxu0
  %v992 = vpop.f32.mrb[0].mxu0
  %993 = vdwg.mxu0
  %v994 = vpack.c.bf16 %v865, %v865
  %v995 = vpack.c.bf16 %v867, %v867
  %v996 = vpack.c.bf16 %v906, %v906
  %v997 = vpack.c.bf16 %v908, %v908
  %v998 = vpack.c.bf16 %v947, %v947
  %v999 = vpack.c.bf16 %v949, %v949
  %v1000 = vpack.c.bf16 %v988, %v988
  %v1001 = vpack.c.bf16 %v990, %v990
  %v1003 = vunpack.c.l.b16 %v170
  %v1004 = vpack.c.b16 %v1003, %v1003
  %1005 = vrot.lane.b32.xlu0 %v1004, 124
  %v1006 = vpop.permute.xlu0 %1005
  %1008 = vrot.lane.b32.xlu0 %v994, 64
  %v1009 = vpop.permute.xlu0 %1008
  %vm1010 = vcmask 31744
  %v1012 = vsel %vm1010, %v1006, 0
  %vm1014 = vcmask 1041408
  %v1016 = vsel %vm1014, %v1009, 0
  %1018 = vmatprep.subr.bf16.mxu0 0
  %1019 = vmatpush1.bf16.msra.mxu0 %v1016
  %1020 = vmatprep.subr.bf16.mxu0 0
  %1021 = vmatpush1.bf16.msra.mxu0 0
  %1022 = vmatprep.subr.bf16.mxu0 0
  %1023 = vmatpush1.bf16.msra.mxu0 0
  %1024 = vmatprep.subr.bf16.mxu0 0
  %1025 = vmatpush1.bf16.msra.mxu0 0
  %1026 = vmatprep.subr.bf16.mxu0 0
  %1027 = vmatpush1.bf16.msra.mxu0 0
  %1028 = vmatprep.subr.bf16.mxu0 0
  %1029 = vmatpush1.bf16.msra.mxu0 0
  %1030 = vmatprep.subr.bf16.mxu0 0
  %1031 = vmatpush1.bf16.msra.mxu0 0
  %1032 = vmatprep.subr.bf16.mxu0 0
  %1033 = vmatpush1.bf16.msra.mxu0 0
  %1034 = vmatprep.subr.bf16.mxu0 0
  %1035 = vmatpush1.bf16.msra.mxu0 0
  %1036 = vmatprep.subr.bf16.mxu0 0
  %1037 = vmatpush1.bf16.msra.mxu0 0
  %1038 = vmatprep.subr.bf16.mxu0 0
  %1039 = vmatpush1.bf16.msra.mxu0 0
  %1040 = vmatprep.subr.bf16.mxu0 0
  %1041 = vmatpush1.bf16.msra.mxu0 0
  %1042 = vmatprep.subr.bf16.mxu0 0
  %1043 = vmatpush1.bf16.msra.mxu0 0
  %1044 = vmatprep.subr.bf16.mxu0 0
  %1045 = vmatpush1.bf16.msra.mxu0 0
  %1046 = vmatprep.subr.bf16.mxu0 0
  %1047 = vmatpush1.bf16.msra.mxu0 0
  %1048 = vmatprep.subr.bf16.mxu0 0
  %1049 = vmatpush1.bf16.msra.mxu0 0
  %1050 = vmatprep.mubr.bf16.mxu0 0
  %1051 = vmatmul.mubr.bf16.gmra.mrb[0].mxu0 %v1012
  %v1052 = vpop.f32.mrb[0].mxu0
  %v1053 = vadd.f32 0.0, %v1052
  %v1054 = vpop.f32.mrb[0].mxu0
  %v1055 = vpop.f32.mrb[0].mxu0
  %v1056 = vpop.f32.mrb[0].mxu0
  %1057 = vdwg.mxu0
  %v1059 = vsel %vm1010, %v170, 0
  %v1062 = vsel %vm1014, %v994, 0
  %1064 = vmatprep.subr.bf16.mxu0 0
  %1065 = vmatpush1.bf16.msra.mxu0 %v1062
  %1066 = vmatprep.subr.bf16.mxu0 0
  %1067 = vmatpush1.bf16.msra.mxu0 0
  %1068 = vmatprep.subr.bf16.mxu0 0
  %1069 = vmatpush1.bf16.msra.mxu0 0
  %1070 = vmatprep.subr.bf16.mxu0 0
  %1071 = vmatpush1.bf16.msra.mxu0 0
  %1072 = vmatprep.subr.bf16.mxu0 0
  %1073 = vmatpush1.bf16.msra.mxu0 0
  %1074 = vmatprep.subr.bf16.mxu0 0
  %1075 = vmatpush1.bf16.msra.mxu0 0
  %1076 = vmatprep.subr.bf16.mxu0 0
  %1077 = vmatpush1.bf16.msra.mxu0 0
  %1078 = vmatprep.subr.bf16.mxu0 0
  %1079 = vmatpush1.bf16.msra.mxu0 0
  %1080 = vmatprep.subr.bf16.mxu0 0
  %1081 = vmatpush1.bf16.msra.mxu0 0
  %1082 = vmatprep.subr.bf16.mxu0 0
  %1083 = vmatpush1.bf16.msra.mxu0 0
  %1084 = vmatprep.subr.bf16.mxu0 0
  %1085 = vmatpush1.bf16.msra.mxu0 0
  %1086 = vmatprep.subr.bf16.mxu0 0
  %1087 = vmatpush1.bf16.msra.mxu0 0
  %1088 = vmatprep.subr.bf16.mxu0 0
  %1089 = vmatpush1.bf16.msra.mxu0 0
  %1090 = vmatprep.subr.bf16.mxu0 0
  %1091 = vmatpush1.bf16.msra.mxu0 0
  %1092 = vmatprep.subr.bf16.mxu0 0
  %1093 = vmatpush1.bf16.msra.mxu0 0
  %1094 = vmatprep.subr.bf16.mxu0 0
  %1095 = vmatpush1.bf16.msra.mxu0 0
  %1096 = vmatprep.mubr.bf16.mxu0 0
  %1097 = vmatmul.mubr.bf16.gmra.mrb[0].mxu0 %v1059
  %v1098 = vpop.f32.mrb[0].mxu0
  %v1099 = vadd.f32 %v1053, %v1098
  %v1100 = vpop.f32.mrb[0].mxu0
  %v1101 = vpop.f32.mrb[0].mxu0
  %v1102 = vpop.f32.mrb[0].mxu0
  %1103 = vdwg.mxu0
  %1104 = vrot.lane.b32.xlu0 %v1004, 120
  %v1105 = vpop.permute.xlu0 %1104
  %v1107 = vsel %vm1010, %v1105, 0
  %v1110 = vsel %vm1014, %v995, 0
  %1112 = vmatprep.subr.bf16.mxu0 0
  %1113 = vmatpush1.bf16.msra.mxu0 %v1110
  %1114 = vmatprep.subr.bf16.mxu0 0
  %1115 = vmatpush1.bf16.msra.mxu0 0
  %1116 = vmatprep.subr.bf16.mxu0 0
  %1117 = vmatpush1.bf16.msra.mxu0 0
  %1118 = vmatprep.subr.bf16.mxu0 0
  %1119 = vmatpush1.bf16.msra.mxu0 0
  %1120 = vmatprep.subr.bf16.mxu0 0
  %1121 = vmatpush1.bf16.msra.mxu0 0
  %1122 = vmatprep.subr.bf16.mxu0 0
  %1123 = vmatpush1.bf16.msra.mxu0 0
  %1124 = vmatprep.subr.bf16.mxu0 0
  %1125 = vmatpush1.bf16.msra.mxu0 0
  %1126 = vmatprep.subr.bf16.mxu0 0
  %1127 = vmatpush1.bf16.msra.mxu0 0
  %1128 = vmatprep.subr.bf16.mxu0 0
  %1129 = vmatpush1.bf16.msra.mxu0 0
  %1130 = vmatprep.subr.bf16.mxu0 0
  %1131 = vmatpush1.bf16.msra.mxu0 0
  %1132 = vmatprep.subr.bf16.mxu0 0
  %1133 = vmatpush1.bf16.msra.mxu0 0
  %1134 = vmatprep.subr.bf16.mxu0 0
  %1135 = vmatpush1.bf16.msra.mxu0 0
  %1136 = vmatprep.subr.bf16.mxu0 0
  %1137 = vmatpush1.bf16.msra.mxu0 0
  %1138 = vmatprep.subr.bf16.mxu0 0
  %1139 = vmatpush1.bf16.msra.mxu0 0
  %1140 = vmatprep.subr.bf16.mxu0 0
  %1141 = vmatpush1.bf16.msra.mxu0 0
  %1142 = vmatprep.subr.bf16.mxu0 0
  %1143 = vmatpush1.bf16.msra.mxu0 0
  %1144 = vmatprep.mubr.bf16.mxu0 0
  %1145 = vmatmul.mubr.bf16.gmra.mrb[0].mxu0 %v1107
  %v1146 = vpop.f32.mrb[0].mxu0
  %v1147 = vadd.f32 0.0, %v1146
  %v1148 = vpop.f32.mrb[0].mxu0
  %v1149 = vpop.f32.mrb[0].mxu0
  %v1150 = vpop.f32.mrb[0].mxu0
  %1151 = vdwg.mxu0
  %v1152 = vadd.f32 %v1099, %v1147
  %1153 = vrot.lane.b32.xlu0 %v1004, 116
  %v1154 = vpop.permute.xlu0 %1153
  %1156 = vrot.lane.b32.xlu0 %v995, 64
  %v1157 = vpop.permute.xlu0 %1156
  %v1159 = vsel %vm1010, %v1154, 0
  %v1162 = vsel %vm1014, %v1157, 0
  %1164 = vmatprep.subr.bf16.mxu0 0
  %1165 = vmatpush1.bf16.msra.mxu0 %v1162
  %1166 = vmatprep.subr.bf16.mxu0 0
  %1167 = vmatpush1.bf16.msra.mxu0 0
  %1168 = vmatprep.subr.bf16.mxu0 0
  %1169 = vmatpush1.bf16.msra.mxu0 0
  %1170 = vmatprep.subr.bf16.mxu0 0
  %1171 = vmatpush1.bf16.msra.mxu0 0
  %1172 = vmatprep.subr.bf16.mxu0 0
  %1173 = vmatpush1.bf16.msra.mxu0 0
  %1174 = vmatprep.subr.bf16.mxu0 0
  %1175 = vmatpush1.bf16.msra.mxu0 0
  %1176 = vmatprep.subr.bf16.mxu0 0
  %1177 = vmatpush1.bf16.msra.mxu0 0
  %1178 = vmatprep.subr.bf16.mxu0 0
  %1179 = vmatpush1.bf16.msra.mxu0 0
  %1180 = vmatprep.subr.bf16.mxu0 0
  %1181 = vmatpush1.bf16.msra.mxu0 0
  %1182 = vmatprep.subr.bf16.mxu0 0
  %1183 = vmatpush1.bf16.msra.mxu0 0
  %1184 = vmatprep.subr.bf16.mxu0 0
  %1185 = vmatpush1.bf16.msra.mxu0 0
  %1186 = vmatprep.subr.bf16.mxu0 0
  %1187 = vmatpush1.bf16.msra.mxu0 0
  %1188 = vmatprep.subr.bf16.mxu0 0
  %1189 = vmatpush1.bf16.msra.mxu0 0
  %1190 = vmatprep.subr.bf16.mxu0 0
  %1191 = vmatpush1.bf16.msra.mxu0 0
  %1192 = vmatprep.subr.bf16.mxu0 0
  %1193 = vmatpush1.bf16.msra.mxu0 0
  %1194 = vmatprep.subr.bf16.mxu0 0
  %1195 = vmatpush1.bf16.msra.mxu0 0
  %1196 = vmatprep.mubr.bf16.mxu0 0
  %1197 = vmatmul.mubr.bf16.gmra.mrb[0].mxu0 %v1159
  %v1198 = vpop.f32.mrb[0].mxu0
  %v1199 = vadd.f32 0.0, %v1198
  %v1200 = vpop.f32.mrb[0].mxu0
  %v1201 = vpop.f32.mrb[0].mxu0
  %v1202 = vpop.f32.mrb[0].mxu0
  %1203 = vdwg.mxu0
  %v1204 = vadd.f32 %v1152, %v1199
  %1205 = vrot.lane.b32.xlu0 %v1004, 112
  %v1206 = vpop.permute.xlu0 %1205
  %v1208 = vsel %vm1010, %v1206, 0
  %v1211 = vsel %vm1014, %v996, 0
  %1213 = vmatprep.subr.bf16.mxu0 0
  %1214 = vmatpush1.bf16.msra.mxu0 %v1211
  %1215 = vmatprep.subr.bf16.mxu0 0
  %1216 = vmatpush1.bf16.msra.mxu0 0
  %1217 = vmatprep.subr.bf16.mxu0 0
  %1218 = vmatpush1.bf16.msra.mxu0 0
  %1219 = vmatprep.subr.bf16.mxu0 0
  %1220 = vmatpush1.bf16.msra.mxu0 0
  %1221 = vmatprep.subr.bf16.mxu0 0
  %1222 = vmatpush1.bf16.msra.mxu0 0
  %1223 = vmatprep.subr.bf16.mxu0 0
  %1224 = vmatpush1.bf16.msra.mxu0 0
  %1225 = vmatprep.subr.bf16.mxu0 0
  %1226 = vmatpush1.bf16.msra.mxu0 0
  %1227 = vmatprep.subr.bf16.mxu0 0
  %1228 = vmatpush1.bf16.msra.mxu0 0
  %1229 = vmatprep.subr.bf16.mxu0 0
  %1230 = vmatpush1.bf16.msra.mxu0 0
  %1231 = vmatprep.subr.bf16.mxu0 0
  %1232 = vmatpush1.bf16.msra.mxu0 0
  %1233 = vmatprep.subr.bf16.mxu0 0
  %1234 = vmatpush1.bf16.msra.mxu0 0
  %1235 = vmatprep.subr.bf16.mxu0 0
  %1236 = vmatpush1.bf16.msra.mxu0 0
  %1237 = vmatprep.subr.bf16.mxu0 0
  %1238 = vmatpush1.bf16.msra.mxu0 0
  %1239 = vmatprep.subr.bf16.mxu0 0
  %1240 = vmatpush1.bf16.msra.mxu0 0
  %1241 = vmatprep.subr.bf16.mxu0 0
  %1242 = vmatpush1.bf16.msra.mxu0 0
  %1243 = vmatprep.subr.bf16.mxu0 0
  %1244 = vmatpush1.bf16.msra.mxu0 0
  %1245 = vmatprep.mubr.bf16.mxu0 0
  %1246 = vmatmul.mubr.bf16.gmra.mrb[0].mxu0 %v1208
  %v1247 = vpop.f32.mrb[0].mxu0
  %v1248 = vadd.f32 0.0, %v1247
  %v1249 = vpop.f32.mrb[0].mxu0
  %v1250 = vpop.f32.mrb[0].mxu0
  %v1251 = vpop.f32.mrb[0].mxu0
  %1252 = vdwg.mxu0
  %v1253 = vadd.f32 %v1204, %v1248
  %1254 = vrot.lane.b32.xlu0 %v1004, 108
  %v1255 = vpop.permute.xlu0 %1254
  %1257 = vrot.lane.b32.xlu0 %v996, 64
  %v1258 = vpop.permute.xlu0 %1257
  %v1260 = vsel %vm1010, %v1255, 0
  %v1263 = vsel %vm1014, %v1258, 0
  %1265 = vmatprep.subr.bf16.mxu0 0
  %1266 = vmatpush1.bf16.msra.mxu0 %v1263
  %1267 = vmatprep.subr.bf16.mxu0 0
  %1268 = vmatpush1.bf16.msra.mxu0 0
  %1269 = vmatprep.subr.bf16.mxu0 0
  %1270 = vmatpush1.bf16.msra.mxu0 0
  %1271 = vmatprep.subr.bf16.mxu0 0
  %1272 = vmatpush1.bf16.msra.mxu0 0
  %1273 = vmatprep.subr.bf16.mxu0 0
  %1274 = vmatpush1.bf16.msra.mxu0 0
  %1275 = vmatprep.subr.bf16.mxu0 0
  %1276 = vmatpush1.bf16.msra.mxu0 0
  %1277 = vmatprep.subr.bf16.mxu0 0
  %1278 = vmatpush1.bf16.msra.mxu0 0
  %1279 = vmatprep.subr.bf16.mxu0 0
  %1280 = vmatpush1.bf16.msra.mxu0 0
  %1281 = vmatprep.subr.bf16.mxu0 0
  %1282 = vmatpush1.bf16.msra.mxu0 0
  %1283 = vmatprep.subr.bf16.mxu0 0
  %1284 = vmatpush1.bf16.msra.mxu0 0
  %1285 = vmatprep.subr.bf16.mxu0 0
  %1286 = vmatpush1.bf16.msra.mxu0 0
  %1287 = vmatprep.subr.bf16.mxu0 0
  %1288 = vmatpush1.bf16.msra.mxu0 0
  %1289 = vmatprep.subr.bf16.mxu0 0
  %1290 = vmatpush1.bf16.msra.mxu0 0
  %1291 = vmatprep.subr.bf16.mxu0 0
  %1292 = vmatpush1.bf16.msra.mxu0 0
  %1293 = vmatprep.subr.bf16.mxu0 0
  %1294 = vmatpush1.bf16.msra.mxu0 0
  %1295 = vmatprep.subr.bf16.mxu0 0
  %1296 = vmatpush1.bf16.msra.mxu0 0
  %1297 = vmatprep.mubr.bf16.mxu0 0
  %1298 = vmatmul.mubr.bf16.gmra.mrb[0].mxu0 %v1260
  %v1299 = vpop.f32.mrb[0].mxu0
  %v1300 = vadd.f32 0.0, %v1299
  %v1301 = vpop.f32.mrb[0].mxu0
  %v1302 = vpop.f32.mrb[0].mxu0
  %v1303 = vpop.f32.mrb[0].mxu0
  %1304 = vdwg.mxu0
  %v1305 = vadd.f32 %v1253, %v1300
  %1306 = vrot.lane.b32.xlu0 %v1004, 104
  %v1307 = vpop.permute.xlu0 %1306
  %v1309 = vsel %vm1010, %v1307, 0
  %v1312 = vsel %vm1014, %v997, 0
  %1314 = vmatprep.subr.bf16.mxu0 0
  %1315 = vmatpush1.bf16.msra.mxu0 %v1312
  %1316 = vmatprep.subr.bf16.mxu0 0
  %1317 = vmatpush1.bf16.msra.mxu0 0
  %1318 = vmatprep.subr.bf16.mxu0 0
  %1319 = vmatpush1.bf16.msra.mxu0 0
  %1320 = vmatprep.subr.bf16.mxu0 0
  %1321 = vmatpush1.bf16.msra.mxu0 0
  %1322 = vmatprep.subr.bf16.mxu0 0
  %1323 = vmatpush1.bf16.msra.mxu0 0
  %1324 = vmatprep.subr.bf16.mxu0 0
  %1325 = vmatpush1.bf16.msra.mxu0 0
  %1326 = vmatprep.subr.bf16.mxu0 0
  %1327 = vmatpush1.bf16.msra.mxu0 0
  %1328 = vmatprep.subr.bf16.mxu0 0
  %1329 = vmatpush1.bf16.msra.mxu0 0
  %1330 = vmatprep.subr.bf16.mxu0 0
  %1331 = vmatpush1.bf16.msra.mxu0 0
  %1332 = vmatprep.subr.bf16.mxu0 0
  %1333 = vmatpush1.bf16.msra.mxu0 0
  %1334 = vmatprep.subr.bf16.mxu0 0
  %1335 = vmatpush1.bf16.msra.mxu0 0
  %1336 = vmatprep.subr.bf16.mxu0 0
  %1337 = vmatpush1.bf16.msra.mxu0 0
  %1338 = vmatprep.subr.bf16.mxu0 0
  %1339 = vmatpush1.bf16.msra.mxu0 0
  %1340 = vmatprep.subr.bf16.mxu0 0
  %1341 = vmatpush1.bf16.msra.mxu0 0
  %1342 = vmatprep.subr.bf16.mxu0 0
  %1343 = vmatpush1.bf16.msra.mxu0 0
  %1344 = vmatprep.subr.bf16.mxu0 0
  %1345 = vmatpush1.bf16.msra.mxu0 0
  %1346 = vmatprep.mubr.bf16.mxu0 0
  %1347 = vmatmul.mubr.bf16.gmra.mrb[0].mxu0 %v1309
  %v1348 = vpop.f32.mrb[0].mxu0
  %v1349 = vadd.f32 0.0, %v1348
  %v1350 = vpop.f32.mrb[0].mxu0
  %v1351 = vpop.f32.mrb[0].mxu0
  %v1352 = vpop.f32.mrb[0].mxu0
  %1353 = vdwg.mxu0
  %v1354 = vadd.f32 %v1305, %v1349
  %1355 = vrot.lane.b32.xlu0 %v1004, 100
  %v1356 = vpop.permute.xlu0 %1355
  %1358 = vrot.lane.b32.xlu0 %v997, 64
  %v1359 = vpop.permute.xlu0 %1358
  %v1361 = vsel %vm1010, %v1356, 0
  %v1364 = vsel %vm1014, %v1359, 0
  %1366 = vmatprep.subr.bf16.mxu0 0
  %1367 = vmatpush1.bf16.msra.mxu0 %v1364
  %1368 = vmatprep.subr.bf16.mxu0 0
  %1369 = vmatpush1.bf16.msra.mxu0 0
  %1370 = vmatprep.subr.bf16.mxu0 0
  %1371 = vmatpush1.bf16.msra.mxu0 0
  %1372 = vmatprep.subr.bf16.mxu0 0
  %1373 = vmatpush1.bf16.msra.mxu0 0
  %1374 = vmatprep.subr.bf16.mxu0 0
  %1375 = vmatpush1.bf16.msra.mxu0 0
  %1376 = vmatprep.subr.bf16.mxu0 0
  %1377 = vmatpush1.bf16.msra.mxu0 0
  %1378 = vmatprep.subr.bf16.mxu0 0
  %1379 = vmatpush1.bf16.msra.mxu0 0
  %1380 = vmatprep.subr.bf16.mxu0 0
  %1381 = vmatpush1.bf16.msra.mxu0 0
  %1382 = vmatprep.subr.bf16.mxu0 0
  %1383 = vmatpush1.bf16.msra.mxu0 0
  %1384 = vmatprep.subr.bf16.mxu0 0
  %1385 = vmatpush1.bf16.msra.mxu0 0
  %1386 = vmatprep.subr.bf16.mxu0 0
  %1387 = vmatpush1.bf16.msra.mxu0 0
  %1388 = vmatprep.subr.bf16.mxu0 0
  %1389 = vmatpush1.bf16.msra.mxu0 0
  %1390 = vmatprep.subr.bf16.mxu0 0
  %1391 = vmatpush1.bf16.msra.mxu0 0
  %1392 = vmatprep.subr.bf16.mxu0 0
  %1393 = vmatpush1.bf16.msra.mxu0 0
  %1394 = vmatprep.subr.bf16.mxu0 0
  %1395 = vmatpush1.bf16.msra.mxu0 0
  %1396 = vmatprep.subr.bf16.mxu0 0
  %1397 = vmatpush1.bf16.msra.mxu0 0
  %1398 = vmatprep.mubr.bf16.mxu0 0
  %1399 = vmatmul.mubr.bf16.gmra.mrb[0].mxu0 %v1361
  %v1400 = vpop.f32.mrb[0].mxu0
  %v1401 = vadd.f32 0.0, %v1400
  %v1402 = vpop.f32.mrb[0].mxu0
  %v1403 = vpop.f32.mrb[0].mxu0
  %v1404 = vpop.f32.mrb[0].mxu0
  %1405 = vdwg.mxu0
  %v1406 = vadd.f32 %v1354, %v1401
  %1407 = vrot.lane.b32.xlu0 %v1004, 96
  %v1408 = vpop.permute.xlu0 %1407
  %v1410 = vsel %vm1010, %v1408, 0
  %v1413 = vsel %vm1014, %v998, 0
  %1415 = vmatprep.subr.bf16.mxu0 0
  %1416 = vmatpush1.bf16.msra.mxu0 %v1413
  %1417 = vmatprep.subr.bf16.mxu0 0
  %1418 = vmatpush1.bf16.msra.mxu0 0
  %1419 = vmatprep.subr.bf16.mxu0 0
  %1420 = vmatpush1.bf16.msra.mxu0 0
  %1421 = vmatprep.subr.bf16.mxu0 0
  %1422 = vmatpush1.bf16.msra.mxu0 0
  %1423 = vmatprep.subr.bf16.mxu0 0
  %1424 = vmatpush1.bf16.msra.mxu0 0
  %1425 = vmatprep.subr.bf16.mxu0 0
  %1426 = vmatpush1.bf16.msra.mxu0 0
  %1427 = vmatprep.subr.bf16.mxu0 0
  %1428 = vmatpush1.bf16.msra.mxu0 0
  %1429 = vmatprep.subr.bf16.mxu0 0
  %1430 = vmatpush1.bf16.msra.mxu0 0
  %1431 = vmatprep.subr.bf16.mxu0 0
  %1432 = vmatpush1.bf16.msra.mxu0 0
  %1433 = vmatprep.subr.bf16.mxu0 0
  %1434 = vmatpush1.bf16.msra.mxu0 0
  %1435 = vmatprep.subr.bf16.mxu0 0
  %1436 = vmatpush1.bf16.msra.mxu0 0
  %1437 = vmatprep.subr.bf16.mxu0 0
  %1438 = vmatpush1.bf16.msra.mxu0 0
  %1439 = vmatprep.subr.bf16.mxu0 0
  %1440 = vmatpush1.bf16.msra.mxu0 0
  %1441 = vmatprep.subr.bf16.mxu0 0
  %1442 = vmatpush1.bf16.msra.mxu0 0
  %1443 = vmatprep.subr.bf16.mxu0 0
  %1444 = vmatpush1.bf16.msra.mxu0 0
  %1445 = vmatprep.subr.bf16.mxu0 0
  %1446 = vmatpush1.bf16.msra.mxu0 0
  %1447 = vmatprep.mubr.bf16.mxu0 0
  %1448 = vmatmul.mubr.bf16.gmra.mrb[0].mxu0 %v1410
  %v1449 = vpop.f32.mrb[0].mxu0
  %v1450 = vadd.f32 0.0, %v1449
  %v1451 = vpop.f32.mrb[0].mxu0
  %v1452 = vpop.f32.mrb[0].mxu0
  %v1453 = vpop.f32.mrb[0].mxu0
  %1454 = vdwg.mxu0
  %v1455 = vadd.f32 %v1406, %v1450
  %1456 = vrot.lane.b32.xlu0 %v1004, 92
  %v1457 = vpop.permute.xlu0 %1456
  %1459 = vrot.lane.b32.xlu0 %v998, 64
  %v1460 = vpop.permute.xlu0 %1459
  %v1462 = vsel %vm1010, %v1457, 0
  %v1465 = vsel %vm1014, %v1460, 0
  %1467 = vmatprep.subr.bf16.mxu0 0
  %1468 = vmatpush1.bf16.msra.mxu0 %v1465
  %1469 = vmatprep.subr.bf16.mxu0 0
  %1470 = vmatpush1.bf16.msra.mxu0 0
  %1471 = vmatprep.subr.bf16.mxu0 0
  %1472 = vmatpush1.bf16.msra.mxu0 0
  %1473 = vmatprep.subr.bf16.mxu0 0
  %1474 = vmatpush1.bf16.msra.mxu0 0
  %1475 = vmatprep.subr.bf16.mxu0 0
  %1476 = vmatpush1.bf16.msra.mxu0 0
  %1477 = vmatprep.subr.bf16.mxu0 0
  %1478 = vmatpush1.bf16.msra.mxu0 0
  %1479 = vmatprep.subr.bf16.mxu0 0
  %1480 = vmatpush1.bf16.msra.mxu0 0
  %1481 = vmatprep.subr.bf16.mxu0 0
  %1482 = vmatpush1.bf16.msra.mxu0 0
  %1483 = vmatprep.subr.bf16.mxu0 0
  %1484 = vmatpush1.bf16.msra.mxu0 0
  %1485 = vmatprep.subr.bf16.mxu0 0
  %1486 = vmatpush1.bf16.msra.mxu0 0
  %1487 = vmatprep.subr.bf16.mxu0 0
  %1488 = vmatpush1.bf16.msra.mxu0 0
  %1489 = vmatprep.subr.bf16.mxu0 0
  %1490 = vmatpush1.bf16.msra.mxu0 0
  %1491 = vmatprep.subr.bf16.mxu0 0
  %1492 = vmatpush1.bf16.msra.mxu0 0
  %1493 = vmatprep.subr.bf16.mxu0 0
  %1494 = vmatpush1.bf16.msra.mxu0 0
  %1495 = vmatprep.subr.bf16.mxu0 0
  %1496 = vmatpush1.bf16.msra.mxu0 0
  %1497 = vmatprep.subr.bf16.mxu0 0
  %1498 = vmatpush1.bf16.msra.mxu0 0
  %1499 = vmatprep.mubr.bf16.mxu0 0
  %1500 = vmatmul.mubr.bf16.gmra.mrb[0].mxu0 %v1462
  %v1501 = vpop.f32.mrb[0].mxu0
  %v1502 = vadd.f32 0.0, %v1501
  %v1503 = vpop.f32.mrb[0].mxu0
  %v1504 = vpop.f32.mrb[0].mxu0
  %v1505 = vpop.f32.mrb[0].mxu0
  %1506 = vdwg.mxu0
  %v1507 = vadd.f32 %v1455, %v1502
  %1508 = vrot.lane.b32.xlu0 %v1004, 88
  %v1509 = vpop.permute.xlu0 %1508
  %v1511 = vsel %vm1010, %v1509, 0
  %v1514 = vsel %vm1014, %v999, 0
  %1516 = vmatprep.subr.bf16.mxu0 0
  %1517 = vmatpush1.bf16.msra.mxu0 %v1514
  %1518 = vmatprep.subr.bf16.mxu0 0
  %1519 = vmatpush1.bf16.msra.mxu0 0
  %1520 = vmatprep.subr.bf16.mxu0 0
  %1521 = vmatpush1.bf16.msra.mxu0 0
  %1522 = vmatprep.subr.bf16.mxu0 0
  %1523 = vmatpush1.bf16.msra.mxu0 0
  %1524 = vmatprep.subr.bf16.mxu0 0
  %1525 = vmatpush1.bf16.msra.mxu0 0
  %1526 = vmatprep.subr.bf16.mxu0 0
  %1527 = vmatpush1.bf16.msra.mxu0 0
  %1528 = vmatprep.subr.bf16.mxu0 0
  %1529 = vmatpush1.bf16.msra.mxu0 0
  %1530 = vmatprep.subr.bf16.mxu0 0
  %1531 = vmatpush1.bf16.msra.mxu0 0
  %1532 = vmatprep.subr.bf16.mxu0 0
  %1533 = vmatpush1.bf16.msra.mxu0 0
  %1534 = vmatprep.subr.bf16.mxu0 0
  %1535 = vmatpush1.bf16.msra.mxu0 0
  %1536 = vmatprep.subr.bf16.mxu0 0
  %1537 = vmatpush1.bf16.msra.mxu0 0
  %1538 = vmatprep.subr.bf16.mxu0 0
  %1539 = vmatpush1.bf16.msra.mxu0 0
  %1540 = vmatprep.subr.bf16.mxu0 0
  %1541 = vmatpush1.bf16.msra.mxu0 0
  %1542 = vmatprep.subr.bf16.mxu0 0
  %1543 = vmatpush1.bf16.msra.mxu0 0
  %1544 = vmatprep.subr.bf16.mxu0 0
  %1545 = vmatpush1.bf16.msra.mxu0 0
  %1546 = vmatprep.subr.bf16.mxu0 0
  %1547 = vmatpush1.bf16.msra.mxu0 0
  %1548 = vmatprep.mubr.bf16.mxu0 0
  %1549 = vmatmul.mubr.bf16.gmra.mrb[0].mxu0 %v1511
  %v1550 = vpop.f32.mrb[0].mxu0
  %v1551 = vadd.f32 0.0, %v1550
  %v1552 = vpop.f32.mrb[0].mxu0
  %v1553 = vpop.f32.mrb[0].mxu0
  %v1554 = vpop.f32.mrb[0].mxu0
  %1555 = vdwg.mxu0
  %v1556 = vadd.f32 %v1507, %v1551
  %1557 = vrot.lane.b32.xlu0 %v1004, 84
  %v1558 = vpop.permute.xlu0 %1557
  %1560 = vrot.lane.b32.xlu0 %v999, 64
  %v1561 = vpop.permute.xlu0 %1560
  %v1563 = vsel %vm1010, %v1558, 0
  %v1566 = vsel %vm1014, %v1561, 0
  %1568 = vmatprep.subr.bf16.mxu0 0
  %1569 = vmatpush1.bf16.msra.mxu0 %v1566
  %1570 = vmatprep.subr.bf16.mxu0 0
  %1571 = vmatpush1.bf16.msra.mxu0 0
  %1572 = vmatprep.subr.bf16.mxu0 0
  %1573 = vmatpush1.bf16.msra.mxu0 0
  %1574 = vmatprep.subr.bf16.mxu0 0
  %1575 = vmatpush1.bf16.msra.mxu0 0
  %1576 = vmatprep.subr.bf16.mxu0 0
  %1577 = vmatpush1.bf16.msra.mxu0 0
  %1578 = vmatprep.subr.bf16.mxu0 0
  %1579 = vmatpush1.bf16.msra.mxu0 0
  %1580 = vmatprep.subr.bf16.mxu0 0
  %1581 = vmatpush1.bf16.msra.mxu0 0
  %1582 = vmatprep.subr.bf16.mxu0 0
  %1583 = vmatpush1.bf16.msra.mxu0 0
  %1584 = vmatprep.subr.bf16.mxu0 0
  %1585 = vmatpush1.bf16.msra.mxu0 0
  %1586 = vmatprep.subr.bf16.mxu0 0
  %1587 = vmatpush1.bf16.msra.mxu0 0
  %1588 = vmatprep.subr.bf16.mxu0 0
  %1589 = vmatpush1.bf16.msra.mxu0 0
  %1590 = vmatprep.subr.bf16.mxu0 0
  %1591 = vmatpush1.bf16.msra.mxu0 0
  %1592 = vmatprep.subr.bf16.mxu0 0
  %1593 = vmatpush1.bf16.msra.mxu0 0
  %1594 = vmatprep.subr.bf16.mxu0 0
  %1595 = vmatpush1.bf16.msra.mxu0 0
  %1596 = vmatprep.subr.bf16.mxu0 0
  %1597 = vmatpush1.bf16.msra.mxu0 0
  %1598 = vmatprep.subr.bf16.mxu0 0
  %1599 = vmatpush1.bf16.msra.mxu0 0
  %1600 = vmatprep.mubr.bf16.mxu0 0
  %1601 = vmatmul.mubr.bf16.gmra.mrb[0].mxu0 %v1563
  %v1602 = vpop.f32.mrb[0].mxu0
  %v1603 = vadd.f32 0.0, %v1602
  %v1604 = vpop.f32.mrb[0].mxu0
  %v1605 = vpop.f32.mrb[0].mxu0
  %v1606 = vpop.f32.mrb[0].mxu0
  %1607 = vdwg.mxu0
  %v1608 = vadd.f32 %v1556, %v1603
  %1609 = vrot.lane.b32.xlu0 %v1004, 80
  %v1610 = vpop.permute.xlu0 %1609
  %v1612 = vsel %vm1010, %v1610, 0
  %v1615 = vsel %vm1014, %v1000, 0
  %1617 = vmatprep.subr.bf16.mxu0 0
  %1618 = vmatpush1.bf16.msra.mxu0 %v1615
  %1619 = vmatprep.subr.bf16.mxu0 0
  %1620 = vmatpush1.bf16.msra.mxu0 0
  %1621 = vmatprep.subr.bf16.mxu0 0
  %1622 = vmatpush1.bf16.msra.mxu0 0
  %1623 = vmatprep.subr.bf16.mxu0 0
  %1624 = vmatpush1.bf16.msra.mxu0 0
  %1625 = vmatprep.subr.bf16.mxu0 0
  %1626 = vmatpush1.bf16.msra.mxu0 0
  %1627 = vmatprep.subr.bf16.mxu0 0
  %1628 = vmatpush1.bf16.msra.mxu0 0
  %1629 = vmatprep.subr.bf16.mxu0 0
  %1630 = vmatpush1.bf16.msra.mxu0 0
  %1631 = vmatprep.subr.bf16.mxu0 0
  %1632 = vmatpush1.bf16.msra.mxu0 0
  %1633 = vmatprep.subr.bf16.mxu0 0
  %1634 = vmatpush1.bf16.msra.mxu0 0
  %1635 = vmatprep.subr.bf16.mxu0 0
  %1636 = vmatpush1.bf16.msra.mxu0 0
  %1637 = vmatprep.subr.bf16.mxu0 0
  %1638 = vmatpush1.bf16.msra.mxu0 0
  %1639 = vmatprep.subr.bf16.mxu0 0
  %1640 = vmatpush1.bf16.msra.mxu0 0
  %1641 = vmatprep.subr.bf16.mxu0 0
  %1642 = vmatpush1.bf16.msra.mxu0 0
  %1643 = vmatprep.subr.bf16.mxu0 0
  %1644 = vmatpush1.bf16.msra.mxu0 0
  %1645 = vmatprep.subr.bf16.mxu0 0
  %1646 = vmatpush1.bf16.msra.mxu0 0
  %1647 = vmatprep.subr.bf16.mxu0 0
  %1648 = vmatpush1.bf16.msra.mxu0 0
  %1649 = vmatprep.mubr.bf16.mxu0 0
  %1650 = vmatmul.mubr.bf16.gmra.mrb[0].mxu0 %v1612
  %v1651 = vpop.f32.mrb[0].mxu0
  %v1652 = vadd.f32 0.0, %v1651
  %v1653 = vpop.f32.mrb[0].mxu0
  %v1654 = vpop.f32.mrb[0].mxu0
  %v1655 = vpop.f32.mrb[0].mxu0
  %1656 = vdwg.mxu0
  %v1657 = vadd.f32 %v1608, %v1652
  %1658 = vrot.lane.b32.xlu0 %v1004, 76
  %v1659 = vpop.permute.xlu0 %1658
  %1661 = vrot.lane.b32.xlu0 %v1000, 64
  %v1662 = vpop.permute.xlu0 %1661
  %v1664 = vsel %vm1010, %v1659, 0
  %v1667 = vsel %vm1014, %v1662, 0
  %1669 = vmatprep.subr.bf16.mxu0 0
  %1670 = vmatpush1.bf16.msra.mxu0 %v1667
  %1671 = vmatprep.subr.bf16.mxu0 0
  %1672 = vmatpush1.bf16.msra.mxu0 0
  %1673 = vmatprep.subr.bf16.mxu0 0
  %1674 = vmatpush1.bf16.msra.mxu0 0
  %1675 = vmatprep.subr.bf16.mxu0 0
  %1676 = vmatpush1.bf16.msra.mxu0 0
  %1677 = vmatprep.subr.bf16.mxu0 0
  %1678 = vmatpush1.bf16.msra.mxu0 0
  %1679 = vmatprep.subr.bf16.mxu0 0
  %1680 = vmatpush1.bf16.msra.mxu0 0
  %1681 = vmatprep.subr.bf16.mxu0 0
  %1682 = vmatpush1.bf16.msra.mxu0 0
  %1683 = vmatprep.subr.bf16.mxu0 0
  %1684 = vmatpush1.bf16.msra.mxu0 0
  %1685 = vmatprep.subr.bf16.mxu0 0
  %1686 = vmatpush1.bf16.msra.mxu0 0
  %1687 = vmatprep.subr.bf16.mxu0 0
  %1688 = vmatpush1.bf16.msra.mxu0 0
  %1689 = vmatprep.subr.bf16.mxu0 0
  %1690 = vmatpush1.bf16.msra.mxu0 0
  %1691 = vmatprep.subr.bf16.mxu0 0
  %1692 = vmatpush1.bf16.msra.mxu0 0
  %1693 = vmatprep.subr.bf16.mxu0 0
  %1694 = vmatpush1.bf16.msra.mxu0 0
  %1695 = vmatprep.subr.bf16.mxu0 0
  %1696 = vmatpush1.bf16.msra.mxu0 0
  %1697 = vmatprep.subr.bf16.mxu0 0
  %1698 = vmatpush1.bf16.msra.mxu0 0
  %1699 = vmatprep.subr.bf16.mxu0 0
  %1700 = vmatpush1.bf16.msra.mxu0 0
  %1701 = vmatprep.mubr.bf16.mxu0 0
  %1702 = vmatmul.mubr.bf16.gmra.mrb[0].mxu0 %v1664
  %v1703 = vpop.f32.mrb[0].mxu0
  %v1704 = vadd.f32 0.0, %v1703
  %v1705 = vpop.f32.mrb[0].mxu0
  %v1706 = vpop.f32.mrb[0].mxu0
  %v1707 = vpop.f32.mrb[0].mxu0
  %1708 = vdwg.mxu0
  %v1709 = vadd.f32 %v1657, %v1704
  %1710 = vrot.lane.b32.xlu0 %v1004, 72
  %v1711 = vpop.permute.xlu0 %1710
  %v1713 = vsel %vm1010, %v1711, 0
  %v1716 = vsel %vm1014, %v1001, 0
  %1718 = vmatprep.subr.bf16.mxu0 0
  %1719 = vmatpush1.bf16.msra.mxu0 %v1716
  %1720 = vmatprep.subr.bf16.mxu0 0
  %1721 = vmatpush1.bf16.msra.mxu0 0
  %1722 = vmatprep.subr.bf16.mxu0 0
  %1723 = vmatpush1.bf16.msra.mxu0 0
  %1724 = vmatprep.subr.bf16.mxu0 0
  %1725 = vmatpush1.bf16.msra.mxu0 0
  %1726 = vmatprep.subr.bf16.mxu0 0
  %1727 = vmatpush1.bf16.msra.mxu0 0
  %1728 = vmatprep.subr.bf16.mxu0 0
  %1729 = vmatpush1.bf16.msra.mxu0 0
  %1730 = vmatprep.subr.bf16.mxu0 0
  %1731 = vmatpush1.bf16.msra.mxu0 0
  %1732 = vmatprep.subr.bf16.mxu0 0
  %1733 = vmatpush1.bf16.msra.mxu0 0
  %1734 = vmatprep.subr.bf16.mxu0 0
  %1735 = vmatpush1.bf16.msra.mxu0 0
  %1736 = vmatprep.subr.bf16.mxu0 0
  %1737 = vmatpush1.bf16.msra.mxu0 0
  %1738 = vmatprep.subr.bf16.mxu0 0
  %1739 = vmatpush1.bf16.msra.mxu0 0
  %1740 = vmatprep.subr.bf16.mxu0 0
  %1741 = vmatpush1.bf16.msra.mxu0 0
  %1742 = vmatprep.subr.bf16.mxu0 0
  %1743 = vmatpush1.bf16.msra.mxu0 0
  %1744 = vmatprep.subr.bf16.mxu0 0
  %1745 = vmatpush1.bf16.msra.mxu0 0
  %1746 = vmatprep.subr.bf16.mxu0 0
  %1747 = vmatpush1.bf16.msra.mxu0 0
  %1748 = vmatprep.subr.bf16.mxu0 0
  %1749 = vmatpush1.bf16.msra.mxu0 0
  %1750 = vmatprep.mubr.bf16.mxu0 0
  %1751 = vmatmul.mubr.bf16.gmra.mrb[0].mxu0 %v1713
  %v1752 = vpop.f32.mrb[0].mxu0
  %v1753 = vadd.f32 0.0, %v1752
  %v1754 = vpop.f32.mrb[0].mxu0
  %v1755 = vpop.f32.mrb[0].mxu0
  %v1756 = vpop.f32.mrb[0].mxu0
  %1757 = vdwg.mxu0
  %v1758 = vadd.f32 %v1709, %v1753
  %1759 = vrot.lane.b32.xlu0 %v1004, 68
  %v1760 = vpop.permute.xlu0 %1759
  %1762 = vrot.lane.b32.xlu0 %v1001, 64
  %v1763 = vpop.permute.xlu0 %1762
  %v1765 = vsel %vm1010, %v1760, 0
  %v1768 = vsel %vm1014, %v1763, 0
  %1770 = vmatprep.subr.bf16.mxu0 0
  %1771 = vmatpush1.bf16.msra.mxu0 %v1768
  %1772 = vmatprep.subr.bf16.mxu0 0
  %1773 = vmatpush1.bf16.msra.mxu0 0
  %1774 = vmatprep.subr.bf16.mxu0 0
  %1775 = vmatpush1.bf16.msra.mxu0 0
  %1776 = vmatprep.subr.bf16.mxu0 0
  %1777 = vmatpush1.bf16.msra.mxu0 0
  %1778 = vmatprep.subr.bf16.mxu0 0
  %1779 = vmatpush1.bf16.msra.mxu0 0
  %1780 = vmatprep.subr.bf16.mxu0 0
  %1781 = vmatpush1.bf16.msra.mxu0 0
  %1782 = vmatprep.subr.bf16.mxu0 0
  %1783 = vmatpush1.bf16.msra.mxu0 0
  %1784 = vmatprep.subr.bf16.mxu0 0
  %1785 = vmatpush1.bf16.msra.mxu0 0
  %1786 = vmatprep.subr.bf16.mxu0 0
  %1787 = vmatpush1.bf16.msra.mxu0 0
  %1788 = vmatprep.subr.bf16.mxu0 0
  %1789 = vmatpush1.bf16.msra.mxu0 0
  %1790 = vmatprep.subr.bf16.mxu0 0
  %1791 = vmatpush1.bf16.msra.mxu0 0
  %1792 = vmatprep.subr.bf16.mxu0 0
  %1793 = vmatpush1.bf16.msra.mxu0 0
  %1794 = vmatprep.subr.bf16.mxu0 0
  %1795 = vmatpush1.bf16.msra.mxu0 0
  %1796 = vmatprep.subr.bf16.mxu0 0
  %1797 = vmatpush1.bf16.msra.mxu0 0
  %1798 = vmatprep.subr.bf16.mxu0 0
  %1799 = vmatpush1.bf16.msra.mxu0 0
  %1800 = vmatprep.subr.bf16.mxu0 0
  %1801 = vmatpush1.bf16.msra.mxu0 0
  %1802 = vmatprep.mubr.bf16.mxu0 0
  %1803 = vmatmul.mubr.bf16.gmra.mrb[0].mxu0 %v1765
  %v1804 = vpop.f32.mrb[0].mxu0
  %v1805 = vadd.f32 0.0, %v1804
  %v1806 = vpop.f32.mrb[0].mxu0
  %v1807 = vpop.f32.mrb[0].mxu0
  %v1808 = vpop.f32.mrb[0].mxu0
  %1809 = vdwg.mxu0
  %v1810 = vadd.f32 %v1758, %v1805
  %vm1811 = vcmp.gt.f32.partialorder %v1810, 0.0
  %v1812 = vmul.f32 %v1810, 0.2
  %v1813 = vsel %vm1811, %v1810, %v1812
  %v1814 = vpack.c.bf16 %v1813, %v1813
  %v1823 = vunpack.c.l.b16 %v162
  %v1824 = vunpack.c.h.b16 %v162
  %v1825 = vunpack.c.l.b16 %v163
  %v1826 = vunpack.c.h.b16 %v163
  %v1827 = vunpack.c.l.b16 %v164
  %v1828 = vunpack.c.h.b16 %v164
  %v1829 = vunpack.c.l.b16 %v165
  %v1830 = vunpack.c.h.b16 %v165
  %v1831 = vunpack.c.l.b16 %v166
  %v1832 = vunpack.c.h.b16 %v166
  %v1833 = vunpack.c.l.b16 %v167
  %v1834 = vunpack.c.h.b16 %v167
  %v1835 = vunpack.c.l.b16 %v168
  %v1836 = vunpack.c.h.b16 %v168
  %v1837 = vunpack.c.l.b16 %v169
  %v1838 = vunpack.c.h.b16 %v169
  %v1839 = vpack.c.b16 %v1825, %v1823
  %v1840 = vpack.c.b16 %v1826, %v1824
  %v1841 = vpack.c.b16 %v1829, %v1827
  %v1842 = vpack.c.b16 %v1830, %v1828
  %v1843 = vpack.c.b16 %v1833, %v1831
  %v1844 = vpack.c.b16 %v1834, %v1832
  %v1845 = vpack.c.b16 %v1837, %v1835
  %v1846 = vpack.c.b16 %v1838, %v1836
  %vm1855 = vcmask 523264
  %v1857 = vsel %vm1855, %v1814, 0
  %1859 = vmatprep.subr.bf16.mxu0 %v1840
  %1860 = vmatpush1.bf16.msra.mxu0 %v1839
  %1861 = vmatprep.subr.bf16.mxu0 %v1842
  %1862 = vmatpush1.bf16.msra.mxu0 %v1841
  %1863 = vmatprep.subr.bf16.mxu0 %v1844
  %1864 = vmatpush1.bf16.msra.mxu0 %v1843
  %1865 = vmatprep.subr.bf16.mxu0 %v1846
  %1866 = vmatpush1.bf16.msra.mxu0 %v1845
  %1867 = vmatprep.subr.bf16.mxu0 0
  %1868 = vmatpush1.bf16.msra.mxu0 0
  %1869 = vmatprep.subr.bf16.mxu0 0
  %1870 = vmatpush1.bf16.msra.mxu0 0
  %1871 = vmatprep.subr.bf16.mxu0 0
  %1872 = vmatpush1.bf16.msra.mxu0 0
  %1873 = vmatprep.subr.bf16.mxu0 0
  %1874 = vmatpush1.bf16.msra.mxu0 0
  %1875 = vmatprep.subr.bf16.mxu0 0
  %1876 = vmatpush1.bf16.msra.mxu0 0
  %1877 = vmatprep.subr.bf16.mxu0 0
  %1878 = vmatpush1.bf16.msra.mxu0 0
  %1879 = vmatprep.subr.bf16.mxu0 0
  %1880 = vmatpush1.bf16.msra.mxu0 0
  %1881 = vmatprep.subr.bf16.mxu0 0
  %1882 = vmatpush1.bf16.msra.mxu0 0
  %1883 = vmatprep.subr.bf16.mxu0 0
  %1884 = vmatpush1.bf16.msra.mxu0 0
  %1885 = vmatprep.subr.bf16.mxu0 0
  %1886 = vmatpush1.bf16.msra.mxu0 0
  %1887 = vmatprep.subr.bf16.mxu0 0
  %1888 = vmatpush1.bf16.msra.mxu0 0
  %1889 = vmatprep.subr.bf16.mxu0 0
  %1890 = vmatpush1.bf16.msra.mxu0 0
  %1891 = vmatprep.mubr.bf16.mxu0 0
  %1892 = vmatmul.mubr.bf16.gmra.mrb[0].mxu0 %v1857
  %v1893 = vpop.f32.mrb[0].mxu0
  %v1894 = vadd.f32 0.0, %v1893
  %v1895 = vpop.f32.mrb[0].mxu0
  %v1896 = vadd.f32 0.0, %v1895
  %v1897 = vpop.f32.mrb[0].mxu0
  %v1898 = vpop.f32.mrb[0].mxu0
  %1899 = vdwg.mxu0
  %v1900 = vpack.c.bf16 %v1894, %v1894
  %v1901 = vpack.c.bf16 %v1896, %v1896
  %v1904 = vunpack.c.l.b16 %v171
  %v1905 = vunpack.c.l.b16 %v172
  %v1906 = vpack.c.b16 %v1905, %v1904
  %1907 = vrot.lane.b32.xlu0 %v1906, 120
  %v1908 = vpop.permute.xlu0 %1907
  %1910 = vrot.lane.b32.xlu0 %v1900, 112
  %v1911 = vpop.permute.xlu0 %1910
  %vm1912 = vcmask 64512
  %v1914 = vsel %vm1912, %v1908, 0
  %vm1916 = vcmask 1043456
  %v1918 = vsel %vm1916, %v1911, 0
  %1920 = vmatprep.subr.bf16.mxu0 0
  %1921 = vmatpush1.bf16.msra.mxu0 %v1918
  %1922 = vmatprep.subr.bf16.mxu0 0
  %1923 = vmatpush1.bf16.msra.mxu0 0
  %1924 = vmatprep.subr.bf16.mxu0 0
  %1925 = vmatpush1.bf16.msra.mxu0 0
  %1926 = vmatprep.subr.bf16.mxu0 0
  %1927 = vmatpush1.bf16.msra.mxu0 0
  %1928 = vmatprep.subr.bf16.mxu0 0
  %1929 = vmatpush1.bf16.msra.mxu0 0
  %1930 = vmatprep.subr.bf16.mxu0 0
  %1931 = vmatpush1.bf16.msra.mxu0 0
  %1932 = vmatprep.subr.bf16.mxu0 0
  %1933 = vmatpush1.bf16.msra.mxu0 0
  %1934 = vmatprep.subr.bf16.mxu0 0
  %1935 = vmatpush1.bf16.msra.mxu0 0
  %1936 = vmatprep.subr.bf16.mxu0 0
  %1937 = vmatpush1.bf16.msra.mxu0 0
  %1938 = vmatprep.subr.bf16.mxu0 0
  %1939 = vmatpush1.bf16.msra.mxu0 0
  %1940 = vmatprep.subr.bf16.mxu0 0
  %1941 = vmatpush1.bf16.msra.mxu0 0
  %1942 = vmatprep.subr.bf16.mxu0 0
  %1943 = vmatpush1.bf16.msra.mxu0 0
  %1944 = vmatprep.subr.bf16.mxu0 0
  %1945 = vmatpush1.bf16.msra.mxu0 0
  %1946 = vmatprep.subr.bf16.mxu0 0
  %1947 = vmatpush1.bf16.msra.mxu0 0
  %1948 = vmatprep.subr.bf16.mxu0 0
  %1949 = vmatpush1.bf16.msra.mxu0 0
  %1950 = vmatprep.subr.bf16.mxu0 0
  %1951 = vmatpush1.bf16.msra.mxu0 0
  %1952 = vmatprep.mubr.bf16.mxu0 0
  %1953 = vmatmul.mubr.bf16.gmra.mrb[0].mxu0 %v1914
  %v1954 = vpop.f32.mrb[0].mxu0
  %v1955 = vadd.f32 0.0, %v1954
  %v1956 = vpop.f32.mrb[0].mxu0
  %v1957 = vpop.f32.mrb[0].mxu0
  %v1958 = vadd.f32 0.0, %v1957
  %v1959 = vpop.f32.mrb[0].mxu0
  %1960 = vdwg.mxu0
  %v1962 = vsel %vm1912, %v1906, 0
  %v1965 = vsel %vm1916, %v1900, 0
  %1967 = vmatprep.subr.bf16.mxu0 0
  %1968 = vmatpush1.bf16.msra.mxu0 %v1965
  %1969 = vmatprep.subr.bf16.mxu0 0
  %1970 = vmatpush1.bf16.msra.mxu0 0
  %1971 = vmatprep.subr.bf16.mxu0 0
  %1972 = vmatpush1.bf16.msra.mxu0 0
  %1973 = vmatprep.subr.bf16.mxu0 0
  %1974 = vmatpush1.bf16.msra.mxu0 0
  %1975 = vmatprep.subr.bf16.mxu0 0
  %1976 = vmatpush1.bf16.msra.mxu0 0
  %1977 = vmatprep.subr.bf16.mxu0 0
  %1978 = vmatpush1.bf16.msra.mxu0 0
  %1979 = vmatprep.subr.bf16.mxu0 0
  %1980 = vmatpush1.bf16.msra.mxu0 0
  %1981 = vmatprep.subr.bf16.mxu0 0
  %1982 = vmatpush1.bf16.msra.mxu0 0
  %1983 = vmatprep.subr.bf16.mxu0 0
  %1984 = vmatpush1.bf16.msra.mxu0 0
  %1985 = vmatprep.subr.bf16.mxu0 0
  %1986 = vmatpush1.bf16.msra.mxu0 0
  %1987 = vmatprep.subr.bf16.mxu0 0
  %1988 = vmatpush1.bf16.msra.mxu0 0
  %1989 = vmatprep.subr.bf16.mxu0 0
  %1990 = vmatpush1.bf16.msra.mxu0 0
  %1991 = vmatprep.subr.bf16.mxu0 0
  %1992 = vmatpush1.bf16.msra.mxu0 0
  %1993 = vmatprep.subr.bf16.mxu0 0
  %1994 = vmatpush1.bf16.msra.mxu0 0
  %1995 = vmatprep.subr.bf16.mxu0 0
  %1996 = vmatpush1.bf16.msra.mxu0 0
  %1997 = vmatprep.subr.bf16.mxu0 0
  %1998 = vmatpush1.bf16.msra.mxu0 0
  %1999 = vmatprep.mubr.bf16.mxu0 0
  %2000 = vmatmul.mubr.bf16.gmra.mrb[0].mxu0 %v1962
  %v2001 = vpop.f32.mrb[0].mxu0
  %v2002 = vadd.f32 %v1955, %v2001
  %v2003 = vpop.f32.mrb[0].mxu0
  %v2004 = vpop.f32.mrb[0].mxu0
  %v2005 = vadd.f32 %v1958, %v2004
  %v2006 = vpop.f32.mrb[0].mxu0
  %2007 = vdwg.mxu0
  %2008 = vrot.lane.b32.xlu0 %v1906, 112
  %v2009 = vpop.permute.xlu0 %2008
  %2010 = vrot.lane.b32.xlu0 %v1900, 96
  %v2011 = vpop.permute.xlu0 %2010
  %v2013 = vsel %vm1912, %v2009, 0
  %v2016 = vsel %vm1916, %v2011, 0
  %2018 = vmatprep.subr.bf16.mxu0 0
  %2019 = vmatpush1.bf16.msra.mxu0 %v2016
  %2020 = vmatprep.subr.bf16.mxu0 0
  %2021 = vmatpush1.bf16.msra.mxu0 0
  %2022 = vmatprep.subr.bf16.mxu0 0
  %2023 = vmatpush1.bf16.msra.mxu0 0
  %2024 = vmatprep.subr.bf16.mxu0 0
  %2025 = vmatpush1.bf16.msra.mxu0 0
  %2026 = vmatprep.subr.bf16.mxu0 0
  %2027 = vmatpush1.bf16.msra.mxu0 0
  %2028 = vmatprep.subr.bf16.mxu0 0
  %2029 = vmatpush1.bf16.msra.mxu0 0
  %2030 = vmatprep.subr.bf16.mxu0 0
  %2031 = vmatpush1.bf16.msra.mxu0 0
  %2032 = vmatprep.subr.bf16.mxu0 0
  %2033 = vmatpush1.bf16.msra.mxu0 0
  %2034 = vmatprep.subr.bf16.mxu0 0
  %2035 = vmatpush1.bf16.msra.mxu0 0
  %2036 = vmatprep.subr.bf16.mxu0 0
  %2037 = vmatpush1.bf16.msra.mxu0 0
  %2038 = vmatprep.subr.bf16.mxu0 0
  %2039 = vmatpush1.bf16.msra.mxu0 0
  %2040 = vmatprep.subr.bf16.mxu0 0
  %2041 = vmatpush1.bf16.msra.mxu0 0
  %2042 = vmatprep.subr.bf16.mxu0 0
  %2043 = vmatpush1.bf16.msra.mxu0 0
  %2044 = vmatprep.subr.bf16.mxu0 0
  %2045 = vmatpush1.bf16.msra.mxu0 0
  %2046 = vmatprep.subr.bf16.mxu0 0
  %2047 = vmatpush1.bf16.msra.mxu0 0
  %2048 = vmatprep.subr.bf16.mxu0 0
  %2049 = vmatpush1.bf16.msra.mxu0 0
  %2050 = vmatprep.mubr.bf16.mxu0 0
  %2051 = vmatmul.mubr.bf16.gmra.mrb[0].mxu0 %v2013
  %v2052 = vpop.f32.mrb[0].mxu0
  %v2053 = vadd.f32 0.0, %v2052
  %v2054 = vpop.f32.mrb[0].mxu0
  %v2055 = vpop.f32.mrb[0].mxu0
  %v2056 = vadd.f32 0.0, %v2055
  %v2057 = vpop.f32.mrb[0].mxu0
  %2058 = vdwg.mxu0
  %v2059 = vadd.f32 %v2002, %v2053
  %v2060 = vadd.f32 %v2005, %v2056
  %2061 = vrot.lane.b32.xlu0 %v1906, 104
  %v2062 = vpop.permute.xlu0 %2061
  %2063 = vrot.lane.b32.xlu0 %v1900, 80
  %v2064 = vpop.permute.xlu0 %2063
  %v2066 = vsel %vm1912, %v2062, 0
  %v2069 = vsel %vm1916, %v2064, 0
  %2071 = vmatprep.subr.bf16.mxu0 0
  %2072 = vmatpush1.bf16.msra.mxu0 %v2069
  %2073 = vmatprep.subr.bf16.mxu0 0
  %2074 = vmatpush1.bf16.msra.mxu0 0
  %2075 = vmatprep.subr.bf16.mxu0 0
  %2076 = vmatpush1.bf16.msra.mxu0 0
  %2077 = vmatprep.subr.bf16.mxu0 0
  %2078 = vmatpush1.bf16.msra.mxu0 0
  %2079 = vmatprep.subr.bf16.mxu0 0
  %2080 = vmatpush1.bf16.msra.mxu0 0
  %2081 = vmatprep.subr.bf16.mxu0 0
  %2082 = vmatpush1.bf16.msra.mxu0 0
  %2083 = vmatprep.subr.bf16.mxu0 0
  %2084 = vmatpush1.bf16.msra.mxu0 0
  %2085 = vmatprep.subr.bf16.mxu0 0
  %2086 = vmatpush1.bf16.msra.mxu0 0
  %2087 = vmatprep.subr.bf16.mxu0 0
  %2088 = vmatpush1.bf16.msra.mxu0 0
  %2089 = vmatprep.subr.bf16.mxu0 0
  %2090 = vmatpush1.bf16.msra.mxu0 0
  %2091 = vmatprep.subr.bf16.mxu0 0
  %2092 = vmatpush1.bf16.msra.mxu0 0
  %2093 = vmatprep.subr.bf16.mxu0 0
  %2094 = vmatpush1.bf16.msra.mxu0 0
  %2095 = vmatprep.subr.bf16.mxu0 0
  %2096 = vmatpush1.bf16.msra.mxu0 0
  %2097 = vmatprep.subr.bf16.mxu0 0
  %2098 = vmatpush1.bf16.msra.mxu0 0
  %2099 = vmatprep.subr.bf16.mxu0 0
  %2100 = vmatpush1.bf16.msra.mxu0 0
  %2101 = vmatprep.subr.bf16.mxu0 0
  %2102 = vmatpush1.bf16.msra.mxu0 0
  %2103 = vmatprep.mubr.bf16.mxu0 0
  %2104 = vmatmul.mubr.bf16.gmra.mrb[0].mxu0 %v2066
  %v2105 = vpop.f32.mrb[0].mxu0
  %v2106 = vadd.f32 0.0, %v2105
  %v2107 = vpop.f32.mrb[0].mxu0
  %v2108 = vpop.f32.mrb[0].mxu0
  %v2109 = vadd.f32 0.0, %v2108
  %v2110 = vpop.f32.mrb[0].mxu0
  %2111 = vdwg.mxu0
  %v2112 = vadd.f32 %v2059, %v2106
  %v2113 = vadd.f32 %v2060, %v2109
  %2114 = vrot.lane.b32.xlu0 %v1906, 96
  %v2115 = vpop.permute.xlu0 %2114
  %2116 = vrot.lane.b32.xlu0 %v1900, 64
  %v2117 = vpop.permute.xlu0 %2116
  %v2119 = vsel %vm1912, %v2115, 0
  %v2122 = vsel %vm1916, %v2117, 0
  %2124 = vmatprep.subr.bf16.mxu0 0
  %2125 = vmatpush1.bf16.msra.mxu0 %v2122
  %2126 = vmatprep.subr.bf16.mxu0 0
  %2127 = vmatpush1.bf16.msra.mxu0 0
  %2128 = vmatprep.subr.bf16.mxu0 0
  %2129 = vmatpush1.bf16.msra.mxu0 0
  %2130 = vmatprep.subr.bf16.mxu0 0
  %2131 = vmatpush1.bf16.msra.mxu0 0
  %2132 = vmatprep.subr.bf16.mxu0 0
  %2133 = vmatpush1.bf16.msra.mxu0 0
  %2134 = vmatprep.subr.bf16.mxu0 0
  %2135 = vmatpush1.bf16.msra.mxu0 0
  %2136 = vmatprep.subr.bf16.mxu0 0
  %2137 = vmatpush1.bf16.msra.mxu0 0
  %2138 = vmatprep.subr.bf16.mxu0 0
  %2139 = vmatpush1.bf16.msra.mxu0 0
  %2140 = vmatprep.subr.bf16.mxu0 0
  %2141 = vmatpush1.bf16.msra.mxu0 0
  %2142 = vmatprep.subr.bf16.mxu0 0
  %2143 = vmatpush1.bf16.msra.mxu0 0
  %2144 = vmatprep.subr.bf16.mxu0 0
  %2145 = vmatpush1.bf16.msra.mxu0 0
  %2146 = vmatprep.subr.bf16.mxu0 0
  %2147 = vmatpush1.bf16.msra.mxu0 0
  %2148 = vmatprep.subr.bf16.mxu0 0
  %2149 = vmatpush1.bf16.msra.mxu0 0
  %2150 = vmatprep.subr.bf16.mxu0 0
  %2151 = vmatpush1.bf16.msra.mxu0 0
  %2152 = vmatprep.subr.bf16.mxu0 0
  %2153 = vmatpush1.bf16.msra.mxu0 0
  %2154 = vmatprep.subr.bf16.mxu0 0
  %2155 = vmatpush1.bf16.msra.mxu0 0
  %2156 = vmatprep.mubr.bf16.mxu0 0
  %2157 = vmatmul.mubr.bf16.gmra.mrb[0].mxu0 %v2119
  %v2158 = vpop.f32.mrb[0].mxu0
  %v2159 = vadd.f32 0.0, %v2158
  %v2160 = vpop.f32.mrb[0].mxu0
  %v2161 = vpop.f32.mrb[0].mxu0
  %v2162 = vadd.f32 0.0, %v2161
  %v2163 = vpop.f32.mrb[0].mxu0
  %2164 = vdwg.mxu0
  %v2165 = vadd.f32 %v2112, %v2159
  %v2166 = vadd.f32 %v2113, %v2162
  %2167 = vrot.lane.b32.xlu0 %v1906, 88
  %v2168 = vpop.permute.xlu0 %2167
  %2169 = vrot.lane.b32.xlu0 %v1900, 48
  %v2170 = vpop.permute.xlu0 %2169
  %v2172 = vsel %vm1912, %v2168, 0
  %v2175 = vsel %vm1916, %v2170, 0
  %2177 = vmatprep.subr.bf16.mxu0 0
  %2178 = vmatpush1.bf16.msra.mxu0 %v2175
  %2179 = vmatprep.subr.bf16.mxu0 0
  %2180 = vmatpush1.bf16.msra.mxu0 0
  %2181 = vmatprep.subr.bf16.mxu0 0
  %2182 = vmatpush1.bf16.msra.mxu0 0
  %2183 = vmatprep.subr.bf16.mxu0 0
  %2184 = vmatpush1.bf16.msra.mxu0 0
  %2185 = vmatprep.subr.bf16.mxu0 0
  %2186 = vmatpush1.bf16.msra.mxu0 0
  %2187 = vmatprep.subr.bf16.mxu0 0
  %2188 = vmatpush1.bf16.msra.mxu0 0
  %2189 = vmatprep.subr.bf16.mxu0 0
  %2190 = vmatpush1.bf16.msra.mxu0 0
  %2191 = vmatprep.subr.bf16.mxu0 0
  %2192 = vmatpush1.bf16.msra.mxu0 0
  %2193 = vmatprep.subr.bf16.mxu0 0
  %2194 = vmatpush1.bf16.msra.mxu0 0
  %2195 = vmatprep.subr.bf16.mxu0 0
  %2196 = vmatpush1.bf16.msra.mxu0 0
  %2197 = vmatprep.subr.bf16.mxu0 0
  %2198 = vmatpush1.bf16.msra.mxu0 0
  %2199 = vmatprep.subr.bf16.mxu0 0
  %2200 = vmatpush1.bf16.msra.mxu0 0
  %2201 = vmatprep.subr.bf16.mxu0 0
  %2202 = vmatpush1.bf16.msra.mxu0 0
  %2203 = vmatprep.subr.bf16.mxu0 0
  %2204 = vmatpush1.bf16.msra.mxu0 0
  %2205 = vmatprep.subr.bf16.mxu0 0
  %2206 = vmatpush1.bf16.msra.mxu0 0
  %2207 = vmatprep.subr.bf16.mxu0 0
  %2208 = vmatpush1.bf16.msra.mxu0 0
  %2209 = vmatprep.mubr.bf16.mxu0 0
  %2210 = vmatmul.mubr.bf16.gmra.mrb[0].mxu0 %v2172
  %v2211 = vpop.f32.mrb[0].mxu0
  %v2212 = vadd.f32 0.0, %v2211
  %v2213 = vpop.f32.mrb[0].mxu0
  %v2214 = vpop.f32.mrb[0].mxu0
  %v2215 = vadd.f32 0.0, %v2214
  %v2216 = vpop.f32.mrb[0].mxu0
  %2217 = vdwg.mxu0
  %v2218 = vadd.f32 %v2165, %v2212
  %v2219 = vadd.f32 %v2166, %v2215
  %2220 = vrot.lane.b32.xlu0 %v1906, 80
  %v2221 = vpop.permute.xlu0 %2220
  %2222 = vrot.lane.b32.xlu0 %v1900, 32
  %v2223 = vpop.permute.xlu0 %2222
  %v2225 = vsel %vm1912, %v2221, 0
  %v2228 = vsel %vm1916, %v2223, 0
  %2230 = vmatprep.subr.bf16.mxu0 0
  %2231 = vmatpush1.bf16.msra.mxu0 %v2228
  %2232 = vmatprep.subr.bf16.mxu0 0
  %2233 = vmatpush1.bf16.msra.mxu0 0
  %2234 = vmatprep.subr.bf16.mxu0 0
  %2235 = vmatpush1.bf16.msra.mxu0 0
  %2236 = vmatprep.subr.bf16.mxu0 0
  %2237 = vmatpush1.bf16.msra.mxu0 0
  %2238 = vmatprep.subr.bf16.mxu0 0
  %2239 = vmatpush1.bf16.msra.mxu0 0
  %2240 = vmatprep.subr.bf16.mxu0 0
  %2241 = vmatpush1.bf16.msra.mxu0 0
  %2242 = vmatprep.subr.bf16.mxu0 0
  %2243 = vmatpush1.bf16.msra.mxu0 0
  %2244 = vmatprep.subr.bf16.mxu0 0
  %2245 = vmatpush1.bf16.msra.mxu0 0
  %2246 = vmatprep.subr.bf16.mxu0 0
  %2247 = vmatpush1.bf16.msra.mxu0 0
  %2248 = vmatprep.subr.bf16.mxu0 0
  %2249 = vmatpush1.bf16.msra.mxu0 0
  %2250 = vmatprep.subr.bf16.mxu0 0
  %2251 = vmatpush1.bf16.msra.mxu0 0
  %2252 = vmatprep.subr.bf16.mxu0 0
  %2253 = vmatpush1.bf16.msra.mxu0 0
  %2254 = vmatprep.subr.bf16.mxu0 0
  %2255 = vmatpush1.bf16.msra.mxu0 0
  %2256 = vmatprep.subr.bf16.mxu0 0
  %2257 = vmatpush1.bf16.msra.mxu0 0
  %2258 = vmatprep.subr.bf16.mxu0 0
  %2259 = vmatpush1.bf16.msra.mxu0 0
  %2260 = vmatprep.subr.bf16.mxu0 0
  %2261 = vmatpush1.bf16.msra.mxu0 0
  %2262 = vmatprep.mubr.bf16.mxu0 0
  %2263 = vmatmul.mubr.bf16.gmra.mrb[0].mxu0 %v2225
  %v2264 = vpop.f32.mrb[0].mxu0
  %v2265 = vadd.f32 0.0, %v2264
  %v2266 = vpop.f32.mrb[0].mxu0
  %v2267 = vpop.f32.mrb[0].mxu0
  %v2268 = vadd.f32 0.0, %v2267
  %v2269 = vpop.f32.mrb[0].mxu0
  %2270 = vdwg.mxu0
  %v2271 = vadd.f32 %v2218, %v2265
  %v2272 = vadd.f32 %v2219, %v2268
  %2273 = vrot.lane.b32.xlu0 %v1906, 72
  %v2274 = vpop.permute.xlu0 %2273
  %2275 = vrot.lane.b32.xlu0 %v1900, 16
  %v2276 = vpop.permute.xlu0 %2275
  %v2278 = vsel %vm1912, %v2274, 0
  %v2281 = vsel %vm1916, %v2276, 0
  %2283 = vmatprep.subr.bf16.mxu0 0
  %2284 = vmatpush1.bf16.msra.mxu0 %v2281
  %2285 = vmatprep.subr.bf16.mxu0 0
  %2286 = vmatpush1.bf16.msra.mxu0 0
  %2287 = vmatprep.subr.bf16.mxu0 0
  %2288 = vmatpush1.bf16.msra.mxu0 0
  %2289 = vmatprep.subr.bf16.mxu0 0
  %2290 = vmatpush1.bf16.msra.mxu0 0
  %2291 = vmatprep.subr.bf16.mxu0 0
  %2292 = vmatpush1.bf16.msra.mxu0 0
  %2293 = vmatprep.subr.bf16.mxu0 0
  %2294 = vmatpush1.bf16.msra.mxu0 0
  %2295 = vmatprep.subr.bf16.mxu0 0
  %2296 = vmatpush1.bf16.msra.mxu0 0
  %2297 = vmatprep.subr.bf16.mxu0 0
  %2298 = vmatpush1.bf16.msra.mxu0 0
  %2299 = vmatprep.subr.bf16.mxu0 0
  %2300 = vmatpush1.bf16.msra.mxu0 0
  %2301 = vmatprep.subr.bf16.mxu0 0
  %2302 = vmatpush1.bf16.msra.mxu0 0
  %2303 = vmatprep.subr.bf16.mxu0 0
  %2304 = vmatpush1.bf16.msra.mxu0 0
  %2305 = vmatprep.subr.bf16.mxu0 0
  %2306 = vmatpush1.bf16.msra.mxu0 0
  %2307 = vmatprep.subr.bf16.mxu0 0
  %2308 = vmatpush1.bf16.msra.mxu0 0
  %2309 = vmatprep.subr.bf16.mxu0 0
  %2310 = vmatpush1.bf16.msra.mxu0 0
  %2311 = vmatprep.subr.bf16.mxu0 0
  %2312 = vmatpush1.bf16.msra.mxu0 0
  %2313 = vmatprep.subr.bf16.mxu0 0
  %2314 = vmatpush1.bf16.msra.mxu0 0
  %2315 = vmatprep.mubr.bf16.mxu0 0
  %2316 = vmatmul.mubr.bf16.gmra.mrb[0].mxu0 %v2278
  %v2317 = vpop.f32.mrb[0].mxu0
  %v2318 = vadd.f32 0.0, %v2317
  %v2319 = vpop.f32.mrb[0].mxu0
  %v2320 = vpop.f32.mrb[0].mxu0
  %v2321 = vadd.f32 0.0, %v2320
  %v2322 = vpop.f32.mrb[0].mxu0
  %2323 = vdwg.mxu0
  %v2324 = vadd.f32 %v2271, %v2318
  %v2325 = vadd.f32 %v2272, %v2321
  %2326 = vrot.lane.b32.xlu0 %v1906, 64
  %v2327 = vpop.permute.xlu0 %2326
  %v2329 = vsel %vm1912, %v2327, 0
  %v2332 = vsel %vm1916, %v1901, 0
  %2334 = vmatprep.subr.bf16.mxu0 0
  %2335 = vmatpush1.bf16.msra.mxu0 %v2332
  %2336 = vmatprep.subr.bf16.mxu0 0
  %2337 = vmatpush1.bf16.msra.mxu0 0
  %2338 = vmatprep.subr.bf16.mxu0 0
  %2339 = vmatpush1.bf16.msra.mxu0 0
  %2340 = vmatprep.subr.bf16.mxu0 0
  %2341 = vmatpush1.bf16.msra.mxu0 0
  %2342 = vmatprep.subr.bf16.mxu0 0
  %2343 = vmatpush1.bf16.msra.mxu0 0
  %2344 = vmatprep.subr.bf16.mxu0 0
  %2345 = vmatpush1.bf16.msra.mxu0 0
  %2346 = vmatprep.subr.bf16.mxu0 0
  %2347 = vmatpush1.bf16.msra.mxu0 0
  %2348 = vmatprep.subr.bf16.mxu0 0
  %2349 = vmatpush1.bf16.msra.mxu0 0
  %2350 = vmatprep.subr.bf16.mxu0 0
  %2351 = vmatpush1.bf16.msra.mxu0 0
  %2352 = vmatprep.subr.bf16.mxu0 0
  %2353 = vmatpush1.bf16.msra.mxu0 0
  %2354 = vmatprep.subr.bf16.mxu0 0
  %2355 = vmatpush1.bf16.msra.mxu0 0
  %2356 = vmatprep.subr.bf16.mxu0 0
  %2357 = vmatpush1.bf16.msra.mxu0 0
  %2358 = vmatprep.subr.bf16.mxu0 0
  %2359 = vmatpush1.bf16.msra.mxu0 0
  %2360 = vmatprep.subr.bf16.mxu0 0
  %2361 = vmatpush1.bf16.msra.mxu0 0
  %2362 = vmatprep.subr.bf16.mxu0 0
  %2363 = vmatpush1.bf16.msra.mxu0 0
  %2364 = vmatprep.subr.bf16.mxu0 0
  %2365 = vmatpush1.bf16.msra.mxu0 0
  %2366 = vmatprep.mubr.bf16.mxu0 0
  %2367 = vmatmul.mubr.bf16.gmra.mrb[0].mxu0 %v2329
  %v2368 = vpop.f32.mrb[0].mxu0
  %v2369 = vadd.f32 0.0, %v2368
  %v2370 = vpop.f32.mrb[0].mxu0
  %v2371 = vpop.f32.mrb[0].mxu0
  %v2372 = vadd.f32 0.0, %v2371
  %v2373 = vpop.f32.mrb[0].mxu0
  %2374 = vdwg.mxu0
  %v2375 = vadd.f32 %v2324, %v2369
  %v2376 = vadd.f32 %v2325, %v2372
  %2377 = vrot.lane.b32.xlu0 %v1906, 56
  %v2378 = vpop.permute.xlu0 %2377
  %2380 = vrot.lane.b32.xlu0 %v1901, 112
  %v2381 = vpop.permute.xlu0 %2380
  %v2383 = vsel %vm1912, %v2378, 0
  %v2386 = vsel %vm1916, %v2381, 0
  %2388 = vmatprep.subr.bf16.mxu0 0
  %2389 = vmatpush1.bf16.msra.mxu0 %v2386
  %2390 = vmatprep.subr.bf16.mxu0 0
  %2391 = vmatpush1.bf16.msra.mxu0 0
  %2392 = vmatprep.subr.bf16.mxu0 0
  %2393 = vmatpush1.bf16.msra.mxu0 0
  %2394 = vmatprep.subr.bf16.mxu0 0
  %2395 = vmatpush1.bf16.msra.mxu0 0
  %2396 = vmatprep.subr.bf16.mxu0 0
  %2397 = vmatpush1.bf16.msra.mxu0 0
  %2398 = vmatprep.subr.bf16.mxu0 0
  %2399 = vmatpush1.bf16.msra.mxu0 0
  %2400 = vmatprep.subr.bf16.mxu0 0
  %2401 = vmatpush1.bf16.msra.mxu0 0
  %2402 = vmatprep.subr.bf16.mxu0 0
  %2403 = vmatpush1.bf16.msra.mxu0 0
  %2404 = vmatprep.subr.bf16.mxu0 0
  %2405 = vmatpush1.bf16.msra.mxu0 0
  %2406 = vmatprep.subr.bf16.mxu0 0
  %2407 = vmatpush1.bf16.msra.mxu0 0
  %2408 = vmatprep.subr.bf16.mxu0 0
  %2409 = vmatpush1.bf16.msra.mxu0 0
  %2410 = vmatprep.subr.bf16.mxu0 0
  %2411 = vmatpush1.bf16.msra.mxu0 0
  %2412 = vmatprep.subr.bf16.mxu0 0
  %2413 = vmatpush1.bf16.msra.mxu0 0
  %2414 = vmatprep.subr.bf16.mxu0 0
  %2415 = vmatpush1.bf16.msra.mxu0 0
  %2416 = vmatprep.subr.bf16.mxu0 0
  %2417 = vmatpush1.bf16.msra.mxu0 0
  %2418 = vmatprep.subr.bf16.mxu0 0
  %2419 = vmatpush1.bf16.msra.mxu0 0
  %2420 = vmatprep.mubr.bf16.mxu0 0
  %2421 = vmatmul.mubr.bf16.gmra.mrb[0].mxu0 %v2383
  %v2422 = vpop.f32.mrb[0].mxu0
  %v2423 = vadd.f32 0.0, %v2422
  %v2424 = vpop.f32.mrb[0].mxu0
  %v2425 = vpop.f32.mrb[0].mxu0
  %v2426 = vadd.f32 0.0, %v2425
  %v2427 = vpop.f32.mrb[0].mxu0
  %2428 = vdwg.mxu0
  %v2429 = vadd.f32 %v2375, %v2423
  %v2430 = vadd.f32 %v2376, %v2426
  %2431 = vrot.lane.b32.xlu0 %v1906, 48
  %v2432 = vpop.permute.xlu0 %2431
  %2433 = vrot.lane.b32.xlu0 %v1901, 96
  %v2434 = vpop.permute.xlu0 %2433
  %v2436 = vsel %vm1912, %v2432, 0
  %v2439 = vsel %vm1916, %v2434, 0
  %2441 = vmatprep.subr.bf16.mxu0 0
  %2442 = vmatpush1.bf16.msra.mxu0 %v2439
  %2443 = vmatprep.subr.bf16.mxu0 0
  %2444 = vmatpush1.bf16.msra.mxu0 0
  %2445 = vmatprep.subr.bf16.mxu0 0
  %2446 = vmatpush1.bf16.msra.mxu0 0
  %2447 = vmatprep.subr.bf16.mxu0 0
  %2448 = vmatpush1.bf16.msra.mxu0 0
  %2449 = vmatprep.subr.bf16.mxu0 0
  %2450 = vmatpush1.bf16.msra.mxu0 0
  %2451 = vmatprep.subr.bf16.mxu0 0
  %2452 = vmatpush1.bf16.msra.mxu0 0
  %2453 = vmatprep.subr.bf16.mxu0 0
  %2454 = vmatpush1.bf16.msra.mxu0 0
  %2455 = vmatprep.subr.bf16.mxu0 0
  %2456 = vmatpush1.bf16.msra.mxu0 0
  %2457 = vmatprep.subr.bf16.mxu0 0
  %2458 = vmatpush1.bf16.msra.mxu0 0
  %2459 = vmatprep.subr.bf16.mxu0 0
  %2460 = vmatpush1.bf16.msra.mxu0 0
  %2461 = vmatprep.subr.bf16.mxu0 0
  %2462 = vmatpush1.bf16.msra.mxu0 0
  %2463 = vmatprep.subr.bf16.mxu0 0
  %2464 = vmatpush1.bf16.msra.mxu0 0
  %2465 = vmatprep.subr.bf16.mxu0 0
  %2466 = vmatpush1.bf16.msra.mxu0 0
  %2467 = vmatprep.subr.bf16.mxu0 0
  %2468 = vmatpush1.bf16.msra.mxu0 0
  %2469 = vmatprep.subr.bf16.mxu0 0
  %2470 = vmatpush1.bf16.msra.mxu0 0
  %2471 = vmatprep.subr.bf16.mxu0 0
  %2472 = vmatpush1.bf16.msra.mxu0 0
  %2473 = vmatprep.mubr.bf16.mxu0 0
  %2474 = vmatmul.mubr.bf16.gmra.mrb[0].mxu0 %v2436
  %v2475 = vpop.f32.mrb[0].mxu0
  %v2476 = vadd.f32 0.0, %v2475
  %v2477 = vpop.f32.mrb[0].mxu0
  %v2478 = vpop.f32.mrb[0].mxu0
  %v2479 = vadd.f32 0.0, %v2478
  %v2480 = vpop.f32.mrb[0].mxu0
  %2481 = vdwg.mxu0
  %v2482 = vadd.f32 %v2429, %v2476
  %v2483 = vadd.f32 %v2430, %v2479
  %2484 = vrot.lane.b32.xlu0 %v1906, 40
  %v2485 = vpop.permute.xlu0 %2484
  %2486 = vrot.lane.b32.xlu0 %v1901, 80
  %v2487 = vpop.permute.xlu0 %2486
  %v2489 = vsel %vm1912, %v2485, 0
  %v2492 = vsel %vm1916, %v2487, 0
  %2494 = vmatprep.subr.bf16.mxu0 0
  %2495 = vmatpush1.bf16.msra.mxu0 %v2492
  %2496 = vmatprep.subr.bf16.mxu0 0
  %2497 = vmatpush1.bf16.msra.mxu0 0
  %2498 = vmatprep.subr.bf16.mxu0 0
  %2499 = vmatpush1.bf16.msra.mxu0 0
  %2500 = vmatprep.subr.bf16.mxu0 0
  %2501 = vmatpush1.bf16.msra.mxu0 0
  %2502 = vmatprep.subr.bf16.mxu0 0
  %2503 = vmatpush1.bf16.msra.mxu0 0
  %2504 = vmatprep.subr.bf16.mxu0 0
  %2505 = vmatpush1.bf16.msra.mxu0 0
  %2506 = vmatprep.subr.bf16.mxu0 0
  %2507 = vmatpush1.bf16.msra.mxu0 0
  %2508 = vmatprep.subr.bf16.mxu0 0
  %2509 = vmatpush1.bf16.msra.mxu0 0
  %2510 = vmatprep.subr.bf16.mxu0 0
  %2511 = vmatpush1.bf16.msra.mxu0 0
  %2512 = vmatprep.subr.bf16.mxu0 0
  %2513 = vmatpush1.bf16.msra.mxu0 0
  %2514 = vmatprep.subr.bf16.mxu0 0
  %2515 = vmatpush1.bf16.msra.mxu0 0
  %2516 = vmatprep.subr.bf16.mxu0 0
  %2517 = vmatpush1.bf16.msra.mxu0 0
  %2518 = vmatprep.subr.bf16.mxu0 0
  %2519 = vmatpush1.bf16.msra.mxu0 0
  %2520 = vmatprep.subr.bf16.mxu0 0
  %2521 = vmatpush1.bf16.msra.mxu0 0
  %2522 = vmatprep.subr.bf16.mxu0 0
  %2523 = vmatpush1.bf16.msra.mxu0 0
  %2524 = vmatprep.subr.bf16.mxu0 0
  %2525 = vmatpush1.bf16.msra.mxu0 0
  %2526 = vmatprep.mubr.bf16.mxu0 0
  %2527 = vmatmul.mubr.bf16.gmra.mrb[0].mxu0 %v2489
  %v2528 = vpop.f32.mrb[0].mxu0
  %v2529 = vadd.f32 0.0, %v2528
  %v2530 = vpop.f32.mrb[0].mxu0
  %v2531 = vpop.f32.mrb[0].mxu0
  %v2532 = vadd.f32 0.0, %v2531
  %v2533 = vpop.f32.mrb[0].mxu0
  %2534 = vdwg.mxu0
  %v2535 = vadd.f32 %v2482, %v2529
  %v2536 = vadd.f32 %v2483, %v2532
  %2537 = vrot.lane.b32.xlu0 %v1906, 32
  %v2538 = vpop.permute.xlu0 %2537
  %2539 = vrot.lane.b32.xlu0 %v1901, 64
  %v2540 = vpop.permute.xlu0 %2539
  %v2542 = vsel %vm1912, %v2538, 0
  %v2545 = vsel %vm1916, %v2540, 0
  %2547 = vmatprep.subr.bf16.mxu0 0
  %2548 = vmatpush1.bf16.msra.mxu0 %v2545
  %2549 = vmatprep.subr.bf16.mxu0 0
  %2550 = vmatpush1.bf16.msra.mxu0 0
  %2551 = vmatprep.subr.bf16.mxu0 0
  %2552 = vmatpush1.bf16.msra.mxu0 0
  %2553 = vmatprep.subr.bf16.mxu0 0
  %2554 = vmatpush1.bf16.msra.mxu0 0
  %2555 = vmatprep.subr.bf16.mxu0 0
  %2556 = vmatpush1.bf16.msra.mxu0 0
  %2557 = vmatprep.subr.bf16.mxu0 0
  %2558 = vmatpush1.bf16.msra.mxu0 0
  %2559 = vmatprep.subr.bf16.mxu0 0
  %2560 = vmatpush1.bf16.msra.mxu0 0
  %2561 = vmatprep.subr.bf16.mxu0 0
  %2562 = vmatpush1.bf16.msra.mxu0 0
  %2563 = vmatprep.subr.bf16.mxu0 0
  %2564 = vmatpush1.bf16.msra.mxu0 0
  %2565 = vmatprep.subr.bf16.mxu0 0
  %2566 = vmatpush1.bf16.msra.mxu0 0
  %2567 = vmatprep.subr.bf16.mxu0 0
  %2568 = vmatpush1.bf16.msra.mxu0 0
  %2569 = vmatprep.subr.bf16.mxu0 0
  %2570 = vmatpush1.bf16.msra.mxu0 0
  %2571 = vmatprep.subr.bf16.mxu0 0
  %2572 = vmatpush1.bf16.msra.mxu0 0
  %2573 = vmatprep.subr.bf16.mxu0 0
  %2574 = vmatpush1.bf16.msra.mxu0 0
  %2575 = vmatprep.subr.bf16.mxu0 0
  %2576 = vmatpush1.bf16.msra.mxu0 0
  %2577 = vmatprep.subr.bf16.mxu0 0
  %2578 = vmatpush1.bf16.msra.mxu0 0
  %2579 = vmatprep.mubr.bf16.mxu0 0
  %2580 = vmatmul.mubr.bf16.gmra.mrb[0].mxu0 %v2542
  %v2581 = vpop.f32.mrb[0].mxu0
  %v2582 = vadd.f32 0.0, %v2581
  %v2583 = vpop.f32.mrb[0].mxu0
  %v2584 = vpop.f32.mrb[0].mxu0
  %v2585 = vadd.f32 0.0, %v2584
  %v2586 = vpop.f32.mrb[0].mxu0
  %2587 = vdwg.mxu0
  %v2588 = vadd.f32 %v2535, %v2582
  %v2589 = vadd.f32 %v2536, %v2585
  %2590 = vrot.lane.b32.xlu0 %v1906, 24
  %v2591 = vpop.permute.xlu0 %2590
  %2592 = vrot.lane.b32.xlu0 %v1901, 48
  %v2593 = vpop.permute.xlu0 %2592
  %v2595 = vsel %vm1912, %v2591, 0
  %v2598 = vsel %vm1916, %v2593, 0
  %2600 = vmatprep.subr.bf16.mxu0 0
  %2601 = vmatpush1.bf16.msra.mxu0 %v2598
  %2602 = vmatprep.subr.bf16.mxu0 0
  %2603 = vmatpush1.bf16.msra.mxu0 0
  %2604 = vmatprep.subr.bf16.mxu0 0
  %2605 = vmatpush1.bf16.msra.mxu0 0
  %2606 = vmatprep.subr.bf16.mxu0 0
  %2607 = vmatpush1.bf16.msra.mxu0 0
  %2608 = vmatprep.subr.bf16.mxu0 0
  %2609 = vmatpush1.bf16.msra.mxu0 0
  %2610 = vmatprep.subr.bf16.mxu0 0
  %2611 = vmatpush1.bf16.msra.mxu0 0
  %2612 = vmatprep.subr.bf16.mxu0 0
  %2613 = vmatpush1.bf16.msra.mxu0 0
  %2614 = vmatprep.subr.bf16.mxu0 0
  %2615 = vmatpush1.bf16.msra.mxu0 0
  %2616 = vmatprep.subr.bf16.mxu0 0
  %2617 = vmatpush1.bf16.msra.mxu0 0
  %2618 = vmatprep.subr.bf16.mxu0 0
  %2619 = vmatpush1.bf16.msra.mxu0 0
  %2620 = vmatprep.subr.bf16.mxu0 0
  %2621 = vmatpush1.bf16.msra.mxu0 0
  %2622 = vmatprep.subr.bf16.mxu0 0
  %2623 = vmatpush1.bf16.msra.mxu0 0
  %2624 = vmatprep.subr.bf16.mxu0 0
  %2625 = vmatpush1.bf16.msra.mxu0 0
  %2626 = vmatprep.subr.bf16.mxu0 0
  %2627 = vmatpush1.bf16.msra.mxu0 0
  %2628 = vmatprep.subr.bf16.mxu0 0
  %2629 = vmatpush1.bf16.msra.mxu0 0
  %2630 = vmatprep.subr.bf16.mxu0 0
  %2631 = vmatpush1.bf16.msra.mxu0 0
  %2632 = vmatprep.mubr.bf16.mxu0 0
  %2633 = vmatmul.mubr.bf16.gmra.mrb[0].mxu0 %v2595
  %v2634 = vpop.f32.mrb[0].mxu0
  %v2635 = vadd.f32 0.0, %v2634
  %v2636 = vpop.f32.mrb[0].mxu0
  %v2637 = vpop.f32.mrb[0].mxu0
  %v2638 = vadd.f32 0.0, %v2637
  %v2639 = vpop.f32.mrb[0].mxu0
  %2640 = vdwg.mxu0
  %v2641 = vadd.f32 %v2588, %v2635
  %v2642 = vadd.f32 %v2589, %v2638
  %2643 = vrot.lane.b32.xlu0 %v1906, 16
  %v2644 = vpop.permute.xlu0 %2643
  %2645 = vrot.lane.b32.xlu0 %v1901, 32
  %v2646 = vpop.permute.xlu0 %2645
  %v2648 = vsel %vm1912, %v2644, 0
  %v2651 = vsel %vm1916, %v2646, 0
  %2653 = vmatprep.subr.bf16.mxu0 0
  %2654 = vmatpush1.bf16.msra.mxu0 %v2651
  %2655 = vmatprep.subr.bf16.mxu0 0
  %2656 = vmatpush1.bf16.msra.mxu0 0
  %2657 = vmatprep.subr.bf16.mxu0 0
  %2658 = vmatpush1.bf16.msra.mxu0 0
  %2659 = vmatprep.subr.bf16.mxu0 0
  %2660 = vmatpush1.bf16.msra.mxu0 0
  %2661 = vmatprep.subr.bf16.mxu0 0
  %2662 = vmatpush1.bf16.msra.mxu0 0
  %2663 = vmatprep.subr.bf16.mxu0 0
  %2664 = vmatpush1.bf16.msra.mxu0 0
  %2665 = vmatprep.subr.bf16.mxu0 0
  %2666 = vmatpush1.bf16.msra.mxu0 0
  %2667 = vmatprep.subr.bf16.mxu0 0
  %2668 = vmatpush1.bf16.msra.mxu0 0
  %2669 = vmatprep.subr.bf16.mxu0 0
  %2670 = vmatpush1.bf16.msra.mxu0 0
  %2671 = vmatprep.subr.bf16.mxu0 0
  %2672 = vmatpush1.bf16.msra.mxu0 0
  %2673 = vmatprep.subr.bf16.mxu0 0
  %2674 = vmatpush1.bf16.msra.mxu0 0
  %2675 = vmatprep.subr.bf16.mxu0 0
  %2676 = vmatpush1.bf16.msra.mxu0 0
  %2677 = vmatprep.subr.bf16.mxu0 0
  %2678 = vmatpush1.bf16.msra.mxu0 0
  %2679 = vmatprep.subr.bf16.mxu0 0
  %2680 = vmatpush1.bf16.msra.mxu0 0
  %2681 = vmatprep.subr.bf16.mxu0 0
  %2682 = vmatpush1.bf16.msra.mxu0 0
  %2683 = vmatprep.subr.bf16.mxu0 0
  %2684 = vmatpush1.bf16.msra.mxu0 0
  %2685 = vmatprep.mubr.bf16.mxu0 0
  %2686 = vmatmul.mubr.bf16.gmra.mrb[0].mxu0 %v2648
  %v2687 = vpop.f32.mrb[0].mxu0
  %v2688 = vadd.f32 0.0, %v2687
  %v2689 = vpop.f32.mrb[0].mxu0
  %v2690 = vpop.f32.mrb[0].mxu0
  %v2691 = vadd.f32 0.0, %v2690
  %v2692 = vpop.f32.mrb[0].mxu0
  %2693 = vdwg.mxu0
  %v2694 = vadd.f32 %v2641, %v2688
  %v2695 = vadd.f32 %v2642, %v2691
  %2696 = vrot.lane.b32.xlu0 %v1906, 8
  %v2697 = vpop.permute.xlu0 %2696
  %2698 = vrot.lane.b32.xlu0 %v1901, 16
  %v2699 = vpop.permute.xlu0 %2698
  %v2701 = vsel %vm1912, %v2697, 0
  %v2704 = vsel %vm1916, %v2699, 0
  %2706 = vmatprep.subr.bf16.mxu0 0
  %2707 = vmatpush1.bf16.msra.mxu0 %v2704
  %2708 = vmatprep.subr.bf16.mxu0 0
  %2709 = vmatpush1.bf16.msra.mxu0 0
  %2710 = vmatprep.subr.bf16.mxu0 0
  %2711 = vmatpush1.bf16.msra.mxu0 0
  %2712 = vmatprep.subr.bf16.mxu0 0
  %2713 = vmatpush1.bf16.msra.mxu0 0
  %2714 = vmatprep.subr.bf16.mxu0 0
  %2715 = vmatpush1.bf16.msra.mxu0 0
  %2716 = vmatprep.subr.bf16.mxu0 0
  %2717 = vmatpush1.bf16.msra.mxu0 0
  %2718 = vmatprep.subr.bf16.mxu0 0
  %2719 = vmatpush1.bf16.msra.mxu0 0
  %2720 = vmatprep.subr.bf16.mxu0 0
  %2721 = vmatpush1.bf16.msra.mxu0 0
  %2722 = vmatprep.subr.bf16.mxu0 0
  %2723 = vmatpush1.bf16.msra.mxu0 0
  %2724 = vmatprep.subr.bf16.mxu0 0
  %2725 = vmatpush1.bf16.msra.mxu0 0
  %2726 = vmatprep.subr.bf16.mxu0 0
  %2727 = vmatpush1.bf16.msra.mxu0 0
  %2728 = vmatprep.subr.bf16.mxu0 0
  %2729 = vmatpush1.bf16.msra.mxu0 0
  %2730 = vmatprep.subr.bf16.mxu0 0
  %2731 = vmatpush1.bf16.msra.mxu0 0
  %2732 = vmatprep.subr.bf16.mxu0 0
  %2733 = vmatpush1.bf16.msra.mxu0 0
  %2734 = vmatprep.subr.bf16.mxu0 0
  %2735 = vmatpush1.bf16.msra.mxu0 0
  %2736 = vmatprep.subr.bf16.mxu0 0
  %2737 = vmatpush1.bf16.msra.mxu0 0
  %2738 = vmatprep.mubr.bf16.mxu0 0
  %2739 = vmatmul.mubr.bf16.gmra.mrb[0].mxu0 %v2701
  %v2740 = vpop.f32.mrb[0].mxu0
  %v2741 = vadd.f32 0.0, %v2740
  %v2742 = vpop.f32.mrb[0].mxu0
  %v2743 = vpop.f32.mrb[0].mxu0
  %v2744 = vadd.f32 0.0, %v2743
  %v2745 = vpop.f32.mrb[0].mxu0
  %2746 = vdwg.mxu0
  %v2747 = vadd.f32 %v2694, %v2741
  %v2748 = vadd.f32 %v2695, %v2744
  %vm2749 = vcmp.gt.f32.partialorder %v2747, 0.0
  %vm2750 = vcmp.gt.f32.partialorder %v2748, 0.0
  %v2751 = vmul.f32 %v2747, 0.2
  %v2752 = vmul.f32 %v2748, 0.2
  %v2753 = vsel %vm2749, %v2747, %v2751
  %v2754 = vsel %vm2750, %v2748, %v2752
  %vm2755 = vcmask 130048
  %v2757 = vsel %vm2755, %v2753, 0
  %v2760 = vsel %vm2755, %v2754, 0
  %2762 = vmatprep.subr.mxu0 %v174
  %2763 = vmatpush1.msra.mxu0 %v173
  %2764 = vmatprep.subr.mxu0 %v178
  %2765 = vmatpush1.msra.mxu0 %v177
  %2766 = vmatprep.subr.mxu0 0.0
  %2767 = vmatpush1.msra.mxu0 0.0
  %2768 = vmatprep.subr.mxu0 0.0
  %2769 = vmatpush1.msra.mxu0 0.0
  %2770 = vmatprep.subr.mxu0 0.0
  %2771 = vmatpush1.msra.mxu0 0.0
  %2772 = vmatprep.subr.mxu0 0.0
  %2773 = vmatpush1.msra.mxu0 0.0
  %2774 = vmatprep.subr.mxu0 0.0
  %2775 = vmatpush1.msra.mxu0 0.0
  %2776 = vmatprep.subr.mxu0 0.0
  %2777 = vmatpush1.msra.mxu0 0.0
  %2778 = vmatprep.subr.mxu0 0.0
  %2779 = vmatpush1.msra.mxu0 0.0
  %2780 = vmatprep.subr.mxu0 0.0
  %2781 = vmatpush1.msra.mxu0 0.0
  %2782 = vmatprep.subr.mxu0 0.0
  %2783 = vmatpush1.msra.mxu0 0.0
  %2784 = vmatprep.subr.mxu0 0.0
  %2785 = vmatpush1.msra.mxu0 0.0
  %2786 = vmatprep.subr.mxu0 0.0
  %2787 = vmatpush1.msra.mxu0 0.0
  %2788 = vmatprep.subr.mxu0 0.0
  %2789 = vmatpush1.msra.mxu0 0.0
  %2790 = vmatprep.subr.mxu0 0.0
  %2791 = vmatpush1.msra.mxu0 0.0
  %2792 = vmatprep.subr.mxu0 0.0
  %2793 = vmatpush1.msra.mxu0 0.0
  %2794 = vmatprep.subr.mxu0 0.0
  %2795 = vmatpush1.msra.mxu0 0.0
  %2796 = vmatprep.subr.mxu0 0.0
  %2797 = vmatpush1.msra.mxu0 0.0
  %2798 = vmatprep.subr.mxu0 0.0
  %2799 = vmatpush1.msra.mxu0 0.0
  %2800 = vmatprep.subr.mxu0 0.0
  %2801 = vmatpush1.msra.mxu0 0.0
  %2802 = vmatprep.subr.mxu0 0.0
  %2803 = vmatpush1.msra.mxu0 0.0
  %2804 = vmatprep.subr.mxu0 0.0
  %2805 = vmatpush1.msra.mxu0 0.0
  %2806 = vmatprep.subr.mxu0 0.0
  %2807 = vmatpush1.msra.mxu0 0.0
  %2808 = vmatprep.subr.mxu0 0.0
  %2809 = vmatpush1.msra.mxu0 0.0
  %2810 = vmatprep.subr.mxu0 0.0
  %2811 = vmatpush1.msra.mxu0 0.0
  %2812 = vmatprep.subr.mxu0 0.0
  %2813 = vmatpush1.msra.mxu0 0.0
  %2814 = vmatprep.subr.mxu0 0.0
  %2815 = vmatpush1.msra.mxu0 0.0
  %2816 = vmatprep.subr.mxu0 0.0
  %2817 = vmatpush1.msra.mxu0 0.0
  %2818 = vmatprep.subr.mxu0 0.0
  %2819 = vmatpush1.msra.mxu0 0.0
  %2820 = vmatprep.subr.mxu0 0.0
  %2821 = vmatpush1.msra.mxu0 0.0
  %2822 = vmatprep.subr.mxu0 0.0
  %2823 = vmatpush1.msra.mxu0 0.0
  %2824 = vmatprep.subr.mxu0 0.0
  %2825 = vmatpush1.msra.mxu0 0.0
  %2826 = vmatprep.mubr.f32.mxu0 0.0
  %2827 = vmatmul.mubr.f32.gmra.mrb[0].mxu0 %v2757
  %v2828 = vpop.f32.mrb[0].mxu0
  %v2829 = vadd.f32 0.0, %v2828
  %v2830 = vpop.f32.mrb[0].mxu0
  %v2831 = vadd.f32 0.0, %v2830
  %2832 = vmatprep.mubr.f32.mxu0 0.0
  %2833 = vmatmul.mubr.f32.gmra.mrb[0].mxu0 %v2760
  %v2834 = vpop.f32.mrb[0].mxu0
  %v2835 = vpop.f32.mrb[0].mxu0
  %2836 = vdwg.mxu0
  %2837 = vmatprep.subr.mxu0 %v176
  %2838 = vmatpush1.msra.mxu0 %v175
  %2839 = vmatprep.subr.mxu0 %v180
  %2840 = vmatpush1.msra.mxu0 %v179
  %2841 = vmatprep.subr.mxu0 0.0
  %2842 = vmatpush1.msra.mxu0 0.0
  %2843 = vmatprep.subr.mxu0 0.0
  %2844 = vmatpush1.msra.mxu0 0.0
  %2845 = vmatprep.subr.mxu0 0.0
  %2846 = vmatpush1.msra.mxu0 0.0
  %2847 = vmatprep.subr.mxu0 0.0
  %2848 = vmatpush1.msra.mxu0 0.0
  %2849 = vmatprep.subr.mxu0 0.0
  %2850 = vmatpush1.msra.mxu0 0.0
  %2851 = vmatprep.subr.mxu0 0.0
  %2852 = vmatpush1.msra.mxu0 0.0
  %2853 = vmatprep.subr.mxu0 0.0
  %2854 = vmatpush1.msra.mxu0 0.0
  %2855 = vmatprep.subr.mxu0 0.0
  %2856 = vmatpush1.msra.mxu0 0.0
  %2857 = vmatprep.subr.mxu0 0.0
  %2858 = vmatpush1.msra.mxu0 0.0
  %2859 = vmatprep.subr.mxu0 0.0
  %2860 = vmatpush1.msra.mxu0 0.0
  %2861 = vmatprep.subr.mxu0 0.0
  %2862 = vmatpush1.msra.mxu0 0.0
  %2863 = vmatprep.subr.mxu0 0.0
  %2864 = vmatpush1.msra.mxu0 0.0
  %2865 = vmatprep.subr.mxu0 0.0
  %2866 = vmatpush1.msra.mxu0 0.0
  %2867 = vmatprep.subr.mxu0 0.0
  %2868 = vmatpush1.msra.mxu0 0.0
  %2869 = vmatprep.subr.mxu0 0.0
  %2870 = vmatpush1.msra.mxu0 0.0
  %2871 = vmatprep.subr.mxu0 0.0
  %2872 = vmatpush1.msra.mxu0 0.0
  %2873 = vmatprep.subr.mxu0 0.0
  %2874 = vmatpush1.msra.mxu0 0.0
  %2875 = vmatprep.subr.mxu0 0.0
  %2876 = vmatpush1.msra.mxu0 0.0
  %2877 = vmatprep.subr.mxu0 0.0
  %2878 = vmatpush1.msra.mxu0 0.0
  %2879 = vmatprep.subr.mxu0 0.0
  %2880 = vmatpush1.msra.mxu0 0.0
  %2881 = vmatprep.subr.mxu0 0.0
  %2882 = vmatpush1.msra.mxu0 0.0
  %2883 = vmatprep.subr.mxu0 0.0
  %2884 = vmatpush1.msra.mxu0 0.0
  %2885 = vmatprep.subr.mxu0 0.0
  %2886 = vmatpush1.msra.mxu0 0.0
  %2887 = vmatprep.subr.mxu0 0.0
  %2888 = vmatpush1.msra.mxu0 0.0
  %2889 = vmatprep.subr.mxu0 0.0
  %2890 = vmatpush1.msra.mxu0 0.0
  %2891 = vmatprep.subr.mxu0 0.0
  %2892 = vmatpush1.msra.mxu0 0.0
  %2893 = vmatprep.subr.mxu0 0.0
  %2894 = vmatpush1.msra.mxu0 0.0
  %2895 = vmatprep.subr.mxu0 0.0
  %2896 = vmatpush1.msra.mxu0 0.0
  %2897 = vmatprep.subr.mxu0 0.0
  %2898 = vmatpush1.msra.mxu0 0.0
  %2899 = vmatprep.subr.mxu0 0.0
  %2900 = vmatpush1.msra.mxu0 0.0
  %2901 = vmatprep.mubr.f32.mxu0 0.0
  %2902 = vmatmul.mubr.f32.gmra.mrb[0].mxu0 %v2757
  %v2903 = vpop.f32.mrb[0].mxu0
  %v2904 = vpop.f32.mrb[0].mxu0
  %2905 = vmatprep.mubr.f32.mxu0 0.0
  %2906 = vmatmul.mubr.f32.gmra.mrb[0].mxu0 %v2760
  %v2907 = vpop.f32.mrb[0].mxu0
  %v2908 = vadd.f32 0.0, %v2907
  %v2909 = vpop.f32.mrb[0].mxu0
  %v2910 = vadd.f32 0.0, %v2909
  %2911 = vdwg.mxu0
  %v2912 = vadd.f32 %v2829, 0.0
  %v2914 = vrot.slane %v2829, 1
  %2915 = vrot.lane.b32.xlu0 %v2914, 96
  %v2916 = vpop.permute.xlu0 %2915
  %v2918 = vadd.f32 %v2912, %v2916
  %v2919 = vrot.slane %v2829, 2
  %2920 = vrot.lane.b32.xlu0 %v2919, 64
  %v2921 = vpop.permute.xlu0 %2920
  %v2923 = vadd.f32 %v2918, %v2921
  %v2924 = vrot.slane %v2829, 3
  %2925 = vrot.lane.b32.xlu0 %v2924, 32
  %v2926 = vpop.permute.xlu0 %2925
  %v2928 = vadd.f32 %v2923, %v2926
  %v2930 = vrot.slane %v2831, 4
  %v2932 = vadd.f32 %v2928, %v2930
  %v2933 = vrot.slane %v2831, 5
  %2934 = vrot.lane.b32.xlu0 %v2933, 96
  %v2935 = vpop.permute.xlu0 %2934
  %v2937 = vadd.f32 %v2932, %v2935
  %v2938 = vrot.slane %v2831, 6
  %2939 = vrot.lane.b32.xlu0 %v2938, 64
  %v2940 = vpop.permute.xlu0 %2939
  %v2942 = vadd.f32 %v2937, %v2940
  %v2943 = vrot.slane %v2831, 7
  %2944 = vrot.lane.b32.xlu0 %v2943, 32
  %v2945 = vpop.permute.xlu0 %2944
  %v2947 = vadd.f32 %v2942, %v2945
  %v2948 = vadd.f32 %v2947, %v2908
  %v2950 = vrot.slane %v2908, 1
  %2951 = vrot.lane.b32.xlu0 %v2950, 96
  %v2952 = vpop.permute.xlu0 %2951
  %v2954 = vadd.f32 %v2948, %v2952
  %v2955 = vrot.slane %v2908, 2
  %2956 = vrot.lane.b32.xlu0 %v2955, 64
  %v2957 = vpop.permute.xlu0 %2956
  %v2959 = vadd.f32 %v2954, %v2957
  %v2960 = vrot.slane %v2908, 3
  %2961 = vrot.lane.b32.xlu0 %v2960, 32
  %v2962 = vpop.permute.xlu0 %2961
  %v2964 = vadd.f32 %v2959, %v2962
  %v2966 = vrot.slane %v2910, 4
  %v2968 = vadd.f32 %v2964, %v2966
  %v2969 = vrot.slane %v2910, 5
  %2970 = vrot.lane.b32.xlu0 %v2969, 96
  %v2971 = vpop.permute.xlu0 %2970
  %v2973 = vadd.f32 %v2968, %v2971
  %v2974 = vrot.slane %v2910, 6
  %2975 = vrot.lane.b32.xlu0 %v2974, 64
  %v2976 = vpop.permute.xlu0 %2975
  %v2978 = vadd.f32 %v2973, %v2976
  %v2979 = vrot.slane %v2910, 7
  %2980 = vrot.lane.b32.xlu0 %v2979, 32
  %v2981 = vpop.permute.xlu0 %2980
  %v2983 = vadd.f32 %v2978, %v2981
  %v2984 = vadd.f32 %v2983, %v181
  %vm2985 = vcmp.gt.f32.partialorder %v2984, 0.0
  %v2986 = vmul.f32 %v2984, 0.2
  %v2987 = vsel %vm2985, %v2984, %v2986
  %v2988 = vmul.f32 %v2987, %v182
  %vm2989 = vcmask 253952
  %v2990 = vsel %vm2989, %v2988, 0.0
  %2991 = vadd.xlane.f32.xlu0 %v2990
  %v2992 = vpop.xlane.xlu0 %2991
  %v2993 = vstv %s183
  %v2994 = vadd.f32 %v2992, %v2993
  %v2995 = vsub.f32 0.0, %v2994
  %v2996 = vmul.f32 %v2995, 1.442695
  %v2997 = vpow.pop %v2996
  %v2998 = vadd.f32 %v2997, 1.0
  %v2999 = vrcp.pop %v2998
  %vm3000 = vcmask 0
  %3001 = vst.msk [vmem:[%s9] sm:$0x1] %vm3000, %v2999
  %s3002 = scalar_lea.vmem %s0, 8
  %v3003 = vld [vmem:[%s3002] sm:$0xff]
  %v3005 = vcombine.high %v3003, %v3003
  %v3007 = vpack.c.bf16 %v3003, %v3003
  %v3008 = vpack.c.bf16 %v3005, %v3005
  %3009 = vmatprep.subr.bf16.mxu0 %v575
  %3010 = vmatpush1.bf16.msra.mxu0 %v574
  %3011 = vmatprep.subr.bf16.mxu0 %v583
  %3012 = vmatpush1.bf16.msra.mxu0 %v582
  %3013 = vmatprep.subr.bf16.mxu0 %v591
  %3014 = vmatpush1.bf16.msra.mxu0 %v590
  %3015 = vmatprep.subr.bf16.mxu0 %v599
  %3016 = vmatpush1.bf16.msra.mxu0 %v598
  %3017 = vmatprep.subr.bf16.mxu0 %v607
  %3018 = vmatpush1.bf16.msra.mxu0 %v606
  %3019 = vmatprep.subr.bf16.mxu0 %v615
  %3020 = vmatpush1.bf16.msra.mxu0 %v614
  %3021 = vmatprep.subr.bf16.mxu0 %v623
  %3022 = vmatpush1.bf16.msra.mxu0 %v622
  %3023 = vmatprep.subr.bf16.mxu0 %v631
  %3024 = vmatpush1.bf16.msra.mxu0 %v630
  %3025 = vmatprep.subr.bf16.mxu0 %v639
  %3026 = vmatpush1.bf16.msra.mxu0 %v638
  %3027 = vmatprep.subr.bf16.mxu0 %v647
  %3028 = vmatpush1.bf16.msra.mxu0 %v646
  %3029 = vmatprep.subr.bf16.mxu0 %v655
  %3030 = vmatpush1.bf16.msra.mxu0 %v654
  %3031 = vmatprep.subr.bf16.mxu0 %v663
  %3032 = vmatpush1.bf16.msra.mxu0 %v662
  %3033 = vmatprep.subr.bf16.mxu0 %v671
  %3034 = vmatpush1.bf16.msra.mxu0 %v670
  %3035 = vmatprep.subr.bf16.mxu0 %v679
  %3036 = vmatpush1.bf16.msra.mxu0 %v678
  %3037 = vmatprep.subr.bf16.mxu0 %v687
  %3038 = vmatpush1.bf16.msra.mxu0 %v686
  %3039 = vmatprep.subr.bf16.mxu0 %v695
  %3040 = vmatpush1.bf16.msra.mxu0 %v694
  %3041 = vmatprep.mubr.bf16.mxu0 %v3008
  %3042 = vmatmul.mubr.bf16.gmra.mrb[0].mxu0 %v3007
  %v3043 = vpop.f32.mrb[0].mxu0
  %v3044 = vadd.f32 0.0, %v3043
  %v3045 = vpop.f32.mrb[0].mxu0
  %v3046 = vadd.f32 0.0, %v3045
  %v3047 = vpop.f32.mrb[0].mxu0
  %v3048 = vpop.f32.mrb[0].mxu0
  %3049 = vdwg.mxu0
  %3050 = vmatprep.subr.bf16.mxu0 %v577
  %3051 = vmatpush1.bf16.msra.mxu0 %v576
  %3052 = vmatprep.subr.bf16.mxu0 %v585
  %3053 = vmatpush1.bf16.msra.mxu0 %v584
  %3054 = vmatprep.subr.bf16.mxu0 %v593
  %3055 = vmatpush1.bf16.msra.mxu0 %v592
  %3056 = vmatprep.subr.bf16.mxu0 %v601
  %3057 = vmatpush1.bf16.msra.mxu0 %v600
  %3058 = vmatprep.subr.bf16.mxu0 %v609
  %3059 = vmatpush1.bf16.msra.mxu0 %v608
  %3060 = vmatprep.subr.bf16.mxu0 %v617
  %3061 = vmatpush1.bf16.msra.mxu0 %v616
  %3062 = vmatprep.subr.bf16.mxu0 %v625
  %3063 = vmatpush1.bf16.msra.mxu0 %v624
  %3064 = vmatprep.subr.bf16.mxu0 %v633
  %3065 = vmatpush1.bf16.msra.mxu0 %v632
  %3066 = vmatprep.subr.bf16.mxu0 %v641
  %3067 = vmatpush1.bf16.msra.mxu0 %v640
  %3068 = vmatprep.subr.bf16.mxu0 %v649
  %3069 = vmatpush1.bf16.msra.mxu0 %v648
  %3070 = vmatprep.subr.bf16.mxu0 %v657
  %3071 = vmatpush1.bf16.msra.mxu0 %v656
  %3072 = vmatprep.subr.bf16.mxu0 %v665
  %3073 = vmatpush1.bf16.msra.mxu0 %v664
  %3074 = vmatprep.subr.bf16.mxu0 %v673
  %3075 = vmatpush1.bf16.msra.mxu0 %v672
  %3076 = vmatprep.subr.bf16.mxu0 %v681
  %3077 = vmatpush1.bf16.msra.mxu0 %v680
  %3078 = vmatprep.subr.bf16.mxu0 %v689
  %3079 = vmatpush1.bf16.msra.mxu0 %v688
  %3080 = vmatprep.subr.bf16.mxu0 %v697
  %3081 = vmatpush1.bf16.msra.mxu0 %v696
  %3082 = vmatprep.mubr.bf16.mxu0 %v3008
  %3083 = vmatmul.mubr.bf16.gmra.mrb[0].mxu0 %v3007
  %v3084 = vpop.f32.mrb[0].mxu0
  %v3085 = vadd.f32 0.0, %v3084
  %v3086 = vpop.f32.mrb[0].mxu0
  %v3087 = vadd.f32 0.0, %v3086
  %v3088 = vpop.f32.mrb[0].mxu0
  %v3089 = vpop.f32.mrb[0].mxu0
  %3090 = vdwg.mxu0
  %3091 = vmatprep.subr.bf16.mxu0 %v579
  %3092 = vmatpush1.bf16.msra.mxu0 %v578
  %3093 = vmatprep.subr.bf16.mxu0 %v587
  %3094 = vmatpush1.bf16.msra.mxu0 %v586
  %3095 = vmatprep.subr.bf16.mxu0 %v595
  %3096 = vmatpush1.bf16.msra.mxu0 %v594
  %3097 = vmatprep.subr.bf16.mxu0 %v603
  %3098 = vmatpush1.bf16.msra.mxu0 %v602
  %3099 = vmatprep.subr.bf16.mxu0 %v611
  %3100 = vmatpush1.bf16.msra.mxu0 %v610
  %3101 = vmatprep.subr.bf16.mxu0 %v619
  %3102 = vmatpush1.bf16.msra.mxu0 %v618
  %3103 = vmatprep.subr.bf16.mxu0 %v627
  %3104 = vmatpush1.bf16.msra.mxu0 %v626
  %3105 = vmatprep.subr.bf16.mxu0 %v635
  %3106 = vmatpush1.bf16.msra.mxu0 %v634
  %3107 = vmatprep.subr.bf16.mxu0 %v643
  %3108 = vmatpush1.bf16.msra.mxu0 %v642
  %3109 = vmatprep.subr.bf16.mxu0 %v651
  %3110 = vmatpush1.bf16.msra.mxu0 %v650
  %3111 = vmatprep.subr.bf16.mxu0 %v659
  %3112 = vmatpush1.bf16.msra.mxu0 %v658
  %3113 = vmatprep.subr.bf16.mxu0 %v667
  %3114 = vmatpush1.bf16.msra.mxu0 %v666
  %3115 = vmatprep.subr.bf16.mxu0 %v675
  %3116 = vmatpush1.bf16.msra.mxu0 %v674
  %3117 = vmatprep.subr.bf16.mxu0 %v683
  %3118 = vmatpush1.bf16.msra.mxu0 %v682
  %3119 = vmatprep.subr.bf16.mxu0 %v691
  %3120 = vmatpush1.bf16.msra.mxu0 %v690
  %3121 = vmatprep.subr.bf16.mxu0 %v699
  %3122 = vmatpush1.bf16.msra.mxu0 %v698
  %3123 = vmatprep.mubr.bf16.mxu0 %v3008
  %3124 = vmatmul.mubr.bf16.gmra.mrb[0].mxu0 %v3007
  %v3125 = vpop.f32.mrb[0].mxu0
  %v3126 = vadd.f32 0.0, %v3125
  %v3127 = vpop.f32.mrb[0].mxu0
  %v3128 = vadd.f32 0.0, %v3127
  %v3129 = vpop.f32.mrb[0].mxu0
  %v3130 = vpop.f32.mrb[0].mxu0
  %3131 = vdwg.mxu0
  %3132 = vmatprep.subr.bf16.mxu0 %v581
  %3133 = vmatpush1.bf16.msra.mxu0 %v580
  %3134 = vmatprep.subr.bf16.mxu0 %v589
  %3135 = vmatpush1.bf16.msra.mxu0 %v588
  %3136 = vmatprep.subr.bf16.mxu0 %v597
  %3137 = vmatpush1.bf16.msra.mxu0 %v596
  %3138 = vmatprep.subr.bf16.mxu0 %v605
  %3139 = vmatpush1.bf16.msra.mxu0 %v604
  %3140 = vmatprep.subr.bf16.mxu0 %v613
  %3141 = vmatpush1.bf16.msra.mxu0 %v612
  %3142 = vmatprep.subr.bf16.mxu0 %v621
  %3143 = vmatpush1.bf16.msra.mxu0 %v620
  %3144 = vmatprep.subr.bf16.mxu0 %v629
  %3145 = vmatpush1.bf16.msra.mxu0 %v628
  %3146 = vmatprep.subr.bf16.mxu0 %v637
  %3147 = vmatpush1.bf16.msra.mxu0 %v636
  %3148 = vmatprep.subr.bf16.mxu0 %v645
  %3149 = vmatpush1.bf16.msra.mxu0 %v644
  %3150 = vmatprep.subr.bf16.mxu0 %v653
  %3151 = vmatpush1.bf16.msra.mxu0 %v652
  %3152 = vmatprep.subr.bf16.mxu0 %v661
  %3153 = vmatpush1.bf16.msra.mxu0 %v660
  %3154 = vmatprep.subr.bf16.mxu0 %v669
  %3155 = vmatpush1.bf16.msra.mxu0 %v668
  %3156 = vmatprep.subr.bf16.mxu0 %v677
  %3157 = vmatpush1.bf16.msra.mxu0 %v676
  %3158 = vmatprep.subr.bf16.mxu0 %v685
  %3159 = vmatpush1.bf16.msra.mxu0 %v684
  %3160 = vmatprep.subr.bf16.mxu0 %v693
  %3161 = vmatpush1.bf16.msra.mxu0 %v692
  %3162 = vmatprep.subr.bf16.mxu0 %v701
  %3163 = vmatpush1.bf16.msra.mxu0 %v700
  %3164 = vmatprep.mubr.bf16.mxu0 %v3008
  %3165 = vmatmul.mubr.bf16.gmra.mrb[0].mxu0 %v3007
  %v3166 = vpop.f32.mrb[0].mxu0
  %v3167 = vadd.f32 0.0, %v3166
  %v3168 = vpop.f32.mrb[0].mxu0
  %v3169 = vadd.f32 0.0, %v3168
  %v3170 = vpop.f32.mrb[0].mxu0
  %v3171 = vpop.f32.mrb[0].mxu0
  %3172 = vdwg.mxu0
  %v3173 = vpack.c.bf16 %v3044, %v3044
  %v3174 = vpack.c.bf16 %v3046, %v3046
  %v3175 = vpack.c.bf16 %v3085, %v3085
  %v3176 = vpack.c.bf16 %v3087, %v3087
  %v3177 = vpack.c.bf16 %v3126, %v3126
  %v3178 = vpack.c.bf16 %v3128, %v3128
  %v3179 = vpack.c.bf16 %v3167, %v3167
  %v3180 = vpack.c.bf16 %v3169, %v3169
  %3182 = vrot.lane.b32.xlu0 %v3173, 64
  %v3183 = vpop.permute.xlu0 %3182
  %v3185 = vsel %vm1014, %v3183, 0
  %3187 = vmatprep.subr.bf16.mxu0 0
  %3188 = vmatpush1.bf16.msra.mxu0 %v3185
  %3189 = vmatprep.subr.bf16.mxu0 0
  %3190 = vmatpush1.bf16.msra.mxu0 0
  %3191 = vmatprep.subr.bf16.mxu0 0
  %3192 = vmatpush1.bf16.msra.mxu0 0
  %3193 = vmatprep.subr.bf16.mxu0 0
  %3194 = vmatpush1.bf16.msra.mxu0 0
  %3195 = vmatprep.subr.bf16.mxu0 0
  %3196 = vmatpush1.bf16.msra.mxu0 0
  %3197 = vmatprep.subr.bf16.mxu0 0
  %3198 = vmatpush1.bf16.msra.mxu0 0
  %3199 = vmatprep.subr.bf16.mxu0 0
  %3200 = vmatpush1.bf16.msra.mxu0 0
  %3201 = vmatprep.subr.bf16.mxu0 0
  %3202 = vmatpush1.bf16.msra.mxu0 0
  %3203 = vmatprep.subr.bf16.mxu0 0
  %3204 = vmatpush1.bf16.msra.mxu0 0
  %3205 = vmatprep.subr.bf16.mxu0 0
  %3206 = vmatpush1.bf16.msra.mxu0 0
  %3207 = vmatprep.subr.bf16.mxu0 0
  %3208 = vmatpush1.bf16.msra.mxu0 0
  %3209 = vmatprep.subr.bf16.mxu0 0
  %3210 = vmatpush1.bf16.msra.mxu0 0
  %3211 = vmatprep.subr.bf16.mxu0 0
  %3212 = vmatpush1.bf16.msra.mxu0 0
  %3213 = vmatprep.subr.bf16.mxu0 0
  %3214 = vmatpush1.bf16.msra.mxu0 0
  %3215 = vmatprep.subr.bf16.mxu0 0
  %3216 = vmatpush1.bf16.msra.mxu0 0
  %3217 = vmatprep.subr.bf16.mxu0 0
  %3218 = vmatpush1.bf16.msra.mxu0 0
  %3219 = vmatprep.mubr.bf16.mxu0 0
  %3220 = vmatmul.mubr.bf16.gmra.mrb[0].mxu0 %v1012
  %v3221 = vpop.f32.mrb[0].mxu0
  %v3222 = vadd.f32 0.0, %v3221
  %v3223 = vpop.f32.mrb[0].mxu0
  %v3224 = vpop.f32.mrb[0].mxu0
  %v3225 = vpop.f32.mrb[0].mxu0
  %3226 = vdwg.mxu0
  %v3228 = vsel %vm1014, %v3173, 0
  %3230 = vmatprep.subr.bf16.mxu0 0
  %3231 = vmatpush1.bf16.msra.mxu0 %v3228
  %3232 = vmatprep.subr.bf16.mxu0 0
  %3233 = vmatpush1.bf16.msra.mxu0 0
  %3234 = vmatprep.subr.bf16.mxu0 0
  %3235 = vmatpush1.bf16.msra.mxu0 0
  %3236 = vmatprep.subr.bf16.mxu0 0
  %3237 = vmatpush1.bf16.msra.mxu0 0
  %3238 = vmatprep.subr.bf16.mxu0 0
  %3239 = vmatpush1.bf16.msra.mxu0 0
  %3240 = vmatprep.subr.bf16.mxu0 0
  %3241 = vmatpush1.bf16.msra.mxu0 0
  %3242 = vmatprep.subr.bf16.mxu0 0
  %3243 = vmatpush1.bf16.msra.mxu0 0
  %3244 = vmatprep.subr.bf16.mxu0 0
  %3245 = vmatpush1.bf16.msra.mxu0 0
  %3246 = vmatprep.subr.bf16.mxu0 0
  %3247 = vmatpush1.bf16.msra.mxu0 0
  %3248 = vmatprep.subr.bf16.mxu0 0
  %3249 = vmatpush1.bf16.msra.mxu0 0
  %3250 = vmatprep.subr.bf16.mxu0 0
  %3251 = vmatpush1.bf16.msra.mxu0 0
  %3252 = vmatprep.subr.bf16.mxu0 0
  %3253 = vmatpush1.bf16.msra.mxu0 0
  %3254 = vmatprep.subr.bf16.mxu0 0
  %3255 = vmatpush1.bf16.msra.mxu0 0
  %3256 = vmatprep.subr.bf16.mxu0 0
  %3257 = vmatpush1.bf16.msra.mxu0 0
  %3258 = vmatprep.subr.bf16.mxu0 0
  %3259 = vmatpush1.bf16.msra.mxu0 0
  %3260 = vmatprep.subr.bf16.mxu0 0
  %3261 = vmatpush1.bf16.msra.mxu0 0
  %3262 = vmatprep.mubr.bf16.mxu0 0
  %3263 = vmatmul.mubr.bf16.gmra.mrb[0].mxu0 %v1059
  %v3264 = vpop.f32.mrb[0].mxu0
  %v3265 = vadd.f32 %v3222, %v3264
  %v3266 = vpop.f32.mrb[0].mxu0
  %v3267 = vpop.f32.mrb[0].mxu0
  %v3268 = vpop.f32.mrb[0].mxu0
  %3269 = vdwg.mxu0
  %v3271 = vsel %vm1014, %v3174, 0
  %3273 = vmatprep.subr.bf16.mxu0 0
  %3274 = vmatpush1.bf16.msra.mxu0 %v3271
  %3275 = vmatprep.subr.bf16.mxu0 0
  %3276 = vmatpush1.bf16.msra.mxu0 0
  %3277 = vmatprep.subr.bf16.mxu0 0
  %3278 = vmatpush1.bf16.msra.mxu0 0
  %3279 = vmatprep.subr.bf16.mxu0 0
  %3280 = vmatpush1.bf16.msra.mxu0 0
  %3281 = vmatprep.subr.bf16.mxu0 0
  %3282 = vmatpush1.bf16.msra.mxu0 0
  %3283 = vmatprep.subr.bf16.mxu0 0
  %3284 = vmatpush1.bf16.msra.mxu0 0
  %3285 = vmatprep.subr.bf16.mxu0 0
  %3286 = vmatpush1.bf16.msra.mxu0 0
  %3287 = vmatprep.subr.bf16.mxu0 0
  %3288 = vmatpush1.bf16.msra.mxu0 0
  %3289 = vmatprep.subr.bf16.mxu0 0
  %3290 = vmatpush1.bf16.msra.mxu0 0
  %3291 = vmatprep.subr.bf16.mxu0 0
  %3292 = vmatpush1.bf16.msra.mxu0 0
  %3293 = vmatprep.subr.bf16.mxu0 0
  %3294 = vmatpush1.bf16.msra.mxu0 0
  %3295 = vmatprep.subr.bf16.mxu0 0
  %3296 = vmatpush1.bf16.msra.mxu0 0
  %3297 = vmatprep.subr.bf16.mxu0 0
  %3298 = vmatpush1.bf16.msra.mxu0 0
  %3299 = vmatprep.subr.bf16.mxu0 0
  %3300 = vmatpush1.bf16.msra.mxu0 0
  %3301 = vmatprep.subr.bf16.mxu0 0
  %3302 = vmatpush1.bf16.msra.mxu0 0
  %3303 = vmatprep.subr.bf16.mxu0 0
  %3304 = vmatpush1.bf16.msra.mxu0 0
  %3305 = vmatprep.mubr.bf16.mxu0 0
  %3306 = vmatmul.mubr.bf16.gmra.mrb[0].mxu0 %v1107
  %v3307 = vpop.f32.mrb[0].mxu0
  %v3308 = vadd.f32 0.0, %v3307
  %v3309 = vpop.f32.mrb[0].mxu0
  %v3310 = vpop.f32.mrb[0].mxu0
  %v3311 = vpop.f32.mrb[0].mxu0
  %3312 = vdwg.mxu0
  %v3313 = vadd.f32 %v3265, %v3308
  %3315 = vrot.lane.b32.xlu0 %v3174, 64
  %v3316 = vpop.permute.xlu0 %3315
  %v3318 = vsel %vm1014, %v3316, 0
  %3320 = vmatprep.subr.bf16.mxu0 0
  %3321 = vmatpush1.bf16.msra.mxu0 %v3318
  %3322 = vmatprep.subr.bf16.mxu0 0
  %3323 = vmatpush1.bf16.msra.mxu0 0
  %3324 = vmatprep.subr.bf16.mxu0 0
  %3325 = vmatpush1.bf16.msra.mxu0 0
  %3326 = vmatprep.subr.bf16.mxu0 0
  %3327 = vmatpush1.bf16.msra.mxu0 0
  %3328 = vmatprep.subr.bf16.mxu0 0
  %3329 = vmatpush1.bf16.msra.mxu0 0
  %3330 = vmatprep.subr.bf16.mxu0 0
  %3331 = vmatpush1.bf16.msra.mxu0 0
  %3332 = vmatprep.subr.bf16.mxu0 0
  %3333 = vmatpush1.bf16.msra.mxu0 0
  %3334 = vmatprep.subr.bf16.mxu0 0
  %3335 = vmatpush1.bf16.msra.mxu0 0
  %3336 = vmatprep.subr.bf16.mxu0 0
  %3337 = vmatpush1.bf16.msra.mxu0 0
  %3338 = vmatprep.subr.bf16.mxu0 0
  %3339 = vmatpush1.bf16.msra.mxu0 0
  %3340 = vmatprep.subr.bf16.mxu0 0
  %3341 = vmatpush1.bf16.msra.mxu0 0
  %3342 = vmatprep.subr.bf16.mxu0 0
  %3343 = vmatpush1.bf16.msra.mxu0 0
  %3344 = vmatprep.subr.bf16.mxu0 0
  %3345 = vmatpush1.bf16.msra.mxu0 0
  %3346 = vmatprep.subr.bf16.mxu0 0
  %3347 = vmatpush1.bf16.msra.mxu0 0
  %3348 = vmatprep.subr.bf16.mxu0 0
  %3349 = vmatpush1.bf16.msra.mxu0 0
  %3350 = vmatprep.subr.bf16.mxu0 0
  %3351 = vmatpush1.bf16.msra.mxu0 0
  %3352 = vmatprep.mubr.bf16.mxu0 0
  %3353 = vmatmul.mubr.bf16.gmra.mrb[0].mxu0 %v1159
  %v3354 = vpop.f32.mrb[0].mxu0
  %v3355 = vadd.f32 0.0, %v3354
  %v3356 = vpop.f32.mrb[0].mxu0
  %v3357 = vpop.f32.mrb[0].mxu0
  %v3358 = vpop.f32.mrb[0].mxu0
  %3359 = vdwg.mxu0
  %v3360 = vadd.f32 %v3313, %v3355
  %v3362 = vsel %vm1014, %v3175, 0
  %3364 = vmatprep.subr.bf16.mxu0 0
  %3365 = vmatpush1.bf16.msra.mxu0 %v3362
  %3366 = vmatprep.subr.bf16.mxu0 0
  %3367 = vmatpush1.bf16.msra.mxu0 0
  %3368 = vmatprep.subr.bf16.mxu0 0
  %3369 = vmatpush1.bf16.msra.mxu0 0
  %3370 = vmatprep.subr.bf16.mxu0 0
  %3371 = vmatpush1.bf16.msra.mxu0 0
  %3372 = vmatprep.subr.bf16.mxu0 0
  %3373 = vmatpush1.bf16.msra.mxu0 0
  %3374 = vmatprep.subr.bf16.mxu0 0
  %3375 = vmatpush1.bf16.msra.mxu0 0
  %3376 = vmatprep.subr.bf16.mxu0 0
  %3377 = vmatpush1.bf16.msra.mxu0 0
  %3378 = vmatprep.subr.bf16.mxu0 0
  %3379 = vmatpush1.bf16.msra.mxu0 0
  %3380 = vmatprep.subr.bf16.mxu0 0
  %3381 = vmatpush1.bf16.msra.mxu0 0
  %3382 = vmatprep.subr.bf16.mxu0 0
  %3383 = vmatpush1.bf16.msra.mxu0 0
  %3384 = vmatprep.subr.bf16.mxu0 0
  %3385 = vmatpush1.bf16.msra.mxu0 0
  %3386 = vmatprep.subr.bf16.mxu0 0
  %3387 = vmatpush1.bf16.msra.mxu0 0
  %3388 = vmatprep.subr.bf16.mxu0 0
  %3389 = vmatpush1.bf16.msra.mxu0 0
  %3390 = vmatprep.subr.bf16.mxu0 0
  %3391 = vmatpush1.bf16.msra.mxu0 0
  %3392 = vmatprep.subr.bf16.mxu0 0
  %3393 = vmatpush1.bf16.msra.mxu0 0
  %3394 = vmatprep.subr.bf16.mxu0 0
  %3395 = vmatpush1.bf16.msra.mxu0 0
  %3396 = vmatprep.mubr.bf16.mxu0 0
  %3397 = vmatmul.mubr.bf16.gmra.mrb[0].mxu0 %v1208
  %v3398 = vpop.f32.mrb[0].mxu0
  %v3399 = vadd.f32 0.0, %v3398
  %v3400 = vpop.f32.mrb[0].mxu0
  %v3401 = vpop.f32.mrb[0].mxu0
  %v3402 = vpop.f32.mrb[0].mxu0
  %3403 = vdwg.mxu0
  %v3404 = vadd.f32 %v3360, %v3399
  %3406 = vrot.lane.b32.xlu0 %v3175, 64
  %v3407 = vpop.permute.xlu0 %3406
  %v3409 = vsel %vm1014, %v3407, 0
  %3411 = vmatprep.subr.bf16.mxu0 0
  %3412 = vmatpush1.bf16.msra.mxu0 %v3409
  %3413 = vmatprep.subr.bf16.mxu0 0
  %3414 = vmatpush1.bf16.msra.mxu0 0
  %3415 = vmatprep.subr.bf16.mxu0 0
  %3416 = vmatpush1.bf16.msra.mxu0 0
  %3417 = vmatprep.subr.bf16.mxu0 0
  %3418 = vmatpush1.bf16.msra.mxu0 0
  %3419 = vmatprep.subr.bf16.mxu0 0
  %3420 = vmatpush1.bf16.msra.mxu0 0
  %3421 = vmatprep.subr.bf16.mxu0 0
  %3422 = vmatpush1.bf16.msra.mxu0 0
  %3423 = vmatprep.subr.bf16.mxu0 0
  %3424 = vmatpush1.bf16.msra.mxu0 0
  %3425 = vmatprep.subr.bf16.mxu0 0
  %3426 = vmatpush1.bf16.msra.mxu0 0
  %3427 = vmatprep.subr.bf16.mxu0 0
  %3428 = vmatpush1.bf16.msra.mxu0 0
  %3429 = vmatprep.subr.bf16.mxu0 0
  %3430 = vmatpush1.bf16.msra.mxu0 0
  %3431 = vmatprep.subr.bf16.mxu0 0
  %3432 = vmatpush1.bf16.msra.mxu0 0
  %3433 = vmatprep.subr.bf16.mxu0 0
  %3434 = vmatpush1.bf16.msra.mxu0 0
  %3435 = vmatprep.subr.bf16.mxu0 0
  %3436 = vmatpush1.bf16.msra.mxu0 0
  %3437 = vmatprep.subr.bf16.mxu0 0
  %3438 = vmatpush1.bf16.msra.mxu0 0
  %3439 = vmatprep.subr.bf16.mxu0 0
  %3440 = vmatpush1.bf16.msra.mxu0 0
  %3441 = vmatprep.subr.bf16.mxu0 0
  %3442 = vmatpush1.bf16.msra.mxu0 0
  %3443 = vmatprep.mubr.bf16.mxu0 0
  %3444 = vmatmul.mubr.bf16.gmra.mrb[0].mxu0 %v1260
  %v3445 = vpop.f32.mrb[0].mxu0
  %v3446 = vadd.f32 0.0, %v3445
  %v3447 = vpop.f32.mrb[0].mxu0
  %v3448 = vpop.f32.mrb[0].mxu0
  %v3449 = vpop.f32.mrb[0].mxu0
  %3450 = vdwg.mxu0
  %v3451 = vadd.f32 %v3404, %v3446
  %v3453 = vsel %vm1014, %v3176, 0
  %3455 = vmatprep.subr.bf16.mxu0 0
  %3456 = vmatpush1.bf16.msra.mxu0 %v3453
  %3457 = vmatprep.subr.bf16.mxu0 0
  %3458 = vmatpush1.bf16.msra.mxu0 0
  %3459 = vmatprep.subr.bf16.mxu0 0
  %3460 = vmatpush1.bf16.msra.mxu0 0
  %3461 = vmatprep.subr.bf16.mxu0 0
  %3462 = vmatpush1.bf16.msra.mxu0 0
  %3463 = vmatprep.subr.bf16.mxu0 0
  %3464 = vmatpush1.bf16.msra.mxu0 0
  %3465 = vmatprep.subr.bf16.mxu0 0
  %3466 = vmatpush1.bf16.msra.mxu0 0
  %3467 = vmatprep.subr.bf16.mxu0 0
  %3468 = vmatpush1.bf16.msra.mxu0 0
  %3469 = vmatprep.subr.bf16.mxu0 0
  %3470 = vmatpush1.bf16.msra.mxu0 0
  %3471 = vmatprep.subr.bf16.mxu0 0
  %3472 = vmatpush1.bf16.msra.mxu0 0
  %3473 = vmatprep.subr.bf16.mxu0 0
  %3474 = vmatpush1.bf16.msra.mxu0 0
  %3475 = vmatprep.subr.bf16.mxu0 0
  %3476 = vmatpush1.bf16.msra.mxu0 0
  %3477 = vmatprep.subr.bf16.mxu0 0
  %3478 = vmatpush1.bf16.msra.mxu0 0
  %3479 = vmatprep.subr.bf16.mxu0 0
  %3480 = vmatpush1.bf16.msra.mxu0 0
  %3481 = vmatprep.subr.bf16.mxu0 0
  %3482 = vmatpush1.bf16.msra.mxu0 0
  %3483 = vmatprep.subr.bf16.mxu0 0
  %3484 = vmatpush1.bf16.msra.mxu0 0
  %3485 = vmatprep.subr.bf16.mxu0 0
  %3486 = vmatpush1.bf16.msra.mxu0 0
  %3487 = vmatprep.mubr.bf16.mxu0 0
  %3488 = vmatmul.mubr.bf16.gmra.mrb[0].mxu0 %v1309
  %v3489 = vpop.f32.mrb[0].mxu0
  %v3490 = vadd.f32 0.0, %v3489
  %v3491 = vpop.f32.mrb[0].mxu0
  %v3492 = vpop.f32.mrb[0].mxu0
  %v3493 = vpop.f32.mrb[0].mxu0
  %3494 = vdwg.mxu0
  %v3495 = vadd.f32 %v3451, %v3490
  %3497 = vrot.lane.b32.xlu0 %v3176, 64
  %v3498 = vpop.permute.xlu0 %3497
  %v3500 = vsel %vm1014, %v3498, 0
  %3502 = vmatprep.subr.bf16.mxu0 0
  %3503 = vmatpush1.bf16.msra.mxu0 %v3500
  %3504 = vmatprep.subr.bf16.mxu0 0
  %3505 = vmatpush1.bf16.msra.mxu0 0
  %3506 = vmatprep.subr.bf16.mxu0 0
  %3507 = vmatpush1.bf16.msra.mxu0 0
  %3508 = vmatprep.subr.bf16.mxu0 0
  %3509 = vmatpush1.bf16.msra.mxu0 0
  %3510 = vmatprep.subr.bf16.mxu0 0
  %3511 = vmatpush1.bf16.msra.mxu0 0
  %3512 = vmatprep.subr.bf16.mxu0 0
  %3513 = vmatpush1.bf16.msra.mxu0 0
  %3514 = vmatprep.subr.bf16.mxu0 0
  %3515 = vmatpush1.bf16.msra.mxu0 0
  %3516 = vmatprep.subr.bf16.mxu0 0
  %3517 = vmatpush1.bf16.msra.mxu0 0
  %3518 = vmatprep.subr.bf16.mxu0 0
  %3519 = vmatpush1.bf16.msra.mxu0 0
  %3520 = vmatprep.subr.bf16.mxu0 0
  %3521 = vmatpush1.bf16.msra.mxu0 0
  %3522 = vmatprep.subr.bf16.mxu0 0
  %3523 = vmatpush1.bf16.msra.mxu0 0
  %3524 = vmatprep.subr.bf16.mxu0 0
  %3525 = vmatpush1.bf16.msra.mxu0 0
  %3526 = vmatprep.subr.bf16.mxu0 0
  %3527 = vmatpush1.bf16.msra.mxu0 0
  %3528 = vmatprep.subr.bf16.mxu0 0
  %3529 = vmatpush1.bf16.msra.mxu0 0
  %3530 = vmatprep.subr.bf16.mxu0 0
  %3531 = vmatpush1.bf16.msra.mxu0 0
  %3532 = vmatprep.subr.bf16.mxu0 0
  %3533 = vmatpush1.bf16.msra.mxu0 0
  %3534 = vmatprep.mubr.bf16.mxu0 0
  %3535 = vmatmul.mubr.bf16.gmra.mrb[0].mxu0 %v1361
  %v3536 = vpop.f32.mrb[0].mxu0
  %v3537 = vadd.f32 0.0, %v3536
  %v3538 = vpop.f32.mrb[0].mxu0
  %v3539 = vpop.f32.mrb[0].mxu0
  %v3540 = vpop.f32.mrb[0].mxu0
  %3541 = vdwg.mxu0
  %v3542 = vadd.f32 %v3495, %v3537
  %v3544 = vsel %vm1014, %v3177, 0
  %3546 = vmatprep.subr.bf16.mxu0 0
  %3547 = vmatpush1.bf16.msra.mxu0 %v3544
  %3548 = vmatprep.subr.bf16.mxu0 0
  %3549 = vmatpush1.bf16.msra.mxu0 0
  %3550 = vmatprep.subr.bf16.mxu0 0
  %3551 = vmatpush1.bf16.msra.mxu0 0
  %3552 = vmatprep.subr.bf16.mxu0 0
  %3553 = vmatpush1.bf16.msra.mxu0 0
  %3554 = vmatprep.subr.bf16.mxu0 0
  %3555 = vmatpush1.bf16.msra.mxu0 0
  %3556 = vmatprep.subr.bf16.mxu0 0
  %3557 = vmatpush1.bf16.msra.mxu0 0
  %3558 = vmatprep.subr.bf16.mxu0 0
  %3559 = vmatpush1.bf16.msra.mxu0 0
  %3560 = vmatprep.subr.bf16.mxu0 0
  %3561 = vmatpush1.bf16.msra.mxu0 0
  %3562 = vmatprep.subr.bf16.mxu0 0
  %3563 = vmatpush1.bf16.msra.mxu0 0
  %3564 = vmatprep.subr.bf16.mxu0 0
  %3565 = vmatpush1.bf16.msra.mxu0 0
  %3566 = vmatprep.subr.bf16.mxu0 0
  %3567 = vmatpush1.bf16.msra.mxu0 0
  %3568 = vmatprep.subr.bf16.mxu0 0
  %3569 = vmatpush1.bf16.msra.mxu0 0
  %3570 = vmatprep.subr.bf16.mxu0 0
  %3571 = vmatpush1.bf16.msra.mxu0 0
  %3572 = vmatprep.subr.bf16.mxu0 0
  %3573 = vmatpush1.bf16.msra.mxu0 0
  %3574 = vmatprep.subr.bf16.mxu0 0
  %3575 = vmatpush1.bf16.msra.mxu0 0
  %3576 = vmatprep.subr.bf16.mxu0 0
  %3577 = vmatpush1.bf16.msra.mxu0 0
  %3578 = vmatprep.mubr.bf16.mxu0 0
  %3579 = vmatmul.mubr.bf16.gmra.mrb[0].mxu0 %v1410
  %v3580 = vpop.f32.mrb[0].mxu0
  %v3581 = vadd.f32 0.0, %v3580
  %v3582 = vpop.f32.mrb[0].mxu0
  %v3583 = vpop.f32.mrb[0].mxu0
  %v3584 = vpop.f32.mrb[0].mxu0
  %3585 = vdwg.mxu0
  %v3586 = vadd.f32 %v3542, %v3581
  %3588 = vrot.lane.b32.xlu0 %v3177, 64
  %v3589 = vpop.permute.xlu0 %3588
  %v3591 = vsel %vm1014, %v3589, 0
  %3593 = vmatprep.subr.bf16.mxu0 0
  %3594 = vmatpush1.bf16.msra.mxu0 %v3591
  %3595 = vmatprep.subr.bf16.mxu0 0
  %3596 = vmatpush1.bf16.msra.mxu0 0
  %3597 = vmatprep.subr.bf16.mxu0 0
  %3598 = vmatpush1.bf16.msra.mxu0 0
  %3599 = vmatprep.subr.bf16.mxu0 0
  %3600 = vmatpush1.bf16.msra.mxu0 0
  %3601 = vmatprep.subr.bf16.mxu0 0
  %3602 = vmatpush1.bf16.msra.mxu0 0
  %3603 = vmatprep.subr.bf16.mxu0 0
  %3604 = vmatpush1.bf16.msra.mxu0 0
  %3605 = vmatprep.subr.bf16.mxu0 0
  %3606 = vmatpush1.bf16.msra.mxu0 0
  %3607 = vmatprep.subr.bf16.mxu0 0
  %3608 = vmatpush1.bf16.msra.mxu0 0
  %3609 = vmatprep.subr.bf16.mxu0 0
  %3610 = vmatpush1.bf16.msra.mxu0 0
  %3611 = vmatprep.subr.bf16.mxu0 0
  %3612 = vmatpush1.bf16.msra.mxu0 0
  %3613 = vmatprep.subr.bf16.mxu0 0
  %3614 = vmatpush1.bf16.msra.mxu0 0
  %3615 = vmatprep.subr.bf16.mxu0 0
  %3616 = vmatpush1.bf16.msra.mxu0 0
  %3617 = vmatprep.subr.bf16.mxu0 0
  %3618 = vmatpush1.bf16.msra.mxu0 0
  %3619 = vmatprep.subr.bf16.mxu0 0
  %3620 = vmatpush1.bf16.msra.mxu0 0
  %3621 = vmatprep.subr.bf16.mxu0 0
  %3622 = vmatpush1.bf16.msra.mxu0 0
  %3623 = vmatprep.subr.bf16.mxu0 0
  %3624 = vmatpush1.bf16.msra.mxu0 0
  %3625 = vmatprep.mubr.bf16.mxu0 0
  %3626 = vmatmul.mubr.bf16.gmra.mrb[0].mxu0 %v1462
  %v3627 = vpop.f32.mrb[0].mxu0
  %v3628 = vadd.f32 0.0, %v3627
  %v3629 = vpop.f32.mrb[0].mxu0
  %v3630 = vpop.f32.mrb[0].mxu0
  %v3631 = vpop.f32.mrb[0].mxu0
  %3632 = vdwg.mxu0
  %v3633 = vadd.f32 %v3586, %v3628
  %v3635 = vsel %vm1014, %v3178, 0
  %3637 = vmatprep.subr.bf16.mxu0 0
  %3638 = vmatpush1.bf16.msra.mxu0 %v3635
  %3639 = vmatprep.subr.bf16.mxu0 0
  %3640 = vmatpush1.bf16.msra.mxu0 0
  %3641 = vmatprep.subr.bf16.mxu0 0
  %3642 = vmatpush1.bf16.msra.mxu0 0
  %3643 = vmatprep.subr.bf16.mxu0 0
  %3644 = vmatpush1.bf16.msra.mxu0 0
  %3645 = vmatprep.subr.bf16.mxu0 0
  %3646 = vmatpush1.bf16.msra.mxu0 0
  %3647 = vmatprep.subr.bf16.mxu0 0
  %3648 = vmatpush1.bf16.msra.mxu0 0
  %3649 = vmatprep.subr.bf16.mxu0 0
  %3650 = vmatpush1.bf16.msra.mxu0 0
  %3651 = vmatprep.subr.bf16.mxu0 0
  %3652 = vmatpush1.bf16.msra.mxu0 0
  %3653 = vmatprep.subr.bf16.mxu0 0
  %3654 = vmatpush1.bf16.msra.mxu0 0
  %3655 = vmatprep.subr.bf16.mxu0 0
  %3656 = vmatpush1.bf16.msra.mxu0 0
  %3657 = vmatprep.subr.bf16.mxu0 0
  %3658 = vmatpush1.bf16.msra.mxu0 0
  %3659 = vmatprep.subr.bf16.mxu0 0
  %3660 = vmatpush1.bf16.msra.mxu0 0
  %3661 = vmatprep.subr.bf16.mxu0 0
  %3662 = vmatpush1.bf16.msra.mxu0 0
  %3663 = vmatprep.subr.bf16.mxu0 0
  %3664 = vmatpush1.bf16.msra.mxu0 0
  %3665 = vmatprep.subr.bf16.mxu0 0
  %3666 = vmatpush1.bf16.msra.mxu0 0
  %3667 = vmatprep.subr.bf16.mxu0 0
  %3668 = vmatpush1.bf16.msra.mxu0 0
  %3669 = vmatprep.mubr.bf16.mxu0 0
  %3670 = vmatmul.mubr.bf16.gmra.mrb[0].mxu0 %v1511
  %v3671 = vpop.f32.mrb[0].mxu0
  %v3672 = vadd.f32 0.0, %v3671
  %v3673 = vpop.f32.mrb[0].mxu0
  %v3674 = vpop.f32.mrb[0].mxu0
  %v3675 = vpop.f32.mrb[0].mxu0
  %3676 = vdwg.mxu0
  %v3677 = vadd.f32 %v3633, %v3672
  %3679 = vrot.lane.b32.xlu0 %v3178, 64
  %v3680 = vpop.permute.xlu0 %3679
  %v3682 = vsel %vm1014, %v3680, 0
  %3684 = vmatprep.subr.bf16.mxu0 0
  %3685 = vmatpush1.bf16.msra.mxu0 %v3682
  %3686 = vmatprep.subr.bf16.mxu0 0
  %3687 = vmatpush1.bf16.msra.mxu0 0
  %3688 = vmatprep.subr.bf16.mxu0 0
  %3689 = vmatpush1.bf16.msra.mxu0 0
  %3690 = vmatprep.subr.bf16.mxu0 0
  %3691 = vmatpush1.bf16.msra.mxu0 0
  %3692 = vmatprep.subr.bf16.mxu0 0
  %3693 = vmatpush1.bf16.msra.mxu0 0
  %3694 = vmatprep.subr.bf16.mxu0 0
  %3695 = vmatpush1.bf16.msra.mxu0 0
  %3696 = vmatprep.subr.bf16.mxu0 0
  %3697 = vmatpush1.bf16.msra.mxu0 0
  %3698 = vmatprep.subr.bf16.mxu0 0
  %3699 = vmatpush1.bf16.msra.mxu0 0
  %3700 = vmatprep.subr.bf16.mxu0 0
  %3701 = vmatpush1.bf16.msra.mxu0 0
  %3702 = vmatprep.subr.bf16.mxu0 0
  %3703 = vmatpush1.bf16.msra.mxu0 0
  %3704 = vmatprep.subr.bf16.mxu0 0
  %3705 = vmatpush1.bf16.msra.mxu0 0
  %3706 = vmatprep.subr.bf16.mxu0 0
  %3707 = vmatpush1.bf16.msra.mxu0 0
  %3708 = vmatprep.subr.bf16.mxu0 0
  %3709 = vmatpush1.bf16.msra.mxu0 0
  %3710 = vmatprep.subr.bf16.mxu0 0
  %3711 = vmatpush1.bf16.msra.mxu0 0
  %3712 = vmatprep.subr.bf16.mxu0 0
  %3713 = vmatpush1.bf16.msra.mxu0 0
  %3714 = vmatprep.subr.bf16.mxu0 0
  %3715 = vmatpush1.bf16.msra.mxu0 0
  %3716 = vmatprep.mubr.bf16.mxu0 0
  %3717 = vmatmul.mubr.bf16.gmra.mrb[0].mxu0 %v1563
  %v3718 = vpop.f32.mrb[0].mxu0
  %v3719 = vadd.f32 0.0, %v3718
  %v3720 = vpop.f32.mrb[0].mxu0
  %v3721 = vpop.f32.mrb[0].mxu0
  %v3722 = vpop.f32.mrb[0].mxu0
  %3723 = vdwg.mxu0
  %v3724 = vadd.f32 %v3677, %v3719
  %v3726 = vsel %vm1014, %v3179, 0
  %3728 = vmatprep.subr.bf16.mxu0 0
  %3729 = vmatpush1.bf16.msra.mxu0 %v3726
  %3730 = vmatprep.subr.bf16.mxu0 0
  %3731 = vmatpush1.bf16.msra.mxu0 0
  %3732 = vmatprep.subr.bf16.mxu0 0
  %3733 = vmatpush1.bf16.msra.mxu0 0
  %3734 = vmatprep.subr.bf16.mxu0 0
  %3735 = vmatpush1.bf16.msra.mxu0 0
  %3736 = vmatprep.subr.bf16.mxu0 0
  %3737 = vmatpush1.bf16.msra.mxu0 0
  %3738 = vmatprep.subr.bf16.mxu0 0
  %3739 = vmatpush1.bf16.msra.mxu0 0
  %3740 = vmatprep.subr.bf16.mxu0 0
  %3741 = vmatpush1.bf16.msra.mxu0 0
  %3742 = vmatprep.subr.bf16.mxu0 0
  %3743 = vmatpush1.bf16.msra.mxu0 0
  %3744 = vmatprep.subr.bf16.mxu0 0
  %3745 = vmatpush1.bf16.msra.mxu0 0
  %3746 = vmatprep.subr.bf16.mxu0 0
  %3747 = vmatpush1.bf16.msra.mxu0 0
  %3748 = vmatprep.subr.bf16.mxu0 0
  %3749 = vmatpush1.bf16.msra.mxu0 0
  %3750 = vmatprep.subr.bf16.mxu0 0
  %3751 = vmatpush1.bf16.msra.mxu0 0
  %3752 = vmatprep.subr.bf16.mxu0 0
  %3753 = vmatpush1.bf16.msra.mxu0 0
  %3754 = vmatprep.subr.bf16.mxu0 0
  %3755 = vmatpush1.bf16.msra.mxu0 0
  %3756 = vmatprep.subr.bf16.mxu0 0
  %3757 = vmatpush1.bf16.msra.mxu0 0
  %3758 = vmatprep.subr.bf16.mxu0 0
  %3759 = vmatpush1.bf16.msra.mxu0 0
  %3760 = vmatprep.mubr.bf16.mxu0 0
  %3761 = vmatmul.mubr.bf16.gmra.mrb[0].mxu0 %v1612
  %v3762 = vpop.f32.mrb[0].mxu0
  %v3763 = vadd.f32 0.0, %v3762
  %v3764 = vpop.f32.mrb[0].mxu0
  %v3765 = vpop.f32.mrb[0].mxu0
  %v3766 = vpop.f32.mrb[0].mxu0
  %3767 = vdwg.mxu0
  %v3768 = vadd.f32 %v3724, %v3763
  %3770 = vrot.lane.b32.xlu0 %v3179, 64
  %v3771 = vpop.permute.xlu0 %3770
  %v3773 = vsel %vm1014, %v3771, 0
  %3775 = vmatprep.subr.bf16.mxu0 0
  %3776 = vmatpush1.bf16.msra.mxu0 %v3773
  %3777 = vmatprep.subr.bf16.mxu0 0
  %3778 = vmatpush1.bf16.msra.mxu0 0
  %3779 = vmatprep.subr.bf16.mxu0 0
  %3780 = vmatpush1.bf16.msra.mxu0 0
  %3781 = vmatprep.subr.bf16.mxu0 0
  %3782 = vmatpush1.bf16.msra.mxu0 0
  %3783 = vmatprep.subr.bf16.mxu0 0
  %3784 = vmatpush1.bf16.msra.mxu0 0
  %3785 = vmatprep.subr.bf16.mxu0 0
  %3786 = vmatpush1.bf16.msra.mxu0 0
  %3787 = vmatprep.subr.bf16.mxu0 0
  %3788 = vmatpush1.bf16.msra.mxu0 0
  %3789 = vmatprep.subr.bf16.mxu0 0
  %3790 = vmatpush1.bf16.msra.mxu0 0
  %3791 = vmatprep.subr.bf16.mxu0 0
  %3792 = vmatpush1.bf16.msra.mxu0 0
  %3793 = vmatprep.subr.bf16.mxu0 0
  %3794 = vmatpush1.bf16.msra.mxu0 0
  %3795 = vmatprep.subr.bf16.mxu0 0
  %3796 = vmatpush1.bf16.msra.mxu0 0
  %3797 = vmatprep.subr.bf16.mxu0 0
  %3798 = vmatpush1.bf16.msra.mxu0 0
  %3799 = vmatprep.subr.bf16.mxu0 0
  %3800 = vmatpush1.bf16.msra.mxu0 0
  %3801 = vmatprep.subr.bf16.mxu0 0
  %3802 = vmatpush1.bf16.msra.mxu0 0
  %3803 = vmatprep.subr.bf16.mxu0 0
  %3804 = vmatpush1.bf16.msra.mxu0 0
  %3805 = vmatprep.subr.bf16.mxu0 0
  %3806 = vmatpush1.bf16.msra.mxu0 0
  %3807 = vmatprep.mubr.bf16.mxu0 0
  %3808 = vmatmul.mubr.bf16.gmra.mrb[0].mxu0 %v1664
  %v3809 = vpop.f32.mrb[0].mxu0
  %v3810 = vadd.f32 0.0, %v3809
  %v3811 = vpop.f32.mrb[0].mxu0
  %v3812 = vpop.f32.mrb[0].mxu0
  %v3813 = vpop.f32.mrb[0].mxu0
  %3814 = vdwg.mxu0
  %v3815 = vadd.f32 %v3768, %v3810
  %v3817 = vsel %vm1014, %v3180, 0
  %3819 = vmatprep.subr.bf16.mxu0 0
  %3820 = vmatpush1.bf16.msra.mxu0 %v3817
  %3821 = vmatprep.subr.bf16.mxu0 0
  %3822 = vmatpush1.bf16.msra.mxu0 0
  %3823 = vmatprep.subr.bf16.mxu0 0
  %3824 = vmatpush1.bf16.msra.mxu0 0
  %3825 = vmatprep.subr.bf16.mxu0 0
  %3826 = vmatpush1.bf16.msra.mxu0 0
  %3827 = vmatprep.subr.bf16.mxu0 0
  %3828 = vmatpush1.bf16.msra.mxu0 0
  %3829 = vmatprep.subr.bf16.mxu0 0
  %3830 = vmatpush1.bf16.msra.mxu0 0
  %3831 = vmatprep.subr.bf16.mxu0 0
  %3832 = vmatpush1.bf16.msra.mxu0 0
  %3833 = vmatprep.subr.bf16.mxu0 0
  %3834 = vmatpush1.bf16.msra.mxu0 0
  %3835 = vmatprep.subr.bf16.mxu0 0
  %3836 = vmatpush1.bf16.msra.mxu0 0
  %3837 = vmatprep.subr.bf16.mxu0 0
  %3838 = vmatpush1.bf16.msra.mxu0 0
  %3839 = vmatprep.subr.bf16.mxu0 0
  %3840 = vmatpush1.bf16.msra.mxu0 0
  %3841 = vmatprep.subr.bf16.mxu0 0
  %3842 = vmatpush1.bf16.msra.mxu0 0
  %3843 = vmatprep.subr.bf16.mxu0 0
  %3844 = vmatpush1.bf16.msra.mxu0 0
  %3845 = vmatprep.subr.bf16.mxu0 0
  %3846 = vmatpush1.bf16.msra.mxu0 0
  %3847 = vmatprep.subr.bf16.mxu0 0
  %3848 = vmatpush1.bf16.msra.mxu0 0
  %3849 = vmatprep.subr.bf16.mxu0 0
  %3850 = vmatpush1.bf16.msra.mxu0 0
  %3851 = vmatprep.mubr.bf16.mxu0 0
  %3852 = vmatmul.mubr.bf16.gmra.mrb[0].mxu0 %v1713
  %v3853 = vpop.f32.mrb[0].mxu0
  %v3854 = vadd.f32 0.0, %v3853
  %v3855 = vpop.f32.mrb[0].mxu0
  %v3856 = vpop.f32.mrb[0].mxu0
  %v3857 = vpop.f32.mrb[0].mxu0
  %3858 = vdwg.mxu0
  %v3859 = vadd.f32 %v3815, %v3854
  %3861 = vrot.lane.b32.xlu0 %v3180, 64
  %v3862 = vpop.permute.xlu0 %3861
  %v3864 = vsel %vm1014, %v3862, 0
  %3866 = vmatprep.subr.bf16.mxu0 0
  %3867 = vmatpush1.bf16.msra.mxu0 %v3864
  %3868 = vmatprep.subr.bf16.mxu0 0
  %3869 = vmatpush1.bf16.msra.mxu0 0
  %3870 = vmatprep.subr.bf16.mxu0 0
  %3871 = vmatpush1.bf16.msra.mxu0 0
  %3872 = vmatprep.subr.bf16.mxu0 0
  %3873 = vmatpush1.bf16.msra.mxu0 0
  %3874 = vmatprep.subr.bf16.mxu0 0
  %3875 = vmatpush1.bf16.msra.mxu0 0
  %3876 = vmatprep.subr.bf16.mxu0 0
  %3877 = vmatpush1.bf16.msra.mxu0 0
  %3878 = vmatprep.subr.bf16.mxu0 0
  %3879 = vmatpush1.bf16.msra.mxu0 0
  %3880 = vmatprep.subr.bf16.mxu0 0
  %3881 = vmatpush1.bf16.msra.mxu0 0
  %3882 = vmatprep.subr.bf16.mxu0 0
  %3883 = vmatpush1.bf16.msra.mxu0 0
  %3884 = vmatprep.subr.bf16.mxu0 0
  %3885 = vmatpush1.bf16.msra.mxu0 0
  %3886 = vmatprep.subr.bf16.mxu0 0
  %3887 = vmatpush1.bf16.msra.mxu0 0
  %3888 = vmatprep.subr.bf16.mxu0 0
  %3889 = vmatpush1.bf16.msra.mxu0 0
  %3890 = vmatprep.subr.bf16.mxu0 0
  %3891 = vmatpush1.bf16.msra.mxu0 0
  %3892 = vmatprep.subr.bf16.mxu0 0
  %3893 = vmatpush1.bf16.msra.mxu0 0
  %3894 = vmatprep.subr.bf16.mxu0 0
  %3895 = vmatpush1.bf16.msra.mxu0 0
  %3896 = vmatprep.subr.bf16.mxu0 0
  %3897 = vmatpush1.bf16.msra.mxu0 0
  %3898 = vmatprep.mubr.bf16.mxu0 0
  %3899 = vmatmul.mubr.bf16.gmra.mrb[0].mxu0 %v1765
  %v3900 = vpop.f32.mrb[0].mxu0
  %v3901 = vadd.f32 0.0, %v3900
  %v3902 = vpop.f32.mrb[0].mxu0
  %v3903 = vpop.f32.mrb[0].mxu0
  %v3904 = vpop.f32.mrb[0].mxu0
  %3905 = vdwg.mxu0
  %v3906 = vadd.f32 %v3859, %v3901
  %vm3907 = vcmp.gt.f32.partialorder %v3906, 0.0
  %v3908 = vmul.f32 %v3906, 0.2
  %v3909 = vsel %vm3907, %v3906, %v3908
  %v3910 = vpack.c.bf16 %v3909, %v3909
  %v3912 = vsel %vm1855, %v3910, 0
  %3914 = vmatprep.subr.bf16.mxu0 %v1840
  %3915 = vmatpush1.bf16.msra.mxu0 %v1839
  %3916 = vmatprep.subr.bf16.mxu0 %v1842
  %3917 = vmatpush1.bf16.msra.mxu0 %v1841
  %3918 = vmatprep.subr.bf16.mxu0 %v1844
  %3919 = vmatpush1.bf16.msra.mxu0 %v1843
  %3920 = vmatprep.subr.bf16.mxu0 %v1846
  %3921 = vmatpush1.bf16.msra.mxu0 %v1845
  %3922 = vmatprep.subr.bf16.mxu0 0
  %3923 = vmatpush1.bf16.msra.mxu0 0
  %3924 = vmatprep.subr.bf16.mxu0 0
  %3925 = vmatpush1.bf16.msra.mxu0 0
  %3926 = vmatprep.subr.bf16.mxu0 0
  %3927 = vmatpush1.bf16.msra.mxu0 0
  %3928 = vmatprep.subr.bf16.mxu0 0
  %3929 = vmatpush1.bf16.msra.mxu0 0
  %3930 = vmatprep.subr.bf16.mxu0 0
  %3931 = vmatpush1.bf16.msra.mxu0 0
  %3932 = vmatprep.subr.bf16.mxu0 0
  %3933 = vmatpush1.bf16.msra.mxu0 0
  %3934 = vmatprep.subr.bf16.mxu0 0
  %3935 = vmatpush1.bf16.msra.mxu0 0
  %3936 = vmatprep.subr.bf16.mxu0 0
  %3937 = vmatpush1.bf16.msra.mxu0 0
  %3938 = vmatprep.subr.bf16.mxu0 0
  %3939 = vmatpush1.bf16.msra.mxu0 0
  %3940 = vmatprep.subr.bf16.mxu0 0
  %3941 = vmatpush1.bf16.msra.mxu0 0
  %3942 = vmatprep.subr.bf16.mxu0 0
  %3943 = vmatpush1.bf16.msra.mxu0 0
  %3944 = vmatprep.subr.bf16.mxu0 0
  %3945 = vmatpush1.bf16.msra.mxu0 0
  %3946 = vmatprep.mubr.bf16.mxu0 0
  %3947 = vmatmul.mubr.bf16.gmra.mrb[0].mxu0 %v3912
  %v3948 = vpop.f32.mrb[0].mxu0
  %v3949 = vadd.f32 0.0, %v3948
  %v3950 = vpop.f32.mrb[0].mxu0
  %v3951 = vadd.f32 0.0, %v3950
  %v3952 = vpop.f32.mrb[0].mxu0
  %v3953 = vpop.f32.mrb[0].mxu0
  %3954 = vdwg.mxu0
  %v3955 = vpack.c.bf16 %v3949, %v3949
  %v3956 = vpack.c.bf16 %v3951, %v3951
  %3958 = vrot.lane.b32.xlu0 %v3955, 112
  %v3959 = vpop.permute.xlu0 %3958
  %v3961 = vsel %vm1916, %v3959, 0
  %3963 = vmatprep.subr.bf16.mxu0 0
  %3964 = vmatpush1.bf16.msra.mxu0 %v3961
  %3965 = vmatprep.subr.bf16.mxu0 0
  %3966 = vmatpush1.bf16.msra.mxu0 0
  %3967 = vmatprep.subr.bf16.mxu0 0
  %3968 = vmatpush1.bf16.msra.mxu0 0
  %3969 = vmatprep.subr.bf16.mxu0 0
  %3970 = vmatpush1.bf16.msra.mxu0 0
  %3971 = vmatprep.subr.bf16.mxu0 0
  %3972 = vmatpush1.bf16.msra.mxu0 0
  %3973 = vmatprep.subr.bf16.mxu0 0
  %3974 = vmatpush1.bf16.msra.mxu0 0
  %3975 = vmatprep.subr.bf16.mxu0 0
  %3976 = vmatpush1.bf16.msra.mxu0 0
  %3977 = vmatprep.subr.bf16.mxu0 0
  %3978 = vmatpush1.bf16.msra.mxu0 0
  %3979 = vmatprep.subr.bf16.mxu0 0
  %3980 = vmatpush1.bf16.msra.mxu0 0
  %3981 = vmatprep.subr.bf16.mxu0 0
  %3982 = vmatpush1.bf16.msra.mxu0 0
  %3983 = vmatprep.subr.bf16.mxu0 0
  %3984 = vmatpush1.bf16.msra.mxu0 0
  %3985 = vmatprep.subr.bf16.mxu0 0
  %3986 = vmatpush1.bf16.msra.mxu0 0
  %3987 = vmatprep.subr.bf16.mxu0 0
  %3988 = vmatpush1.bf16.msra.mxu0 0
  %3989 = vmatprep.subr.bf16.mxu0 0
  %3990 = vmatpush1.bf16.msra.mxu0 0
  %3991 = vmatprep.subr.bf16.mxu0 0
  %3992 = vmatpush1.bf16.msra.mxu0 0
  %3993 = vmatprep.subr.bf16.mxu0 0
  %3994 = vmatpush1.bf16.msra.mxu0 0
  %3995 = vmatprep.mubr.bf16.mxu0 0
  %3996 = vmatmul.mubr.bf16.gmra.mrb[0].mxu0 %v1914
  %v3997 = vpop.f32.mrb[0].mxu0
  %v3998 = vadd.f32 0.0, %v3997
  %v3999 = vpop.f32.mrb[0].mxu0
  %v4000 = vpop.f32.mrb[0].mxu0
  %v4001 = vadd.f32 0.0, %v4000
  %v4002 = vpop.f32.mrb[0].mxu0
  %4003 = vdwg.mxu0
  %v4005 = vsel %vm1916, %v3955, 0
  %4007 = vmatprep.subr.bf16.mxu0 0
  %4008 = vmatpush1.bf16.msra.mxu0 %v4005
  %4009 = vmatprep.subr.bf16.mxu0 0
  %4010 = vmatpush1.bf16.msra.mxu0 0
  %4011 = vmatprep.subr.bf16.mxu0 0
  %4012 = vmatpush1.bf16.msra.mxu0 0
  %4013 = vmatprep.subr.bf16.mxu0 0
  %4014 = vmatpush1.bf16.msra.mxu0 0
  %4015 = vmatprep.subr.bf16.mxu0 0
  %4016 = vmatpush1.bf16.msra.mxu0 0
  %4017 = vmatprep.subr.bf16.mxu0 0
  %4018 = vmatpush1.bf16.msra.mxu0 0
  %4019 = vmatprep.subr.bf16.mxu0 0
  %4020 = vmatpush1.bf16.msra.mxu0 0
  %4021 = vmatprep.subr.bf16.mxu0 0
  %4022 = vmatpush1.bf16.msra.mxu0 0
  %4023 = vmatprep.subr.bf16.mxu0 0
  %4024 = vmatpush1.bf16.msra.mxu0 0
  %4025 = vmatprep.subr.bf16.mxu0 0
  %4026 = vmatpush1.bf16.msra.mxu0 0
  %4027 = vmatprep.subr.bf16.mxu0 0
  %4028 = vmatpush1.bf16.msra.mxu0 0
  %4029 = vmatprep.subr.bf16.mxu0 0
  %4030 = vmatpush1.bf16.msra.mxu0 0
  %4031 = vmatprep.subr.bf16.mxu0 0
  %4032 = vmatpush1.bf16.msra.mxu0 0
  %4033 = vmatprep.subr.bf16.mxu0 0
  %4034 = vmatpush1.bf16.msra.mxu0 0
  %4035 = vmatprep.subr.bf16.mxu0 0
  %4036 = vmatpush1.bf16.msra.mxu0 0
  %4037 = vmatprep.subr.bf16.mxu0 0
  %4038 = vmatpush1.bf16.msra.mxu0 0
  %4039 = vmatprep.mubr.bf16.mxu0 0
  %4040 = vmatmul.mubr.bf16.gmra.mrb[0].mxu0 %v1962
  %v4041 = vpop.f32.mrb[0].mxu0
  %v4042 = vadd.f32 %v3998, %v4041
  %v4043 = vpop.f32.mrb[0].mxu0
  %v4044 = vpop.f32.mrb[0].mxu0
  %v4045 = vadd.f32 %v4001, %v4044
  %v4046 = vpop.f32.mrb[0].mxu0
  %4047 = vdwg.mxu0
  %4048 = vrot.lane.b32.xlu0 %v3955, 96
  %v4049 = vpop.permute.xlu0 %4048
  %v4051 = vsel %vm1916, %v4049, 0
  %4053 = vmatprep.subr.bf16.mxu0 0
  %4054 = vmatpush1.bf16.msra.mxu0 %v4051
  %4055 = vmatprep.subr.bf16.mxu0 0
  %4056 = vmatpush1.bf16.msra.mxu0 0
  %4057 = vmatprep.subr.bf16.mxu0 0
  %4058 = vmatpush1.bf16.msra.mxu0 0
  %4059 = vmatprep.subr.bf16.mxu0 0
  %4060 = vmatpush1.bf16.msra.mxu0 0
  %4061 = vmatprep.subr.bf16.mxu0 0
  %4062 = vmatpush1.bf16.msra.mxu0 0
  %4063 = vmatprep.subr.bf16.mxu0 0
  %4064 = vmatpush1.bf16.msra.mxu0 0
  %4065 = vmatprep.subr.bf16.mxu0 0
  %4066 = vmatpush1.bf16.msra.mxu0 0
  %4067 = vmatprep.subr.bf16.mxu0 0
  %4068 = vmatpush1.bf16.msra.mxu0 0
  %4069 = vmatprep.subr.bf16.mxu0 0
  %4070 = vmatpush1.bf16.msra.mxu0 0
  %4071 = vmatprep.subr.bf16.mxu0 0
  %4072 = vmatpush1.bf16.msra.mxu0 0
  %4073 = vmatprep.subr.bf16.mxu0 0
  %4074 = vmatpush1.bf16.msra.mxu0 0
  %4075 = vmatprep.subr.bf16.mxu0 0
  %4076 = vmatpush1.bf16.msra.mxu0 0
  %4077 = vmatprep.subr.bf16.mxu0 0
  %4078 = vmatpush1.bf16.msra.mxu0 0
  %4079 = vmatprep.subr.bf16.mxu0 0
  %4080 = vmatpush1.bf16.msra.mxu0 0
  %4081 = vmatprep.subr.bf16.mxu0 0
  %4082 = vmatpush1.bf16.msra.mxu0 0
  %4083 = vmatprep.subr.bf16.mxu0 0
  %4084 = vmatpush1.bf16.msra.mxu0 0
  %4085 = vmatprep.mubr.bf16.mxu0 0
  %4086 = vmatmul.mubr.bf16.gmra.mrb[0].mxu0 %v2013
  %v4087 = vpop.f32.mrb[0].mxu0
  %v4088 = vadd.f32 0.0, %v4087
  %v4089 = vpop.f32.mrb[0].mxu0
  %v4090 = vpop.f32.mrb[0].mxu0
  %v4091 = vadd.f32 0.0, %v4090
  %v4092 = vpop.f32.mrb[0].mxu0
  %4093 = vdwg.mxu0
  %v4094 = vadd.f32 %v4042, %v4088
  %v4095 = vadd.f32 %v4045, %v4091
  %4096 = vrot.lane.b32.xlu0 %v3955, 80
  %v4097 = vpop.permute.xlu0 %4096
  %v4099 = vsel %vm1916, %v4097, 0
  %4101 = vmatprep.subr.bf16.mxu0 0
  %4102 = vmatpush1.bf16.msra.mxu0 %v4099
  %4103 = vmatprep.subr.bf16.mxu0 0
  %4104 = vmatpush1.bf16.msra.mxu0 0
  %4105 = vmatprep.subr.bf16.mxu0 0
  %4106 = vmatpush1.bf16.msra.mxu0 0
  %4107 = vmatprep.subr.bf16.mxu0 0
  %4108 = vmatpush1.bf16.msra.mxu0 0
  %4109 = vmatprep.subr.bf16.mxu0 0
  %4110 = vmatpush1.bf16.msra.mxu0 0
  %4111 = vmatprep.subr.bf16.mxu0 0
  %4112 = vmatpush1.bf16.msra.mxu0 0
  %4113 = vmatprep.subr.bf16.mxu0 0
  %4114 = vmatpush1.bf16.msra.mxu0 0
  %4115 = vmatprep.subr.bf16.mxu0 0
  %4116 = vmatpush1.bf16.msra.mxu0 0
  %4117 = vmatprep.subr.bf16.mxu0 0
  %4118 = vmatpush1.bf16.msra.mxu0 0
  %4119 = vmatprep.subr.bf16.mxu0 0
  %4120 = vmatpush1.bf16.msra.mxu0 0
  %4121 = vmatprep.subr.bf16.mxu0 0
  %4122 = vmatpush1.bf16.msra.mxu0 0
  %4123 = vmatprep.subr.bf16.mxu0 0
  %4124 = vmatpush1.bf16.msra.mxu0 0
  %4125 = vmatprep.subr.bf16.mxu0 0
  %4126 = vmatpush1.bf16.msra.mxu0 0
  %4127 = vmatprep.subr.bf16.mxu0 0
  %4128 = vmatpush1.bf16.msra.mxu0 0
  %4129 = vmatprep.subr.bf16.mxu0 0
  %4130 = vmatpush1.bf16.msra.mxu0 0
  %4131 = vmatprep.subr.bf16.mxu0 0
  %4132 = vmatpush1.bf16.msra.mxu0 0
  %4133 = vmatprep.mubr.bf16.mxu0 0
  %4134 = vmatmul.mubr.bf16.gmra.mrb[0].mxu0 %v2066
  %v4135 = vpop.f32.mrb[0].mxu0
  %v4136 = vadd.f32 0.0, %v4135
  %v4137 = vpop.f32.mrb[0].mxu0
  %v4138 = vpop.f32.mrb[0].mxu0
  %v4139 = vadd.f32 0.0, %v4138
  %v4140 = vpop.f32.mrb[0].mxu0
  %4141 = vdwg.mxu0
  %v4142 = vadd.f32 %v4094, %v4136
  %v4143 = vadd.f32 %v4095, %v4139
  %4144 = vrot.lane.b32.xlu0 %v3955, 64
  %v4145 = vpop.permute.xlu0 %4144
  %v4147 = vsel %vm1916, %v4145, 0
  %4149 = vmatprep.subr.bf16.mxu0 0
  %4150 = vmatpush1.bf16.msra.mxu0 %v4147
  %4151 = vmatprep.subr.bf16.mxu0 0
  %4152 = vmatpush1.bf16.msra.mxu0 0
  %4153 = vmatprep.subr.bf16.mxu0 0
  %4154 = vmatpush1.bf16.msra.mxu0 0
  %4155 = vmatprep.subr.bf16.mxu0 0
  %4156 = vmatpush1.bf16.msra.mxu0 0
  %4157 = vmatprep.subr.bf16.mxu0 0
  %4158 = vmatpush1.bf16.msra.mxu0 0
  %4159 = vmatprep.subr.bf16.mxu0 0
  %4160 = vmatpush1.bf16.msra.mxu0 0
  %4161 = vmatprep.subr.bf16.mxu0 0
  %4162 = vmatpush1.bf16.msra.mxu0 0
  %4163 = vmatprep.subr.bf16.mxu0 0
  %4164 = vmatpush1.bf16.msra.mxu0 0
  %4165 = vmatprep.subr.bf16.mxu0 0
  %4166 = vmatpush1.bf16.msra.mxu0 0
  %4167 = vmatprep.subr.bf16.mxu0 0
  %4168 = vmatpush1.bf16.msra.mxu0 0
  %4169 = vmatprep.subr.bf16.mxu0 0
  %4170 = vmatpush1.bf16.msra.mxu0 0
  %4171 = vmatprep.subr.bf16.mxu0 0
  %4172 = vmatpush1.bf16.msra.mxu0 0
  %4173 = vmatprep.subr.bf16.mxu0 0
  %4174 = vmatpush1.bf16.msra.mxu0 0
  %4175 = vmatprep.subr.bf16.mxu0 0
  %4176 = vmatpush1.bf16.msra.mxu0 0
  %4177 = vmatprep.subr.bf16.mxu0 0
  %4178 = vmatpush1.bf16.msra.mxu0 0
  %4179 = vmatprep.subr.bf16.mxu0 0
  %4180 = vmatpush1.bf16.msra.mxu0 0
  %4181 = vmatprep.mubr.bf16.mxu0 0
  %4182 = vmatmul.mubr.bf16.gmra.mrb[0].mxu0 %v2119
  %v4183 = vpop.f32.mrb[0].mxu0
  %v4184 = vadd.f32 0.0, %v4183
  %v4185 = vpop.f32.mrb[0].mxu0
  %v4186 = vpop.f32.mrb[0].mxu0
  %v4187 = vadd.f32 0.0, %v4186
  %v4188 = vpop.f32.mrb[0].mxu0
  %4189 = vdwg.mxu0
  %v4190 = vadd.f32 %v4142, %v4184
  %v4191 = vadd.f32 %v4143, %v4187
  %4192 = vrot.lane.b32.xlu0 %v3955, 48
  %v4193 = vpop.permute.xlu0 %4192
  %v4195 = vsel %vm1916, %v4193, 0
  %4197 = vmatprep.subr.bf16.mxu0 0
  %4198 = vmatpush1.bf16.msra.mxu0 %v4195
  %4199 = vmatprep.subr.bf16.mxu0 0
  %4200 = vmatpush1.bf16.msra.mxu0 0
  %4201 = vmatprep.subr.bf16.mxu0 0
  %4202 = vmatpush1.bf16.msra.mxu0 0
  %4203 = vmatprep.subr.bf16.mxu0 0
  %4204 = vmatpush1.bf16.msra.mxu0 0
  %4205 = vmatprep.subr.bf16.mxu0 0
  %4206 = vmatpush1.bf16.msra.mxu0 0
  %4207 = vmatprep.subr.bf16.mxu0 0
  %4208 = vmatpush1.bf16.msra.mxu0 0
  %4209 = vmatprep.subr.bf16.mxu0 0
  %4210 = vmatpush1.bf16.msra.mxu0 0
  %4211 = vmatprep.subr.bf16.mxu0 0
  %4212 = vmatpush1.bf16.msra.mxu0 0
  %4213 = vmatprep.subr.bf16.mxu0 0
  %4214 = vmatpush1.bf16.msra.mxu0 0
  %4215 = vmatprep.subr.bf16.mxu0 0
  %4216 = vmatpush1.bf16.msra.mxu0 0
  %4217 = vmatprep.subr.bf16.mxu0 0
  %4218 = vmatpush1.bf16.msra.mxu0 0
  %4219 = vmatprep.subr.bf16.mxu0 0
  %4220 = vmatpush1.bf16.msra.mxu0 0
  %4221 = vmatprep.subr.bf16.mxu0 0
  %4222 = vmatpush1.bf16.msra.mxu0 0
  %4223 = vmatprep.subr.bf16.mxu0 0
  %4224 = vmatpush1.bf16.msra.mxu0 0
  %4225 = vmatprep.subr.bf16.mxu0 0
  %4226 = vmatpush1.bf16.msra.mxu0 0
  %4227 = vmatprep.subr.bf16.mxu0 0
  %4228 = vmatpush1.bf16.msra.mxu0 0
  %4229 = vmatprep.mubr.bf16.mxu0 0
  %4230 = vmatmul.mubr.bf16.gmra.mrb[0].mxu0 %v2172
  %v4231 = vpop.f32.mrb[0].mxu0
  %v4232 = vadd.f32 0.0, %v4231
  %v4233 = vpop.f32.mrb[0].mxu0
  %v4234 = vpop.f32.mrb[0].mxu0
  %v4235 = vadd.f32 0.0, %v4234
  %v4236 = vpop.f32.mrb[0].mxu0
  %4237 = vdwg.mxu0
  %v4238 = vadd.f32 %v4190, %v4232
  %v4239 = vadd.f32 %v4191, %v4235
  %4240 = vrot.lane.b32.xlu0 %v3955, 32
  %v4241 = vpop.permute.xlu0 %4240
  %v4243 = vsel %vm1916, %v4241, 0
  %4245 = vmatprep.subr.bf16.mxu0 0
  %4246 = vmatpush1.bf16.msra.mxu0 %v4243
  %4247 = vmatprep.subr.bf16.mxu0 0
  %4248 = vmatpush1.bf16.msra.mxu0 0
  %4249 = vmatprep.subr.bf16.mxu0 0
  %4250 = vmatpush1.bf16.msra.mxu0 0
  %4251 = vmatprep.subr.bf16.mxu0 0
  %4252 = vmatpush1.bf16.msra.mxu0 0
  %4253 = vmatprep.subr.bf16.mxu0 0
  %4254 = vmatpush1.bf16.msra.mxu0 0
  %4255 = vmatprep.subr.bf16.mxu0 0
  %4256 = vmatpush1.bf16.msra.mxu0 0
  %4257 = vmatprep.subr.bf16.mxu0 0
  %4258 = vmatpush1.bf16.msra.mxu0 0
  %4259 = vmatprep.subr.bf16.mxu0 0
  %4260 = vmatpush1.bf16.msra.mxu0 0
  %4261 = vmatprep.subr.bf16.mxu0 0
  %4262 = vmatpush1.bf16.msra.mxu0 0
  %4263 = vmatprep.subr.bf16.mxu0 0
  %4264 = vmatpush1.bf16.msra.mxu0 0
  %4265 = vmatprep.subr.bf16.mxu0 0
  %4266 = vmatpush1.bf16.msra.mxu0 0
  %4267 = vmatprep.subr.bf16.mxu0 0
  %4268 = vmatpush1.bf16.msra.mxu0 0
  %4269 = vmatprep.subr.bf16.mxu0 0
  %4270 = vmatpush1.bf16.msra.mxu0 0
  %4271 = vmatprep.subr.bf16.mxu0 0
  %4272 = vmatpush1.bf16.msra.mxu0 0
  %4273 = vmatprep.subr.bf16.mxu0 0
  %4274 = vmatpush1.bf16.msra.mxu0 0
  %4275 = vmatprep.subr.bf16.mxu0 0
  %4276 = vmatpush1.bf16.msra.mxu0 0
  %4277 = vmatprep.mubr.bf16.mxu0 0
  %4278 = vmatmul.mubr.bf16.gmra.mrb[0].mxu0 %v2225
  %v4279 = vpop.f32.mrb[0].mxu0
  %v4280 = vadd.f32 0.0, %v4279
  %v4281 = vpop.f32.mrb[0].mxu0
  %v4282 = vpop.f32.mrb[0].mxu0
  %v4283 = vadd.f32 0.0, %v4282
  %v4284 = vpop.f32.mrb[0].mxu0
  %4285 = vdwg.mxu0
  %v4286 = vadd.f32 %v4238, %v4280
  %v4287 = vadd.f32 %v4239, %v4283
  %4288 = vrot.lane.b32.xlu0 %v3955, 16
  %v4289 = vpop.permute.xlu0 %4288
  %v4291 = vsel %vm1916, %v4289, 0
  %4293 = vmatprep.subr.bf16.mxu0 0
  %4294 = vmatpush1.bf16.msra.mxu0 %v4291
  %4295 = vmatprep.subr.bf16.mxu0 0
  %4296 = vmatpush1.bf16.msra.mxu0 0
  %4297 = vmatprep.subr.bf16.mxu0 0
  %4298 = vmatpush1.bf16.msra.mxu0 0
  %4299 = vmatprep.subr.bf16.mxu0 0
  %4300 = vmatpush1.bf16.msra.mxu0 0
  %4301 = vmatprep.subr.bf16.mxu0 0
  %4302 = vmatpush1.bf16.msra.mxu0 0
  %4303 = vmatprep.subr.bf16.mxu0 0
  %4304 = vmatpush1.bf16.msra.mxu0 0
  %4305 = vmatprep.subr.bf16.mxu0 0
  %4306 = vmatpush1.bf16.msra.mxu0 0
  %4307 = vmatprep.subr.bf16.mxu0 0
  %4308 = vmatpush1.bf16.msra.mxu0 0
  %4309 = vmatprep.subr.bf16.mxu0 0
  %4310 = vmatpush1.bf16.msra.mxu0 0
  %4311 = vmatprep.subr.bf16.mxu0 0
  %4312 = vmatpush1.bf16.msra.mxu0 0
  %4313 = vmatprep.subr.bf16.mxu0 0
  %4314 = vmatpush1.bf16.msra.mxu0 0
  %4315 = vmatprep.subr.bf16.mxu0 0
  %4316 = vmatpush1.bf16.msra.mxu0 0
  %4317 = vmatprep.subr.bf16.mxu0 0
  %4318 = vmatpush1.bf16.msra.mxu0 0
  %4319 = vmatprep.subr.bf16.mxu0 0
  %4320 = vmatpush1.bf16.msra.mxu0 0
  %4321 = vmatprep.subr.bf16.mxu0 0
  %4322 = vmatpush1.bf16.msra.mxu0 0
  %4323 = vmatprep.subr.bf16.mxu0 0
  %4324 = vmatpush1.bf16.msra.mxu0 0
  %4325 = vmatprep.mubr.bf16.mxu0 0
  %4326 = vmatmul.mubr.bf16.gmra.mrb[0].mxu0 %v2278
  %v4327 = vpop.f32.mrb[0].mxu0
  %v4328 = vadd.f32 0.0, %v4327
  %v4329 = vpop.f32.mrb[0].mxu0
  %v4330 = vpop.f32.mrb[0].mxu0
  %v4331 = vadd.f32 0.0, %v4330
  %v4332 = vpop.f32.mrb[0].mxu0
  %4333 = vdwg.mxu0
  %v4334 = vadd.f32 %v4286, %v4328
  %v4335 = vadd.f32 %v4287, %v4331
  %v4337 = vsel %vm1916, %v3956, 0
  %4339 = vmatprep.subr.bf16.mxu0 0
  %4340 = vmatpush1.bf16.msra.mxu0 %v4337
  %4341 = vmatprep.subr.bf16.mxu0 0
  %4342 = vmatpush1.bf16.msra.mxu0 0
  %4343 = vmatprep.subr.bf16.mxu0 0
  %4344 = vmatpush1.bf16.msra.mxu0 0
  %4345 = vmatprep.subr.bf16.mxu0 0
  %4346 = vmatpush1.bf16.msra.mxu0 0
  %4347 = vmatprep.subr.bf16.mxu0 0
  %4348 = vmatpush1.bf16.msra.mxu0 0
  %4349 = vmatprep.subr.bf16.mxu0 0
  %4350 = vmatpush1.bf16.msra.mxu0 0
  %4351 = vmatprep.subr.bf16.mxu0 0
  %4352 = vmatpush1.bf16.msra.mxu0 0
  %4353 = vmatprep.subr.bf16.mxu0 0
  %4354 = vmatpush1.bf16.msra.mxu0 0
  %4355 = vmatprep.subr.bf16.mxu0 0
  %4356 = vmatpush1.bf16.msra.mxu0 0
  %4357 = vmatprep.subr.bf16.mxu0 0
  %4358 = vmatpush1.bf16.msra.mxu0 0
  %4359 = vmatprep.subr.bf16.mxu0 0
  %4360 = vmatpush1.bf16.msra.mxu0 0
  %4361 = vmatprep.subr.bf16.mxu0 0
  %4362 = vmatpush1.bf16.msra.mxu0 0
  %4363 = vmatprep.subr.bf16.mxu0 0
  %4364 = vmatpush1.bf16.msra.mxu0 0
  %4365 = vmatprep.subr.bf16.mxu0 0
  %4366 = vmatpush1.bf16.msra.mxu0 0
  %4367 = vmatprep.subr.bf16.mxu0 0
  %4368 = vmatpush1.bf16.msra.mxu0 0
  %4369 = vmatprep.subr.bf16.mxu0 0
  %4370 = vmatpush1.bf16.msra.mxu0 0
  %4371 = vmatprep.mubr.bf16.mxu0 0
  %4372 = vmatmul.mubr.bf16.gmra.mrb[0].mxu0 %v2329
  %v4373 = vpop.f32.mrb[0].mxu0
  %v4374 = vadd.f32 0.0, %v4373
  %v4375 = vpop.f32.mrb[0].mxu0
  %v4376 = vpop.f32.mrb[0].mxu0
  %v4377 = vadd.f32 0.0, %v4376
  %v4378 = vpop.f32.mrb[0].mxu0
  %4379 = vdwg.mxu0
  %v4380 = vadd.f32 %v4334, %v4374
  %v4381 = vadd.f32 %v4335, %v4377
  %4383 = vrot.lane.b32.xlu0 %v3956, 112
  %v4384 = vpop.permute.xlu0 %4383
  %v4386 = vsel %vm1916, %v4384, 0
  %4388 = vmatprep.subr.bf16.mxu0 0
  %4389 = vmatpush1.bf16.msra.mxu0 %v4386
  %4390 = vmatprep.subr.bf16.mxu0 0
  %4391 = vmatpush1.bf16.msra.mxu0 0
  %4392 = vmatprep.subr.bf16.mxu0 0
  %4393 = vmatpush1.bf16.msra.mxu0 0
  %4394 = vmatprep.subr.bf16.mxu0 0
  %4395 = vmatpush1.bf16.msra.mxu0 0
  %4396 = vmatprep.subr.bf16.mxu0 0
  %4397 = vmatpush1.bf16.msra.mxu0 0
  %4398 = vmatprep.subr.bf16.mxu0 0
  %4399 = vmatpush1.bf16.msra.mxu0 0
  %4400 = vmatprep.subr.bf16.mxu0 0
  %4401 = vmatpush1.bf16.msra.mxu0 0
  %4402 = vmatprep.subr.bf16.mxu0 0
  %4403 = vmatpush1.bf16.msra.mxu0 0
  %4404 = vmatprep.subr.bf16.mxu0 0
  %4405 = vmatpush1.bf16.msra.mxu0 0
  %4406 = vmatprep.subr.bf16.mxu0 0
  %4407 = vmatpush1.bf16.msra.mxu0 0
  %4408 = vmatprep.subr.bf16.mxu0 0
  %4409 = vmatpush1.bf16.msra.mxu0 0
  %4410 = vmatprep.subr.bf16.mxu0 0
  %4411 = vmatpush1.bf16.msra.mxu0 0
  %4412 = vmatprep.subr.bf16.mxu0 0
  %4413 = vmatpush1.bf16.msra.mxu0 0
  %4414 = vmatprep.subr.bf16.mxu0 0
  %4415 = vmatpush1.bf16.msra.mxu0 0
  %4416 = vmatprep.subr.bf16.mxu0 0
  %4417 = vmatpush1.bf16.msra.mxu0 0
  %4418 = vmatprep.subr.bf16.mxu0 0
  %4419 = vmatpush1.bf16.msra.mxu0 0
  %4420 = vmatprep.mubr.bf16.mxu0 0
  %4421 = vmatmul.mubr.bf16.gmra.mrb[0].mxu0 %v2383
  %v4422 = vpop.f32.mrb[0].mxu0
  %v4423 = vadd.f32 0.0, %v4422
  %v4424 = vpop.f32.mrb[0].mxu0
  %v4425 = vpop.f32.mrb[0].mxu0
  %v4426 = vadd.f32 0.0, %v4425
  %v4427 = vpop.f32.mrb[0].mxu0
  %4428 = vdwg.mxu0
  %v4429 = vadd.f32 %v4380, %v4423
  %v4430 = vadd.f32 %v4381, %v4426
  %4431 = vrot.lane.b32.xlu0 %v3956, 96
  %v4432 = vpop.permute.xlu0 %4431
  %v4434 = vsel %vm1916, %v4432, 0
  %4436 = vmatprep.subr.bf16.mxu0 0
  %4437 = vmatpush1.bf16.msra.mxu0 %v4434
  %4438 = vmatprep.subr.bf16.mxu0 0
  %4439 = vmatpush1.bf16.msra.mxu0 0
  %4440 = vmatprep.subr.bf16.mxu0 0
  %4441 = vmatpush1.bf16.msra.mxu0 0
  %4442 = vmatprep.subr.bf16.mxu0 0
  %4443 = vmatpush1.bf16.msra.mxu0 0
  %4444 = vmatprep.subr.bf16.mxu0 0
  %4445 = vmatpush1.bf16.msra.mxu0 0
  %4446 = vmatprep.subr.bf16.mxu0 0
  %4447 = vmatpush1.bf16.msra.mxu0 0
  %4448 = vmatprep.subr.bf16.mxu0 0
  %4449 = vmatpush1.bf16.msra.mxu0 0
  %4450 = vmatprep.subr.bf16.mxu0 0
  %4451 = vmatpush1.bf16.msra.mxu0 0
  %4452 = vmatprep.subr.bf16.mxu0 0
  %4453 = vmatpush1.bf16.msra.mxu0 0
  %4454 = vmatprep.subr.bf16.mxu0 0
  %4455 = vmatpush1.bf16.msra.mxu0 0
  %4456 = vmatprep.subr.bf16.mxu0 0
  %4457 = vmatpush1.bf16.msra.mxu0 0
  %4458 = vmatprep.subr.bf16.mxu0 0
  %4459 = vmatpush1.bf16.msra.mxu0 0
  %4460 = vmatprep.subr.bf16.mxu0 0
  %4461 = vmatpush1.bf16.msra.mxu0 0
  %4462 = vmatprep.subr.bf16.mxu0 0
  %4463 = vmatpush1.bf16.msra.mxu0 0
  %4464 = vmatprep.subr.bf16.mxu0 0
  %4465 = vmatpush1.bf16.msra.mxu0 0
  %4466 = vmatprep.subr.bf16.mxu0 0
  %4467 = vmatpush1.bf16.msra.mxu0 0
  %4468 = vmatprep.mubr.bf16.mxu0 0
  %4469 = vmatmul.mubr.bf16.gmra.mrb[0].mxu0 %v2436
  %v4470 = vpop.f32.mrb[0].mxu0
  %v4471 = vadd.f32 0.0, %v4470
  %v4472 = vpop.f32.mrb[0].mxu0
  %v4473 = vpop.f32.mrb[0].mxu0
  %v4474 = vadd.f32 0.0, %v4473
  %v4475 = vpop.f32.mrb[0].mxu0
  %4476 = vdwg.mxu0
  %v4477 = vadd.f32 %v4429, %v4471
  %v4478 = vadd.f32 %v4430, %v4474
  %4479 = vrot.lane.b32.xlu0 %v3956, 80
  %v4480 = vpop.permute.xlu0 %4479
  %v4482 = vsel %vm1916, %v4480, 0
  %4484 = vmatprep.subr.bf16.mxu0 0
  %4485 = vmatpush1.bf16.msra.mxu0 %v4482
  %4486 = vmatprep.subr.bf16.mxu0 0
  %4487 = vmatpush1.bf16.msra.mxu0 0
  %4488 = vmatprep.subr.bf16.mxu0 0
  %4489 = vmatpush1.bf16.msra.mxu0 0
  %4490 = vmatprep.subr.bf16.mxu0 0
  %4491 = vmatpush1.bf16.msra.mxu0 0
  %4492 = vmatprep.subr.bf16.mxu0 0
  %4493 = vmatpush1.bf16.msra.mxu0 0
  %4494 = vmatprep.subr.bf16.mxu0 0
  %4495 = vmatpush1.bf16.msra.mxu0 0
  %4496 = vmatprep.subr.bf16.mxu0 0
  %4497 = vmatpush1.bf16.msra.mxu0 0
  %4498 = vmatprep.subr.bf16.mxu0 0
  %4499 = vmatpush1.bf16.msra.mxu0 0
  %4500 = vmatprep.subr.bf16.mxu0 0
  %4501 = vmatpush1.bf16.msra.mxu0 0
  %4502 = vmatprep.subr.bf16.mxu0 0
  %4503 = vmatpush1.bf16.msra.mxu0 0
  %4504 = vmatprep.subr.bf16.mxu0 0
  %4505 = vmatpush1.bf16.msra.mxu0 0
  %4506 = vmatprep.subr.bf16.mxu0 0
  %4507 = vmatpush1.bf16.msra.mxu0 0
  %4508 = vmatprep.subr.bf16.mxu0 0
  %4509 = vmatpush1.bf16.msra.mxu0 0
  %4510 = vmatprep.subr.bf16.mxu0 0
  %4511 = vmatpush1.bf16.msra.mxu0 0
  %4512 = vmatprep.subr.bf16.mxu0 0
  %4513 = vmatpush1.bf16.msra.mxu0 0
  %4514 = vmatprep.subr.bf16.mxu0 0
  %4515 = vmatpush1.bf16.msra.mxu0 0
  %4516 = vmatprep.mubr.bf16.mxu0 0
  %4517 = vmatmul.mubr.bf16.gmra.mrb[0].mxu0 %v2489
  %v4518 = vpop.f32.mrb[0].mxu0
  %v4519 = vadd.f32 0.0, %v4518
  %v4520 = vpop.f32.mrb[0].mxu0
  %v4521 = vpop.f32.mrb[0].mxu0
  %v4522 = vadd.f32 0.0, %v4521
  %v4523 = vpop.f32.mrb[0].mxu0
  %4524 = vdwg.mxu0
  %v4525 = vadd.f32 %v4477, %v4519
  %v4526 = vadd.f32 %v4478, %v4522
  %4527 = vrot.lane.b32.xlu0 %v3956, 64
  %v4528 = vpop.permute.xlu0 %4527
  %v4530 = vsel %vm1916, %v4528, 0
  %4532 = vmatprep.subr.bf16.mxu0 0
  %4533 = vmatpush1.bf16.msra.mxu0 %v4530
  %4534 = vmatprep.subr.bf16.mxu0 0
  %4535 = vmatpush1.bf16.msra.mxu0 0
  %4536 = vmatprep.subr.bf16.mxu0 0
  %4537 = vmatpush1.bf16.msra.mxu0 0
  %4538 = vmatprep.subr.bf16.mxu0 0
  %4539 = vmatpush1.bf16.msra.mxu0 0
  %4540 = vmatprep.subr.bf16.mxu0 0
  %4541 = vmatpush1.bf16.msra.mxu0 0
  %4542 = vmatprep.subr.bf16.mxu0 0
  %4543 = vmatpush1.bf16.msra.mxu0 0
  %4544 = vmatprep.subr.bf16.mxu0 0
  %4545 = vmatpush1.bf16.msra.mxu0 0
  %4546 = vmatprep.subr.bf16.mxu0 0
  %4547 = vmatpush1.bf16.msra.mxu0 0
  %4548 = vmatprep.subr.bf16.mxu0 0
  %4549 = vmatpush1.bf16.msra.mxu0 0
  %4550 = vmatprep.subr.bf16.mxu0 0
  %4551 = vmatpush1.bf16.msra.mxu0 0
  %4552 = vmatprep.subr.bf16.mxu0 0
  %4553 = vmatpush1.bf16.msra.mxu0 0
  %4554 = vmatprep.subr.bf16.mxu0 0
  %4555 = vmatpush1.bf16.msra.mxu0 0
  %4556 = vmatprep.subr.bf16.mxu0 0
  %4557 = vmatpush1.bf16.msra.mxu0 0
  %4558 = vmatprep.subr.bf16.mxu0 0
  %4559 = vmatpush1.bf16.msra.mxu0 0
  %4560 = vmatprep.subr.bf16.mxu0 0
  %4561 = vmatpush1.bf16.msra.mxu0 0
  %4562 = vmatprep.subr.bf16.mxu0 0
  %4563 = vmatpush1.bf16.msra.mxu0 0
  %4564 = vmatprep.mubr.bf16.mxu0 0
  %4565 = vmatmul.mubr.bf16.gmra.mrb[0].mxu0 %v2542
  %v4566 = vpop.f32.mrb[0].mxu0
  %v4567 = vadd.f32 0.0, %v4566
  %v4568 = vpop.f32.mrb[0].mxu0
  %v4569 = vpop.f32.mrb[0].mxu0
  %v4570 = vadd.f32 0.0, %v4569
  %v4571 = vpop.f32.mrb[0].mxu0
  %4572 = vdwg.mxu0
  %v4573 = vadd.f32 %v4525, %v4567
  %v4574 = vadd.f32 %v4526, %v4570
  %4575 = vrot.lane.b32.xlu0 %v3956, 48
  %v4576 = vpop.permute.xlu0 %4575
  %v4578 = vsel %vm1916, %v4576, 0
  %4580 = vmatprep.subr.bf16.mxu0 0
  %4581 = vmatpush1.bf16.msra.mxu0 %v4578
  %4582 = vmatprep.subr.bf16.mxu0 0
  %4583 = vmatpush1.bf16.msra.mxu0 0
  %4584 = vmatprep.subr.bf16.mxu0 0
  %4585 = vmatpush1.bf16.msra.mxu0 0
  %4586 = vmatprep.subr.bf16.mxu0 0
  %4587 = vmatpush1.bf16.msra.mxu0 0
  %4588 = vmatprep.subr.bf16.mxu0 0
  %4589 = vmatpush1.bf16.msra.mxu0 0
  %4590 = vmatprep.subr.bf16.mxu0 0
  %4591 = vmatpush1.bf16.msra.mxu0 0
  %4592 = vmatprep.subr.bf16.mxu0 0
  %4593 = vmatpush1.bf16.msra.mxu0 0
  %4594 = vmatprep.subr.bf16.mxu0 0
  %4595 = vmatpush1.bf16.msra.mxu0 0
  %4596 = vmatprep.subr.bf16.mxu0 0
  %4597 = vmatpush1.bf16.msra.mxu0 0
  %4598 = vmatprep.subr.bf16.mxu0 0
  %4599 = vmatpush1.bf16.msra.mxu0 0
  %4600 = vmatprep.subr.bf16.mxu0 0
  %4601 = vmatpush1.bf16.msra.mxu0 0
  %4602 = vmatprep.subr.bf16.mxu0 0
  %4603 = vmatpush1.bf16.msra.mxu0 0
  %4604 = vmatprep.subr.bf16.mxu0 0
  %4605 = vmatpush1.bf16.msra.mxu0 0
  %4606 = vmatprep.subr.bf16.mxu0 0
  %4607 = vmatpush1.bf16.msra.mxu0 0
  %4608 = vmatprep.subr.bf16.mxu0 0
  %4609 = vmatpush1.bf16.msra.mxu0 0
  %4610 = vmatprep.subr.bf16.mxu0 0
  %4611 = vmatpush1.bf16.msra.mxu0 0
  %4612 = vmatprep.mubr.bf16.mxu0 0
  %4613 = vmatmul.mubr.bf16.gmra.mrb[0].mxu0 %v2595
  %v4614 = vpop.f32.mrb[0].mxu0
  %v4615 = vadd.f32 0.0, %v4614
  %v4616 = vpop.f32.mrb[0].mxu0
  %v4617 = vpop.f32.mrb[0].mxu0
  %v4618 = vadd.f32 0.0, %v4617
  %v4619 = vpop.f32.mrb[0].mxu0
  %4620 = vdwg.mxu0
  %v4621 = vadd.f32 %v4573, %v4615
  %v4622 = vadd.f32 %v4574, %v4618
  %4623 = vrot.lane.b32.xlu0 %v3956, 32
  %v4624 = vpop.permute.xlu0 %4623
  %v4626 = vsel %vm1916, %v4624, 0
  %4628 = vmatprep.subr.bf16.mxu0 0
  %4629 = vmatpush1.bf16.msra.mxu0 %v4626
  %4630 = vmatprep.subr.bf16.mxu0 0
  %4631 = vmatpush1.bf16.msra.mxu0 0
  %4632 = vmatprep.subr.bf16.mxu0 0
  %4633 = vmatpush1.bf16.msra.mxu0 0
  %4634 = vmatprep.subr.bf16.mxu0 0
  %4635 = vmatpush1.bf16.msra.mxu0 0
  %4636 = vmatprep.subr.bf16.mxu0 0
  %4637 = vmatpush1.bf16.msra.mxu0 0
  %4638 = vmatprep.subr.bf16.mxu0 0
  %4639 = vmatpush1.bf16.msra.mxu0 0
  %4640 = vmatprep.subr.bf16.mxu0 0
  %4641 = vmatpush1.bf16.msra.mxu0 0
  %4642 = vmatprep.subr.bf16.mxu0 0
  %4643 = vmatpush1.bf16.msra.mxu0 0
  %4644 = vmatprep.subr.bf16.mxu0 0
  %4645 = vmatpush1.bf16.msra.mxu0 0
  %4646 = vmatprep.subr.bf16.mxu0 0
  %4647 = vmatpush1.bf16.msra.mxu0 0
  %4648 = vmatprep.subr.bf16.mxu0 0
  %4649 = vmatpush1.bf16.msra.mxu0 0
  %4650 = vmatprep.subr.bf16.mxu0 0
  %4651 = vmatpush1.bf16.msra.mxu0 0
  %4652 = vmatprep.subr.bf16.mxu0 0
  %4653 = vmatpush1.bf16.msra.mxu0 0
  %4654 = vmatprep.subr.bf16.mxu0 0
  %4655 = vmatpush1.bf16.msra.mxu0 0
  %4656 = vmatprep.subr.bf16.mxu0 0
  %4657 = vmatpush1.bf16.msra.mxu0 0
  %4658 = vmatprep.subr.bf16.mxu0 0
  %4659 = vmatpush1.bf16.msra.mxu0 0
  %4660 = vmatprep.mubr.bf16.mxu0 0
  %4661 = vmatmul.mubr.bf16.gmra.mrb[0].mxu0 %v2648
  %v4662 = vpop.f32.mrb[0].mxu0
  %v4663 = vadd.f32 0.0, %v4662
  %v4664 = vpop.f32.mrb[0].mxu0
  %v4665 = vpop.f32.mrb[0].mxu0
  %v4666 = vadd.f32 0.0, %v4665
  %v4667 = vpop.f32.mrb[0].mxu0
  %4668 = vdwg.mxu0
  %v4669 = vadd.f32 %v4621, %v4663
  %v4670 = vadd.f32 %v4622, %v4666
  %4671 = vrot.lane.b32.xlu0 %v3956, 16
  %v4672 = vpop.permute.xlu0 %4671
  %v4674 = vsel %vm1916, %v4672, 0
  %4676 = vmatprep.subr.bf16.mxu0 0
  %4677 = vmatpush1.bf16.msra.mxu0 %v4674
  %4678 = vmatprep.subr.bf16.mxu0 0
  %4679 = vmatpush1.bf16.msra.mxu0 0
  %4680 = vmatprep.subr.bf16.mxu0 0
  %4681 = vmatpush1.bf16.msra.mxu0 0
  %4682 = vmatprep.subr.bf16.mxu0 0
  %4683 = vmatpush1.bf16.msra.mxu0 0
  %4684 = vmatprep.subr.bf16.mxu0 0
  %4685 = vmatpush1.bf16.msra.mxu0 0
  %4686 = vmatprep.subr.bf16.mxu0 0
  %4687 = vmatpush1.bf16.msra.mxu0 0
  %4688 = vmatprep.subr.bf16.mxu0 0
  %4689 = vmatpush1.bf16.msra.mxu0 0
  %4690 = vmatprep.subr.bf16.mxu0 0
  %4691 = vmatpush1.bf16.msra.mxu0 0
  %4692 = vmatprep.subr.bf16.mxu0 0
  %4693 = vmatpush1.bf16.msra.mxu0 0
  %4694 = vmatprep.subr.bf16.mxu0 0
  %4695 = vmatpush1.bf16.msra.mxu0 0
  %4696 = vmatprep.subr.bf16.mxu0 0
  %4697 = vmatpush1.bf16.msra.mxu0 0
  %4698 = vmatprep.subr.bf16.mxu0 0
  %4699 = vmatpush1.bf16.msra.mxu0 0
  %4700 = vmatprep.subr.bf16.mxu0 0
  %4701 = vmatpush1.bf16.msra.mxu0 0
  %4702 = vmatprep.subr.bf16.mxu0 0
  %4703 = vmatpush1.bf16.msra.mxu0 0
  %4704 = vmatprep.subr.bf16.mxu0 0
  %4705 = vmatpush1.bf16.msra.mxu0 0
  %4706 = vmatprep.subr.bf16.mxu0 0
  %4707 = vmatpush1.bf16.msra.mxu0 0
  %4708 = vmatprep.mubr.bf16.mxu0 0
  %4709 = vmatmul.mubr.bf16.gmra.mrb[0].mxu0 %v2701
  %v4710 = vpop.f32.mrb[0].mxu0
  %v4711 = vadd.f32 0.0, %v4710
  %v4712 = vpop.f32.mrb[0].mxu0
  %v4713 = vpop.f32.mrb[0].mxu0
  %v4714 = vadd.f32 0.0, %v4713
  %v4715 = vpop.f32.mrb[0].mxu0
  %4716 = vdwg.mxu0
  %v4717 = vadd.f32 %v4669, %v4711
  %v4718 = vadd.f32 %v4670, %v4714
  %vm4719 = vcmp.gt.f32.partialorder %v4717, 0.0
  %vm4720 = vcmp.gt.f32.partialorder %v4718, 0.0
  %v4721 = vmul.f32 %v4717, 0.2
  %v4722 = vmul.f32 %v4718, 0.2
  %v4723 = vsel %vm4719, %v4717, %v4721
  %v4724 = vsel %vm4720, %v4718, %v4722
  %v4726 = vsel %vm2755, %v4723, 0
  %v4729 = vsel %vm2755, %v4724, 0
  %4731 = vmatprep.subr.mxu0 %v174
  %4732 = vmatpush1.msra.mxu0 %v173
  %4733 = vmatprep.subr.mxu0 %v178
  %4734 = vmatpush1.msra.mxu0 %v177
  %4735 = vmatprep.subr.mxu0 0.0
  %4736 = vmatpush1.msra.mxu0 0.0
  %4737 = vmatprep.subr.mxu0 0.0
  %4738 = vmatpush1.msra.mxu0 0.0
  %4739 = vmatprep.subr.mxu0 0.0
  %4740 = vmatpush1.msra.mxu0 0.0
  %4741 = vmatprep.subr.mxu0 0.0
  %4742 = vmatpush1.msra.mxu0 0.0
  %4743 = vmatprep.subr.mxu0 0.0
  %4744 = vmatpush1.msra.mxu0 0.0
  %4745 = vmatprep.subr.mxu0 0.0
  %4746 = vmatpush1.msra.mxu0 0.0
  %4747 = vmatprep.subr.mxu0 0.0
  %4748 = vmatpush1.msra.mxu0 0.0
  %4749 = vmatprep.subr.mxu0 0.0
  %4750 = vmatpush1.msra.mxu0 0.0
  %4751 = vmatprep.subr.mxu0 0.0
  %4752 = vmatpush1.msra.mxu0 0.0
  %4753 = vmatprep.subr.mxu0 0.0
  %4754 = vmatpush1.msra.mxu0 0.0
  %4755 = vmatprep.subr.mxu0 0.0
  %4756 = vmatpush1.msra.mxu0 0.0
  %4757 = vmatprep.subr.mxu0 0.0
  %4758 = vmatpush1.msra.mxu0 0.0
  %4759 = vmatprep.subr.mxu0 0.0
  %4760 = vmatpush1.msra.mxu0 0.0
  %4761 = vmatprep.subr.mxu0 0.0
  %4762 = vmatpush1.msra.mxu0 0.0
  %4763 = vmatprep.subr.mxu0 0.0
  %4764 = vmatpush1.msra.mxu0 0.0
  %4765 = vmatprep.subr.mxu0 0.0
  %4766 = vmatpush1.msra.mxu0 0.0
  %4767 = vmatprep.subr.mxu0 0.0
  %4768 = vmatpush1.msra.mxu0 0.0
  %4769 = vmatprep.subr.mxu0 0.0
  %4770 = vmatpush1.msra.mxu0 0.0
  %4771 = vmatprep.subr.mxu0 0.0
  %4772 = vmatpush1.msra.mxu0 0.0
  %4773 = vmatprep.subr.mxu0 0.0
  %4774 = vmatpush1.msra.mxu0 0.0
  %4775 = vmatprep.subr.mxu0 0.0
  %4776 = vmatpush1.msra.mxu0 0.0
  %4777 = vmatprep.subr.mxu0 0.0
  %4778 = vmatpush1.msra.mxu0 0.0
  %4779 = vmatprep.subr.mxu0 0.0
  %4780 = vmatpush1.msra.mxu0 0.0
  %4781 = vmatprep.subr.mxu0 0.0
  %4782 = vmatpush1.msra.mxu0 0.0
  %4783 = vmatprep.subr.mxu0 0.0
  %4784 = vmatpush1.msra.mxu0 0.0
  %4785 = vmatprep.subr.mxu0 0.0
  %4786 = vmatpush1.msra.mxu0 0.0
  %4787 = vmatprep.subr.mxu0 0.0
  %4788 = vmatpush1.msra.mxu0 0.0
  %4789 = vmatprep.subr.mxu0 0.0
  %4790 = vmatpush1.msra.mxu0 0.0
  %4791 = vmatprep.subr.mxu0 0.0
  %4792 = vmatpush1.msra.mxu0 0.0
  %4793 = vmatprep.subr.mxu0 0.0
  %4794 = vmatpush1.msra.mxu0 0.0
  %4795 = vmatprep.mubr.f32.mxu0 0.0
  %4796 = vmatmul.mubr.f32.gmra.mrb[0].mxu0 %v4726
  %v4797 = vpop.f32.mrb[0].mxu0
  %v4798 = vadd.f32 0.0, %v4797
  %v4799 = vpop.f32.mrb[0].mxu0
  %v4800 = vadd.f32 0.0, %v4799
  %4801 = vmatprep.mubr.f32.mxu0 0.0
  %4802 = vmatmul.mubr.f32.gmra.mrb[0].mxu0 %v4729
  %v4803 = vpop.f32.mrb[0].mxu0
  %v4804 = vpop.f32.mrb[0].mxu0
  %4805 = vdwg.mxu0
  %4806 = vmatprep.subr.mxu0 %v176
  %4807 = vmatpush1.msra.mxu0 %v175
  %4808 = vmatprep.subr.mxu0 %v180
  %4809 = vmatpush1.msra.mxu0 %v179
  %4810 = vmatprep.subr.mxu0 0.0
  %4811 = vmatpush1.msra.mxu0 0.0
  %4812 = vmatprep.subr.mxu0 0.0
  %4813 = vmatpush1.msra.mxu0 0.0
  %4814 = vmatprep.subr.mxu0 0.0
  %4815 = vmatpush1.msra.mxu0 0.0
  %4816 = vmatprep.subr.mxu0 0.0
  %4817 = vmatpush1.msra.mxu0 0.0
  %4818 = vmatprep.subr.mxu0 0.0
  %4819 = vmatpush1.msra.mxu0 0.0
  %4820 = vmatprep.subr.mxu0 0.0
  %4821 = vmatpush1.msra.mxu0 0.0
  %4822 = vmatprep.subr.mxu0 0.0
  %4823 = vmatpush1.msra.mxu0 0.0
  %4824 = vmatprep.subr.mxu0 0.0
  %4825 = vmatpush1.msra.mxu0 0.0
  %4826 = vmatprep.subr.mxu0 0.0
  %4827 = vmatpush1.msra.mxu0 0.0
  %4828 = vmatprep.subr.mxu0 0.0
  %4829 = vmatpush1.msra.mxu0 0.0
  %4830 = vmatprep.subr.mxu0 0.0
  %4831 = vmatpush1.msra.mxu0 0.0
  %4832 = vmatprep.subr.mxu0 0.0
  %4833 = vmatpush1.msra.mxu0 0.0
  %4834 = vmatprep.subr.mxu0 0.0
  %4835 = vmatpush1.msra.mxu0 0.0
  %4836 = vmatprep.subr.mxu0 0.0
  %4837 = vmatpush1.msra.mxu0 0.0
  %4838 = vmatprep.subr.mxu0 0.0
  %4839 = vmatpush1.msra.mxu0 0.0
  %4840 = vmatprep.subr.mxu0 0.0
  %4841 = vmatpush1.msra.mxu0 0.0
  %4842 = vmatprep.subr.mxu0 0.0
  %4843 = vmatpush1.msra.mxu0 0.0
  %4844 = vmatprep.subr.mxu0 0.0
  %4845 = vmatpush1.msra.mxu0 0.0
  %4846 = vmatprep.subr.mxu0 0.0
  %4847 = vmatpush1.msra.mxu0 0.0
  %4848 = vmatprep.subr.mxu0 0.0
  %4849 = vmatpush1.msra.mxu0 0.0
  %4850 = vmatprep.subr.mxu0 0.0
  %4851 = vmatpush1.msra.mxu0 0.0
  %4852 = vmatprep.subr.mxu0 0.0
  %4853 = vmatpush1.msra.mxu0 0.0
  %4854 = vmatprep.subr.mxu0 0.0
  %4855 = vmatpush1.msra.mxu0 0.0
  %4856 = vmatprep.subr.mxu0 0.0
  %4857 = vmatpush1.msra.mxu0 0.0
  %4858 = vmatprep.subr.mxu0 0.0
  %4859 = vmatpush1.msra.mxu0 0.0
  %4860 = vmatprep.subr.mxu0 0.0
  %4861 = vmatpush1.msra.mxu0 0.0
  %4862 = vmatprep.subr.mxu0 0.0
  %4863 = vmatpush1.msra.mxu0 0.0
  %4864 = vmatprep.subr.mxu0 0.0
  %4865 = vmatpush1.msra.mxu0 0.0
  %4866 = vmatprep.subr.mxu0 0.0
  %4867 = vmatpush1.msra.mxu0 0.0
  %4868 = vmatprep.subr.mxu0 0.0
  %4869 = vmatpush1.msra.mxu0 0.0
  %4870 = vmatprep.mubr.f32.mxu0 0.0
  %4871 = vmatmul.mubr.f32.gmra.mrb[0].mxu0 %v4726
  %v4872 = vpop.f32.mrb[0].mxu0
  %v4873 = vpop.f32.mrb[0].mxu0
  %4874 = vmatprep.mubr.f32.mxu0 0.0
  %4875 = vmatmul.mubr.f32.gmra.mrb[0].mxu0 %v4729
  %v4876 = vpop.f32.mrb[0].mxu0
  %v4877 = vadd.f32 0.0, %v4876
  %v4878 = vpop.f32.mrb[0].mxu0
  %v4879 = vadd.f32 0.0, %v4878
  %4880 = vdwg.mxu0
  %v4881 = vadd.f32 %v4798, 0.0
  %v4883 = vrot.slane %v4798, 1
  %4884 = vrot.lane.b32.xlu0 %v4883, 96
  %v4885 = vpop.permute.xlu0 %4884
  %v4887 = vadd.f32 %v4881, %v4885
  %v4888 = vrot.slane %v4798, 2
  %4889 = vrot.lane.b32.xlu0 %v4888, 64
  %v4890 = vpop.permute.xlu0 %4889
  %v4892 = vadd.f32 %v4887, %v4890
  %v4893 = vrot.slane %v4798, 3
  %4894 = vrot.lane.b32.xlu0 %v4893, 32
  %v4895 = vpop.permute.xlu0 %4894
  %v4897 = vadd.f32 %v4892, %v4895
  %v4899 = vrot.slane %v4800, 4
  %v4901 = vadd.f32 %v4897, %v4899
  %v4902 = vrot.slane %v4800, 5
  %4903 = vrot.lane.b32.xlu0 %v4902, 96
  %v4904 = vpop.permute.xlu0 %4903
  %v4906 = vadd.f32 %v4901, %v4904
  %v4907 = vrot.slane %v4800, 6
  %4908 = vrot.lane.b32.xlu0 %v4907, 64
  %v4909 = vpop.permute.xlu0 %4908
  %v4911 = vadd.f32 %v4906, %v4909
  %v4912 = vrot.slane %v4800, 7
  %4913 = vrot.lane.b32.xlu0 %v4912, 32
  %v4914 = vpop.permute.xlu0 %4913
  %v4916 = vadd.f32 %v4911, %v4914
  %v4917 = vadd.f32 %v4916, %v4877
  %v4919 = vrot.slane %v4877, 1
  %4920 = vrot.lane.b32.xlu0 %v4919, 96
  %v4921 = vpop.permute.xlu0 %4920
  %v4923 = vadd.f32 %v4917, %v4921
  %v4924 = vrot.slane %v4877, 2
  %4925 = vrot.lane.b32.xlu0 %v4924, 64
  %v4926 = vpop.permute.xlu0 %4925
  %v4928 = vadd.f32 %v4923, %v4926
  %v4929 = vrot.slane %v4877, 3
  %4930 = vrot.lane.b32.xlu0 %v4929, 32
  %v4931 = vpop.permute.xlu0 %4930
  %v4933 = vadd.f32 %v4928, %v4931
  %v4935 = vrot.slane %v4879, 4
  %v4937 = vadd.f32 %v4933, %v4935
  %v4938 = vrot.slane %v4879, 5
  %4939 = vrot.lane.b32.xlu0 %v4938, 96
  %v4940 = vpop.permute.xlu0 %4939
  %v4942 = vadd.f32 %v4937, %v4940
  %v4943 = vrot.slane %v4879, 6
  %4944 = vrot.lane.b32.xlu0 %v4943, 64
  %v4945 = vpop.permute.xlu0 %4944
  %v4947 = vadd.f32 %v4942, %v4945
  %v4948 = vrot.slane %v4879, 7
  %4949 = vrot.lane.b32.xlu0 %v4948, 32
  %v4950 = vpop.permute.xlu0 %4949
  %v4952 = vadd.f32 %v4947, %v4950
  %v4953 = vadd.f32 %v4952, %v181
  %vm4954 = vcmp.gt.f32.partialorder %v4953, 0.0
  %v4955 = vmul.f32 %v4953, 0.2
  %v4956 = vsel %vm4954, %v4953, %v4955
  %v4957 = vmul.f32 %v4956, %v182
  %v4958 = vsel %vm2989, %v4957, 0.0
  %4959 = vadd.xlane.f32.xlu0 %v4958
  %v4960 = vpop.xlane.xlu0 %4959
  %v4961 = vadd.f32 %v4960, %v2993
  %v4962 = vsub.f32 0.0, %v4961
  %v4963 = vmul.f32 %v4962, 1.442695
  %v4964 = vpow.pop %v4963
  %v4965 = vadd.f32 %v4964, 1.0
  %v4966 = vrcp.pop %v4965
  %4967 = vst.msk [vmem:[%s9 + $0x1] sm:$0x1] %vm3000, %v4966
  // Predicated region
  $region38: #{net_forward.1} parent=0 // pred_check
    _
  $region39: #{net_forward.1} parent=0 // pred_check_branch
    %4969 = sbr.rel (0) target = $region41
  $region40: #{net_forward.1} parent=0 // pred_region
    _
  $region41: #{net_forward.1} parent=0 // pred_fallthru
    _
  // Predicated region
  $region42: #{net_forward.1} parent=0 // pred_check
    _
  $region43: #{net_forward.1} parent=0 // pred_check_branch
    %4971 = sbr.rel (0) target = $region45
  $region44: #{net_forward.1} parent=0 // pred_region
    _
  $region45: #{net_forward.1} parent=0 // pred_fallthru
    _

</llo_original>
